<compile_context>
chip_gen: v7x
topology: tpu7x:2x2x1
jax: 0.10.0
libtpu: 0.0.40
codegen_flags: <defaults>
</compile_context>

<pallas_src>
import functools
import math

import jax
import jax.numpy as jnp
from jax.experimental import pallas as pl
from jax.experimental.pallas import tpu as pltpu


def _layer_norm(x, gamma, beta, eps=1e-5):
    mean = jnp.mean(x, axis=-1, keepdims=True)
    var = jnp.mean((x - mean) ** 2, axis=-1, keepdims=True)
    return (x - mean) * jax.lax.rsqrt(var + eps) * gamma + beta


def transformer_lsa_kernel(num_head, BB, N,
                           key_ref, temp_ref,
                           wqv_ref, bqv_ref,
                           wo_ref, bo_ref, g1_ref, be1_ref,
                           w1_ref, b1_ref, w2_ref, b2_ref, g2_ref, be2_ref,
                           out_ref):
    k_bf = key_ref[...]                                  # (BB*N, D) bf16 tokens
    D = k_bf.shape[1]
    dh = D // num_head

    # fused Q/V projection: one (BB*N, D) @ (D, 2D) MXU dispatch, f32 accumulate
    qv = jnp.dot(k_bf, wqv_ref[...],
                 preferred_element_type=jnp.float32) + bqv_ref[...]
    q = qv[:, :D]
    v = qv[:, D:]                                        # f32 residual base

    # temperature (SMEM scalar) and 1/sqrt(dh) folded into q once
    scale = 1.0 / (temp_ref[0] * math.sqrt(dh))
    q_bf = (q * scale).astype(jnp.bfloat16)
    v_bf = v.astype(jnp.bfloat16)

    q3 = q_bf.reshape(BB, N, D)
    k3 = k_bf.reshape(BB, N, D)
    v3 = v_bf.reshape(BB, N, D)

    # (N, N) additive diagonal (self-token) bias, hoisted once, broadcast over BB
    r = jax.lax.broadcasted_iota(jnp.int32, (N, N), 0)
    c = jax.lax.broadcasted_iota(jnp.int32, (N, N), 1)
    diag_bias = jnp.where(r == c, jnp.float32(-1e30), jnp.float32(0.0))

    # multi-head locally-self-attention: static head loop, batched over BB
    # sequences; the per-head out-projection is accumulated directly (same MXU
    # FLOPs as one big out-proj matmul, no scratch slab / column scatter).
    attn = jnp.zeros((BB * N, D), jnp.float32)
    for h in range(num_head):
        lo, hi = h * dh, (h + 1) * dh
        qh = q3[:, :, lo:hi]
        kh = k3[:, :, lo:hi]
        vh = v3[:, :, lo:hi]
        s = jnp.einsum("bqd,bkd->bqk", qh, kh,
                       preferred_element_type=jnp.float32)
        s = s + diag_bias
        s = s - jnp.max(s, axis=-1, keepdims=True)
        p = jnp.exp(s)
        denom = jnp.sum(p, axis=-1, keepdims=True)
        p = p * pl.reciprocal(denom, approx=True)        # EUP, not a VPU divide
        oh = jnp.einsum("bqk,bkd->bqd", p.astype(jnp.bfloat16), vh,
                        preferred_element_type=jnp.float32)
        attn = attn + jnp.dot(oh.reshape(BB * N, dh).astype(jnp.bfloat16),
                              wo_ref[lo:hi, :],
                              preferred_element_type=jnp.float32)
    attn = attn + bo_ref[...]

    # residual + LayerNorm1 (f32)
    x = v + attn
    x = _layer_norm(x, g1_ref[...], be1_ref[...])

    # feed-forward (regression head -> no final activation), residual + LN2
    h1 = jnp.dot(x.astype(jnp.bfloat16), w1_ref[...],
                 preferred_element_type=jnp.float32) + b1_ref[...]
    h1 = jax.nn.gelu(h1)
    ff = jnp.dot(h1.astype(jnp.bfloat16), w2_ref[...],
                 preferred_element_type=jnp.float32) + b2_ref[...]
    x = x + ff
    x = _layer_norm(x, g2_ref[...], be2_ref[...])

    out_ref[...] = x


def _choose_batch_block(B, N):
    # prefer 8 grid steps, then 4, then 2 (keeps BB*N a multiple of 8 so the
    # (rows_in, D) BlockSpec stays legal); fall back to a single block.
    for nb in (8, 4, 2):
        if B % nb == 0 and ((B // nb) * N) % 8 == 0:
            return B // nb
    return B


def transformer_lsa_block(key, params, num_head, batch_block=None):
    B, N, D = key.shape
    H = params["w1"].shape[1]
    assert D % num_head == 0
    assert N >= 2, "diagonal-masked LSA needs at least 2 tokens per sequence"
    dh = D // num_head

    if batch_block is None:
        batch_block = _choose_batch_block(B, N)
    assert B % batch_block == 0
    BB = batch_block
    num_blocks = B // BB
    rows_in = BB * N
    if num_blocks > 1:
        assert rows_in % 8 == 0, "BB*N must be a multiple of 8 when tiling the batch"

    # bf16 weights (MXU-native, half the DMA bytes); biases / LN params stay f32
    wqv = jnp.concatenate([params["wq"], params["wv"]], axis=1).astype(jnp.bfloat16)
    bqv = jnp.concatenate([params["bq"], params["bv"]], axis=1).astype(jnp.float32)
    wo = params["wo"].astype(jnp.bfloat16)
    w1 = params["w1"].astype(jnp.bfloat16)
    w2 = params["w2"].astype(jnp.bfloat16)
    key2d = key.reshape(B * N, D).astype(jnp.bfloat16)

    kernel = functools.partial(transformer_lsa_kernel, num_head, BB, N)

    # explicit VMEM budget: 2x token/output blocks + weights + activations +
    # per-head score slabs, with ~50% headroom (clamped to [32, 64] MiB).
    F32, BF16 = 4, 2
    weight_bytes = (2 * D * D + D * D + D * H + H * D) * BF16 \
                   + (2 * D + D + H + 5 * D) * F32
    act_bytes = rows_in * (2 * D + D + H + 2 * D) * F32
    score_bytes = 3 * BB * N * N * F32
    io_bytes = 2 * rows_in * D * BF16 + 2 * rows_in * D * F32
    est = 2 * weight_bytes + act_bytes + score_bytes + io_bytes
    vmem_limit = int(min(64 * 2 ** 20, max(1.5 * est, 32 * 2 ** 20)))

    cost = pl.CostEstimate(
        flops=int(B * N * (6 * D * D + 4 * D * H + 4 * N * D)),
        transcendentals=int(B * num_head * N * N + B * N * H + 4 * B * N),
        bytes_accessed=int(B * N * D * (BF16 + F32) + weight_bytes),
    )

    def build(weight_buffers):
        pm = None if weight_buffers is None else pl.Buffered(weight_buffers)

        def wspec(shape):
            if pm is None:
                return pl.BlockSpec(shape, lambda i: (0, 0))
            # constant index_map across the grid -> a single buffer suffices
            return pl.BlockSpec(shape, lambda i: (0, 0), pipeline_mode=pm)

        in_specs = [
            pl.BlockSpec((rows_in, D), lambda i: (i, 0)),        # token block
            pl.BlockSpec(memory_space=pltpu.MemorySpace.SMEM),   # temperature
            wspec((D, 2 * D)), wspec((1, 2 * D)),                # Wq||Wv, bq||bv
            wspec((D, D)), wspec((1, D)),                        # Wo, bo
            wspec((1, D)), wspec((1, D)),                        # LN1 gamma, beta
            wspec((D, H)), wspec((1, H)),                        # FF W1, b1
            wspec((H, D)), wspec((1, D)),                        # FF W2, b2
            wspec((1, D)), wspec((1, D)),                        # LN2 gamma, beta
        ]
        return pl.pallas_call(
            kernel,
            out_shape=jax.ShapeDtypeStruct((B * N, D), jnp.float32),
            grid_spec=pltpu.PrefetchScalarGridSpec(
                num_scalar_prefetch=0,
                grid=(num_blocks,),
                in_specs=in_specs,
                out_specs=pl.BlockSpec((rows_in, D), lambda i: (i, 0)),
            ),
            compiler_params=pltpu.CompilerParams(
                dimension_semantics=("parallel",),
                vmem_limit_bytes=vmem_limit),
            cost_estimate=cost,
        )

    args = (key2d, params["temp"],
            wqv, bqv, wo, params["bo"],
            params["g1"], params["be1"],
            w1, params["b1"], w2, params["b2"],
            params["g2"], params["be2"])

    try:
        out = build(1)(*args)            # single-buffered constant weights
    except Exception:
        out = build(None)(*args)         # fallback: default double buffering

    # contiguous row-major reshape back to (B, N, D) -- metadata only
    return out.reshape(B, N, D)


def reference_forward(key, params, num_head):
    """Pure-JAX f32 reference for correctness check."""
    B, N, D = key.shape
    dh = D // num_head
    temp = params["temp"][0]
    q = (key @ params["wq"] + params["bq"]) / temp
    v = key @ params["wv"] + params["bv"]

    qh = q.reshape(B, N, num_head, dh).transpose(0, 2, 1, 3)
    kh = key.reshape(B, N, num_head, dh).transpose(0, 2, 1, 3)
    vh = v.reshape(B, N, num_head, dh).transpose(0, 2, 1, 3)
    s = jnp.einsum("bhnd,bhmd->bhnm", qh, kh) / math.sqrt(dh)
    diag = jnp.eye(N, dtype=bool)
    s = jnp.where(diag, -1e30, s)
    p = jax.nn.softmax(s, axis=-1)
    attn = jnp.einsum("bhnm,bhmd->bhnd", p, vh).transpose(0, 2, 1, 3).reshape(B, N, D)
    attn = attn @ params["wo"] + params["bo"]

    def ln(x, g, b):
        m = x.mean(-1, keepdims=True)
        var = ((x - m) ** 2).mean(-1, keepdims=True)
        return (x - m) * jax.lax.rsqrt(var + 1e-5) * g + b

    x = v + attn
    x = ln(x, params["g1"], params["be1"])
    ff = jax.nn.gelu(x @ params["w1"] + params["b1"]) @ params["w2"] + params["b2"]
    x = ln(x + ff, params["g2"], params["be2"])
    return x


if __name__ == "__main__":
    B, N, D, H, num_head = 2, 8, 32, 64, 4   # batch, num_patches, embed, hidden

    root = jax.random.PRNGKey(0)
    keys = jax.random.split(root, 8)

    params = {
        "wq": 0.02 * jax.random.normal(keys[0], (D, D), jnp.float32),
        "bq": jnp.zeros((1, D), jnp.float32),
        "wv": 0.02 * jax.random.normal(keys[1], (D, D), jnp.float32),
        "bv": jnp.zeros((1, D), jnp.float32),
        "temp": jnp.ones((1,), jnp.float32),            # nn.Parameter(torch.ones(1))
        "wo": 0.02 * jax.random.normal(keys[2], (D, D), jnp.float32),
        "bo": jnp.zeros((1, D), jnp.float32),
        "g1": jnp.ones((1, D), jnp.float32),
        "be1": jnp.zeros((1, D), jnp.float32),
        "w1": 0.02 * jax.random.normal(keys[3], (D, H), jnp.float32),
        "b1": jnp.zeros((1, H), jnp.float32),
        "w2": 0.02 * jax.random.normal(keys[4], (H, D), jnp.float32),
        "b2": jnp.zeros((1, D), jnp.float32),
        "g2": jnp.ones((1, D), jnp.float32),
        "be2": jnp.zeros((1, D), jnp.float32),
    }

    key_inp = jax.random.normal(keys[5], (B, N, D), jnp.float32)

    out = transformer_lsa_block(key_inp, params, num_head)
    out = jax.block_until_ready(out)

    ref = reference_forward(key_inp, params, num_head)
    assert out.shape == (B, N, D)
    # tolerance reflects bf16 matmuls (f32 accumulation) + approx-reciprocal
    # softmax normalization vs the pure-f32 reference
    assert jnp.allclose(out, ref, atol=5e-2, rtol=5e-2), "mismatch vs JAX reference"

    print("KERNEL_OK")
</pallas_src>

<mosaic_0001>
module attributes {stable_mosaic.version = 11 : i64} {
  func.func @transformer_lsa_kernel(%arg0: i32, %arg1: memref<8x32xbf16, #tpu.memory_space<vmem>>, %arg2: memref<1xf32, #tpu.memory_space<smem>>, %arg3: memref<32x64xbf16, #tpu.memory_space<vmem>>, %arg4: memref<1x64xf32, #tpu.memory_space<vmem>>, %arg5: memref<32x32xbf16, #tpu.memory_space<vmem>>, %arg6: memref<1x32xf32, #tpu.memory_space<vmem>>, %arg7: memref<1x32xf32, #tpu.memory_space<vmem>>, %arg8: memref<1x32xf32, #tpu.memory_space<vmem>>, %arg9: memref<32x64xbf16, #tpu.memory_space<vmem>>, %arg10: memref<1x64xf32, #tpu.memory_space<vmem>>, %arg11: memref<64x32xbf16, #tpu.memory_space<vmem>>, %arg12: memref<1x32xf32, #tpu.memory_space<vmem>>, %arg13: memref<1x32xf32, #tpu.memory_space<vmem>>, %arg14: memref<1x32xf32, #tpu.memory_space<vmem>>, %arg15: memref<8x32xf32, #tpu.memory_space<vmem>>) attributes {dimension_semantics = [#tpu.dimension_semantics<parallel>], iteration_bounds = array<i64: 2>, scalar_prefetch = 0 : i64, scratch_operands = 0 : i64, tpu.core_type = #tpu.core_type<tc>, window_params = [{transform_indices = @transform_0, window_bounds = array<i64: 8, 32>}, {transform_indices = @transform_1, window_bounds = array<i64: 1>}, {pipeline_mode = #tpu.pipeline_mode<synchronous>, transform_indices = @transform_2, window_bounds = array<i64: 32, 64>}, {pipeline_mode = #tpu.pipeline_mode<synchronous>, transform_indices = @transform_3, window_bounds = array<i64: 1, 64>}, {pipeline_mode = #tpu.pipeline_mode<synchronous>, transform_indices = @transform_4, window_bounds = array<i64: 32, 32>}, {pipeline_mode = #tpu.pipeline_mode<synchronous>, transform_indices = @transform_5, window_bounds = array<i64: 1, 32>}, {pipeline_mode = #tpu.pipeline_mode<synchronous>, transform_indices = @transform_6, window_bounds = array<i64: 1, 32>}, {pipeline_mode = #tpu.pipeline_mode<synchronous>, transform_indices = @transform_7, window_bounds = array<i64: 1, 32>}, {pipeline_mode = #tpu.pipeline_mode<synchronous>, transform_indices = @transform_8, window_bounds = array<i64: 32, 64>}, {pipeline_mode = #tpu.pipeline_mode<synchronous>, transform_indices = @transform_9, window_bounds = array<i64: 1, 64>}, {pipeline_mode = #tpu.pipeline_mode<synchronous>, transform_indices = @transform_10, window_bounds = array<i64: 64, 32>}, {pipeline_mode = #tpu.pipeline_mode<synchronous>, transform_indices = @transform_11, window_bounds = array<i64: 1, 32>}, {pipeline_mode = #tpu.pipeline_mode<synchronous>, transform_indices = @transform_12, window_bounds = array<i64: 1, 32>}, {pipeline_mode = #tpu.pipeline_mode<synchronous>, transform_indices = @transform_13, window_bounds = array<i64: 1, 32>}, {transform_indices = @transform_14, window_bounds = array<i64: 8, 32>}]} {
    %c0 = arith.constant 0 : index
    %c0_0 = arith.constant 0 : index
    %0 = vector.load %arg1[%c0, %c0_0] : memref<8x32xbf16, #tpu.memory_space<vmem>>, vector<8x32xbf16>
    %c0_1 = arith.constant 0 : index
    %c0_2 = arith.constant 0 : index
    %1 = vector.load %arg3[%c0_1, %c0_2] : memref<32x64xbf16, #tpu.memory_space<vmem>>, vector<32x64xbf16>
    %cst = arith.constant dense<0.000000e+00> : vector<8x64xf32>
    %2 = tpu.matmul %0, %1, %cst {dimension_numbers = #tpu.dot_dimension_numbers<[1], [0], [0], [1], [0, 0, 1, 1], [], []>} : vector<8x32xbf16>, vector<32x64xbf16>, vector<8x64xf32> -> vector<8x64xf32>
    %c0_3 = arith.constant 0 : index
    %c0_4 = arith.constant 0 : index
    %3 = vector.load %arg4[%c0_3, %c0_4] : memref<1x64xf32, #tpu.memory_space<vmem>>, vector<1x64xf32>
    %4 = vector.broadcast %3 : vector<1x64xf32> to vector<8x64xf32>
    %5 = arith.addf %2, %4 : vector<8x64xf32>
    %6 = vector.extract_strided_slice %5 {offsets = [0, 0], sizes = [8, 32], strides = [1, 1]} : vector<8x64xf32> to vector<8x32xf32>
    %7 = vector.extract_strided_slice %5 {offsets = [0, 32], sizes = [8, 32], strides = [1, 1]} : vector<8x64xf32> to vector<8x32xf32>
    %c0_5 = arith.constant 0 : index
    %8 = memref.load %arg2[%c0_5] : memref<1xf32, #tpu.memory_space<smem>>
    %cst_6 = arith.constant 2.82842708 : f32
    %9 = arith.mulf %8, %cst_6 : f32
    %cst_7 = arith.constant 1.000000e+00 : f32
    %10 = arith.divf %cst_7, %9 : f32
    %11 = vector.broadcast %10 : f32 to vector<8x32xf32>
    %12 = arith.mulf %6, %11 : vector<8x32xf32>
    %13 = arith.truncf %12 : vector<8x32xf32> to vector<8x32xbf16>
    %14 = arith.truncf %7 : vector<8x32xf32> to vector<8x32xbf16>
    %15 = vector.shape_cast %13 : vector<8x32xbf16> to vector<1x8x32xbf16>
    %16 = vector.shape_cast %0 : vector<8x32xbf16> to vector<1x8x32xbf16>
    %17 = vector.shape_cast %14 : vector<8x32xbf16> to vector<1x8x32xbf16>
    %18 = tpu.iota {dimensions = array<i32: 0>} : vector<8x8xi32>
    %19 = tpu.iota {dimensions = array<i32: 1>} : vector<8x8xi32>
    %20 = arith.cmpi eq, %18, %19 : vector<8x8xi32>
    %cst_8 = arith.constant -1.000000e+30 : f32
    %cst_9 = arith.constant 0.000000e+00 : f32
    %21 = vector.broadcast %cst_8 : f32 to vector<8x8xf32>
    %22 = vector.broadcast %cst_9 : f32 to vector<8x8xf32>
    %23 = arith.select %20, %21, %22 : vector<8x8xi1>, vector<8x8xf32>
    %cst_10 = arith.constant 0.000000e+00 : f32
    %24 = vector.broadcast %cst_10 : f32 to vector<8x32xf32>
    %25 = vector.extract_strided_slice %15 {offsets = [0, 0, 0], sizes = [1, 8, 8], strides = [1, 1, 1]} : vector<1x8x32xbf16> to vector<1x8x8xbf16>
    %26 = vector.extract_strided_slice %16 {offsets = [0, 0, 0], sizes = [1, 8, 8], strides = [1, 1, 1]} : vector<1x8x32xbf16> to vector<1x8x8xbf16>
    %27 = vector.extract_strided_slice %17 {offsets = [0, 0, 0], sizes = [1, 8, 8], strides = [1, 1, 1]} : vector<1x8x32xbf16> to vector<1x8x8xbf16>
    "tpu.trace_start"() <{level = 10 : i32, message = "bqd,bkd->bqk"}> : () -> ()
    %cst_11 = arith.constant dense<0.000000e+00> : vector<1x8x8xf32>
    %28 = tpu.matmul %25, %26, %cst_11 {dimension_numbers = #tpu.dot_dimension_numbers<[2], [2], [1], [1], [0, 0, 0, 1, 1, 1], [0], [0]>} : vector<1x8x8xbf16>, vector<1x8x8xbf16>, vector<1x8x8xf32> -> vector<1x8x8xf32>
    "tpu.trace_stop"() : () -> ()
    %29 = vector.shape_cast %23 : vector<8x8xf32> to vector<1x8x8xf32>
    %30 = arith.addf %28, %29 : vector<1x8x8xf32>
    %cst_12 = arith.constant dense<0xFF800000> : vector<1x8xf32>
    %31 = vector.multi_reduction <maximumf>, %30, %cst_12 [2] : vector<1x8x8xf32> to vector<1x8xf32>
    %32 = vector.shape_cast %31 : vector<1x8xf32> to vector<1x8x1xf32>
    %33 = vector.broadcast %32 : vector<1x8x1xf32> to vector<1x8x8xf32>
    %34 = arith.subf %30, %33 : vector<1x8x8xf32>
    %35 = math.exp %34 : vector<1x8x8xf32>
    %cst_13 = arith.constant dense<0.000000e+00> : vector<1x8xf32>
    %36 = vector.multi_reduction <add>, %35, %cst_13 [2] : vector<1x8x8xf32> to vector<1x8xf32>
    %37 = vector.shape_cast %36 : vector<1x8xf32> to vector<1x8x1xf32>
    %38 = tpu.reciprocal %37 {approx = true} : vector<1x8x1xf32> -> vector<1x8x1xf32>
    %39 = vector.broadcast %38 : vector<1x8x1xf32> to vector<1x8x8xf32>
    %40 = arith.mulf %35, %39 : vector<1x8x8xf32>
    %41 = arith.truncf %40 : vector<1x8x8xf32> to vector<1x8x8xbf16>
    "tpu.trace_start"() <{level = 10 : i32, message = "bqk,bkd->bqd"}> : () -> ()
    %cst_14 = arith.constant dense<0.000000e+00> : vector<1x8x8xf32>
    %42 = tpu.matmul %41, %27, %cst_14 {dimension_numbers = #tpu.dot_dimension_numbers<[2], [1], [1], [2], [0, 0, 0, 1, 1, 2], [0], [0]>} : vector<1x8x8xbf16>, vector<1x8x8xbf16>, vector<1x8x8xf32> -> vector<1x8x8xf32>
    "tpu.trace_stop"() : () -> ()
    %43 = vector.shape_cast %42 : vector<1x8x8xf32> to vector<8x8xf32>
    %44 = arith.truncf %43 : vector<8x8xf32> to vector<8x8xbf16>
    %c0_15 = arith.constant 0 : index
    %c0_16 = arith.constant 0 : index
    %45 = vector.load %arg5[%c0_15, %c0_16] : memref<32x32xbf16, #tpu.memory_space<vmem>>, vector<8x32xbf16>
    %cst_17 = arith.constant dense<0.000000e+00> : vector<8x32xf32>
    %46 = tpu.matmul %44, %45, %cst_17 {dimension_numbers = #tpu.dot_dimension_numbers<[1], [0], [0], [1], [0, 0, 1, 1], [], []>} : vector<8x8xbf16>, vector<8x32xbf16>, vector<8x32xf32> -> vector<8x32xf32>
    %47 = arith.addf %24, %46 : vector<8x32xf32>
    %48 = vector.extract_strided_slice %15 {offsets = [0, 0, 8], sizes = [1, 8, 8], strides = [1, 1, 1]} : vector<1x8x32xbf16> to vector<1x8x8xbf16>
    %49 = vector.extract_strided_slice %16 {offsets = [0, 0, 8], sizes = [1, 8, 8], strides = [1, 1, 1]} : vector<1x8x32xbf16> to vector<1x8x8xbf16>
    %50 = vector.extract_strided_slice %17 {offsets = [0, 0, 8], sizes = [1, 8, 8], strides = [1, 1, 1]} : vector<1x8x32xbf16> to vector<1x8x8xbf16>
    "tpu.trace_start"() <{level = 10 : i32, message = "bqd,bkd->bqk"}> : () -> ()
    %cst_18 = arith.constant dense<0.000000e+00> : vector<1x8x8xf32>
    %51 = tpu.matmul %48, %49, %cst_18 {dimension_numbers = #tpu.dot_dimension_numbers<[2], [2], [1], [1], [0, 0, 0, 1, 1, 1], [0], [0]>} : vector<1x8x8xbf16>, vector<1x8x8xbf16>, vector<1x8x8xf32> -> vector<1x8x8xf32>
    "tpu.trace_stop"() : () -> ()
    %52 = vector.shape_cast %23 : vector<8x8xf32> to vector<1x8x8xf32>
    %53 = arith.addf %51, %52 : vector<1x8x8xf32>
    %cst_19 = arith.constant dense<0xFF800000> : vector<1x8xf32>
    %54 = vector.multi_reduction <maximumf>, %53, %cst_19 [2] : vector<1x8x8xf32> to vector<1x8xf32>
    %55 = vector.shape_cast %54 : vector<1x8xf32> to vector<1x8x1xf32>
    %56 = vector.broadcast %55 : vector<1x8x1xf32> to vector<1x8x8xf32>
    %57 = arith.subf %53, %56 : vector<1x8x8xf32>
    %58 = math.exp %57 : vector<1x8x8xf32>
    %cst_20 = arith.constant dense<0.000000e+00> : vector<1x8xf32>
    %59 = vector.multi_reduction <add>, %58, %cst_20 [2] : vector<1x8x8xf32> to vector<1x8xf32>
    %60 = vector.shape_cast %59 : vector<1x8xf32> to vector<1x8x1xf32>
    %61 = tpu.reciprocal %60 {approx = true} : vector<1x8x1xf32> -> vector<1x8x1xf32>
    %62 = vector.broadcast %61 : vector<1x8x1xf32> to vector<1x8x8xf32>
    %63 = arith.mulf %58, %62 : vector<1x8x8xf32>
    %64 = arith.truncf %63 : vector<1x8x8xf32> to vector<1x8x8xbf16>
    "tpu.trace_start"() <{level = 10 : i32, message = "bqk,bkd->bqd"}> : () -> ()
    %cst_21 = arith.constant dense<0.000000e+00> : vector<1x8x8xf32>
    %65 = tpu.matmul %64, %50, %cst_21 {dimension_numbers = #tpu.dot_dimension_numbers<[2], [1], [1], [2], [0, 0, 0, 1, 1, 2], [0], [0]>} : vector<1x8x8xbf16>, vector<1x8x8xbf16>, vector<1x8x8xf32> -> vector<1x8x8xf32>
    "tpu.trace_stop"() : () -> ()
    %66 = vector.shape_cast %65 : vector<1x8x8xf32> to vector<8x8xf32>
    %67 = arith.truncf %66 : vector<8x8xf32> to vector<8x8xbf16>
    %c8 = arith.constant 8 : index
    %c0_22 = arith.constant 0 : index
    %68 = vector.load %arg5[%c8, %c0_22] : memref<32x32xbf16, #tpu.memory_space<vmem>>, vector<8x32xbf16>
    %cst_23 = arith.constant dense<0.000000e+00> : vector<8x32xf32>
    %69 = tpu.matmul %67, %68, %cst_23 {dimension_numbers = #tpu.dot_dimension_numbers<[1], [0], [0], [1], [0, 0, 1, 1], [], []>} : vector<8x8xbf16>, vector<8x32xbf16>, vector<8x32xf32> -> vector<8x32xf32>
    %70 = arith.addf %47, %69 : vector<8x32xf32>
    %71 = vector.extract_strided_slice %15 {offsets = [0, 0, 16], sizes = [1, 8, 8], strides = [1, 1, 1]} : vector<1x8x32xbf16> to vector<1x8x8xbf16>
    %72 = vector.extract_strided_slice %16 {offsets = [0, 0, 16], sizes = [1, 8, 8], strides = [1, 1, 1]} : vector<1x8x32xbf16> to vector<1x8x8xbf16>
    %73 = vector.extract_strided_slice %17 {offsets = [0, 0, 16], sizes = [1, 8, 8], strides = [1, 1, 1]} : vector<1x8x32xbf16> to vector<1x8x8xbf16>
    "tpu.trace_start"() <{level = 10 : i32, message = "bqd,bkd->bqk"}> : () -> ()
    %cst_24 = arith.constant dense<0.000000e+00> : vector<1x8x8xf32>
    %74 = tpu.matmul %71, %72, %cst_24 {dimension_numbers = #tpu.dot_dimension_numbers<[2], [2], [1], [1], [0, 0, 0, 1, 1, 1], [0], [0]>} : vector<1x8x8xbf16>, vector<1x8x8xbf16>, vector<1x8x8xf32> -> vector<1x8x8xf32>
    "tpu.trace_stop"() : () -> ()
    %75 = vector.shape_cast %23 : vector<8x8xf32> to vector<1x8x8xf32>
    %76 = arith.addf %74, %75 : vector<1x8x8xf32>
    %cst_25 = arith.constant dense<0xFF800000> : vector<1x8xf32>
    %77 = vector.multi_reduction <maximumf>, %76, %cst_25 [2] : vector<1x8x8xf32> to vector<1x8xf32>
    %78 = vector.shape_cast %77 : vector<1x8xf32> to vector<1x8x1xf32>
    %79 = vector.broadcast %78 : vector<1x8x1xf32> to vector<1x8x8xf32>
    %80 = arith.subf %76, %79 : vector<1x8x8xf32>
    %81 = math.exp %80 : vector<1x8x8xf32>
    %cst_26 = arith.constant dense<0.000000e+00> : vector<1x8xf32>
    %82 = vector.multi_reduction <add>, %81, %cst_26 [2] : vector<1x8x8xf32> to vector<1x8xf32>
    %83 = vector.shape_cast %82 : vector<1x8xf32> to vector<1x8x1xf32>
    %84 = tpu.reciprocal %83 {approx = true} : vector<1x8x1xf32> -> vector<1x8x1xf32>
    %85 = vector.broadcast %84 : vector<1x8x1xf32> to vector<1x8x8xf32>
    %86 = arith.mulf %81, %85 : vector<1x8x8xf32>
    %87 = arith.truncf %86 : vector<1x8x8xf32> to vector<1x8x8xbf16>
    "tpu.trace_start"() <{level = 10 : i32, message = "bqk,bkd->bqd"}> : () -> ()
    %cst_27 = arith.constant dense<0.000000e+00> : vector<1x8x8xf32>
    %88 = tpu.matmul %87, %73, %cst_27 {dimension_numbers = #tpu.dot_dimension_numbers<[2], [1], [1], [2], [0, 0, 0, 1, 1, 2], [0], [0]>} : vector<1x8x8xbf16>, vector<1x8x8xbf16>, vector<1x8x8xf32> -> vector<1x8x8xf32>
    "tpu.trace_stop"() : () -> ()
    %89 = vector.shape_cast %88 : vector<1x8x8xf32> to vector<8x8xf32>
    %90 = arith.truncf %89 : vector<8x8xf32> to vector<8x8xbf16>
    %c16 = arith.constant 16 : index
    %c0_28 = arith.constant 0 : index
    %91 = vector.load %arg5[%c16, %c0_28] : memref<32x32xbf16, #tpu.memory_space<vmem>>, vector<8x32xbf16>
    %cst_29 = arith.constant dense<0.000000e+00> : vector<8x32xf32>
    %92 = tpu.matmul %90, %91, %cst_29 {dimension_numbers = #tpu.dot_dimension_numbers<[1], [0], [0], [1], [0, 0, 1, 1], [], []>} : vector<8x8xbf16>, vector<8x32xbf16>, vector<8x32xf32> -> vector<8x32xf32>
    %93 = arith.addf %70, %92 : vector<8x32xf32>
    %94 = vector.extract_strided_slice %15 {offsets = [0, 0, 24], sizes = [1, 8, 8], strides = [1, 1, 1]} : vector<1x8x32xbf16> to vector<1x8x8xbf16>
    %95 = vector.extract_strided_slice %16 {offsets = [0, 0, 24], sizes = [1, 8, 8], strides = [1, 1, 1]} : vector<1x8x32xbf16> to vector<1x8x8xbf16>
    %96 = vector.extract_strided_slice %17 {offsets = [0, 0, 24], sizes = [1, 8, 8], strides = [1, 1, 1]} : vector<1x8x32xbf16> to vector<1x8x8xbf16>
    "tpu.trace_start"() <{level = 10 : i32, message = "bqd,bkd->bqk"}> : () -> ()
    %cst_30 = arith.constant dense<0.000000e+00> : vector<1x8x8xf32>
    %97 = tpu.matmul %94, %95, %cst_30 {dimension_numbers = #tpu.dot_dimension_numbers<[2], [2], [1], [1], [0, 0, 0, 1, 1, 1], [0], [0]>} : vector<1x8x8xbf16>, vector<1x8x8xbf16>, vector<1x8x8xf32> -> vector<1x8x8xf32>
    "tpu.trace_stop"() : () -> ()
    %98 = vector.shape_cast %23 : vector<8x8xf32> to vector<1x8x8xf32>
    %99 = arith.addf %97, %98 : vector<1x8x8xf32>
    %cst_31 = arith.constant dense<0xFF800000> : vector<1x8xf32>
    %100 = vector.multi_reduction <maximumf>, %99, %cst_31 [2] : vector<1x8x8xf32> to vector<1x8xf32>
    %101 = vector.shape_cast %100 : vector<1x8xf32> to vector<1x8x1xf32>
    %102 = vector.broadcast %101 : vector<1x8x1xf32> to vector<1x8x8xf32>
    %103 = arith.subf %99, %102 : vector<1x8x8xf32>
    %104 = math.exp %103 : vector<1x8x8xf32>
    %cst_32 = arith.constant dense<0.000000e+00> : vector<1x8xf32>
    %105 = vector.multi_reduction <add>, %104, %cst_32 [2] : vector<1x8x8xf32> to vector<1x8xf32>
    %106 = vector.shape_cast %105 : vector<1x8xf32> to vector<1x8x1xf32>
    %107 = tpu.reciprocal %106 {approx = true} : vector<1x8x1xf32> -> vector<1x8x1xf32>
    %108 = vector.broadcast %107 : vector<1x8x1xf32> to vector<1x8x8xf32>
    %109 = arith.mulf %104, %108 : vector<1x8x8xf32>
    %110 = arith.truncf %109 : vector<1x8x8xf32> to vector<1x8x8xbf16>
    "tpu.trace_start"() <{level = 10 : i32, message = "bqk,bkd->bqd"}> : () -> ()
    %cst_33 = arith.constant dense<0.000000e+00> : vector<1x8x8xf32>
    %111 = tpu.matmul %110, %96, %cst_33 {dimension_numbers = #tpu.dot_dimension_numbers<[2], [1], [1], [2], [0, 0, 0, 1, 1, 2], [0], [0]>} : vector<1x8x8xbf16>, vector<1x8x8xbf16>, vector<1x8x8xf32> -> vector<1x8x8xf32>
    "tpu.trace_stop"() : () -> ()
    %112 = vector.shape_cast %111 : vector<1x8x8xf32> to vector<8x8xf32>
    %113 = arith.truncf %112 : vector<8x8xf32> to vector<8x8xbf16>
    %c24 = arith.constant 24 : index
    %c0_34 = arith.constant 0 : index
    %114 = vector.load %arg5[%c24, %c0_34] : memref<32x32xbf16, #tpu.memory_space<vmem>>, vector<8x32xbf16>
    %cst_35 = arith.constant dense<0.000000e+00> : vector<8x32xf32>
    %115 = tpu.matmul %113, %114, %cst_35 {dimension_numbers = #tpu.dot_dimension_numbers<[1], [0], [0], [1], [0, 0, 1, 1], [], []>} : vector<8x8xbf16>, vector<8x32xbf16>, vector<8x32xf32> -> vector<8x32xf32>
    %116 = arith.addf %93, %115 : vector<8x32xf32>
    %c0_36 = arith.constant 0 : index
    %c0_37 = arith.constant 0 : index
    %117 = vector.load %arg6[%c0_36, %c0_37] : memref<1x32xf32, #tpu.memory_space<vmem>>, vector<1x32xf32>
    %118 = vector.broadcast %117 : vector<1x32xf32> to vector<8x32xf32>
    %119 = arith.addf %116, %118 : vector<8x32xf32>
    %120 = arith.addf %7, %119 : vector<8x32xf32>
    %c0_38 = arith.constant 0 : index
    %c0_39 = arith.constant 0 : index
    %121 = vector.load %arg7[%c0_38, %c0_39] : memref<1x32xf32, #tpu.memory_space<vmem>>, vector<1x32xf32>
    %c0_40 = arith.constant 0 : index
    %c0_41 = arith.constant 0 : index
    %122 = vector.load %arg8[%c0_40, %c0_41] : memref<1x32xf32, #tpu.memory_space<vmem>>, vector<1x32xf32>
    %cst_42 = arith.constant dense<0.000000e+00> : vector<8xf32>
    %123 = vector.multi_reduction <add>, %120, %cst_42 [1] : vector<8x32xf32> to vector<8xf32>
    %124 = vector.shape_cast %123 : vector<8xf32> to vector<8x1xf32>
    %cst_43 = arith.constant 3.200000e+01 : f32
    %125 = vector.broadcast %cst_43 : f32 to vector<8x1xf32>
    %126 = arith.divf %124, %125 : vector<8x1xf32>
    %127 = vector.broadcast %126 : vector<8x1xf32> to vector<8x32xf32>
    %128 = arith.subf %120, %127 : vector<8x32xf32>
    %129 = arith.mulf %128, %128 : vector<8x32xf32>
    %cst_44 = arith.constant dense<0.000000e+00> : vector<8xf32>
    %130 = vector.multi_reduction <add>, %129, %cst_44 [1] : vector<8x32xf32> to vector<8xf32>
    %131 = vector.shape_cast %130 : vector<8xf32> to vector<8x1xf32>
    %cst_45 = arith.constant 3.200000e+01 : f32
    %132 = vector.broadcast %cst_45 : f32 to vector<8x1xf32>
    %133 = arith.divf %131, %132 : vector<8x1xf32>
    %134 = vector.broadcast %126 : vector<8x1xf32> to vector<8x32xf32>
    %135 = arith.subf %120, %134 : vector<8x32xf32>
    %cst_46 = arith.constant 9.99999974E-6 : f32
    %136 = vector.broadcast %cst_46 : f32 to vector<8x1xf32>
    %137 = arith.addf %133, %136 : vector<8x1xf32>
    %138 = math.rsqrt %137 : vector<8x1xf32>
    %139 = vector.broadcast %138 : vector<8x1xf32> to vector<8x32xf32>
    %140 = arith.mulf %135, %139 : vector<8x32xf32>
    %141 = vector.broadcast %121 : vector<1x32xf32> to vector<8x32xf32>
    %142 = arith.mulf %140, %141 : vector<8x32xf32>
    %143 = vector.broadcast %122 : vector<1x32xf32> to vector<8x32xf32>
    %144 = arith.addf %142, %143 : vector<8x32xf32>
    %145 = arith.truncf %144 : vector<8x32xf32> to vector<8x32xbf16>
    %c0_47 = arith.constant 0 : index
    %c0_48 = arith.constant 0 : index
    %146 = vector.load %arg9[%c0_47, %c0_48] : memref<32x64xbf16, #tpu.memory_space<vmem>>, vector<32x64xbf16>
    %cst_49 = arith.constant dense<0.000000e+00> : vector<8x64xf32>
    %147 = tpu.matmul %145, %146, %cst_49 {dimension_numbers = #tpu.dot_dimension_numbers<[1], [0], [0], [1], [0, 0, 1, 1], [], []>} : vector<8x32xbf16>, vector<32x64xbf16>, vector<8x64xf32> -> vector<8x64xf32>
    %c0_50 = arith.constant 0 : index
    %c0_51 = arith.constant 0 : index
    %148 = vector.load %arg10[%c0_50, %c0_51] : memref<1x64xf32, #tpu.memory_space<vmem>>, vector<1x64xf32>
    %149 = vector.broadcast %148 : vector<1x64xf32> to vector<8x64xf32>
    %150 = arith.addf %147, %149 : vector<8x64xf32>
    %151 = arith.mulf %150, %150 : vector<8x64xf32>
    %152 = arith.mulf %150, %151 : vector<8x64xf32>
    %cst_52 = arith.constant 4.471500e-02 : f32
    %153 = vector.broadcast %cst_52 : f32 to vector<8x64xf32>
    %154 = arith.mulf %153, %152 : vector<8x64xf32>
    %155 = arith.addf %150, %154 : vector<8x64xf32>
    %cst_53 = arith.constant 0.797884583 : f32
    %156 = vector.broadcast %cst_53 : f32 to vector<8x64xf32>
    %157 = arith.mulf %156, %155 : vector<8x64xf32>
    %158 = math.tanh %157 : vector<8x64xf32>
    %cst_54 = arith.constant 1.000000e+00 : f32
    %159 = vector.broadcast %cst_54 : f32 to vector<8x64xf32>
    %160 = arith.addf %159, %158 : vector<8x64xf32>
    %cst_55 = arith.constant 5.000000e-01 : f32
    %161 = vector.broadcast %cst_55 : f32 to vector<8x64xf32>
    %162 = arith.mulf %161, %160 : vector<8x64xf32>
    %163 = arith.mulf %150, %162 : vector<8x64xf32>
    %164 = arith.truncf %163 : vector<8x64xf32> to vector<8x64xbf16>
    %c0_56 = arith.constant 0 : index
    %c0_57 = arith.constant 0 : index
    %165 = vector.load %arg11[%c0_56, %c0_57] : memref<64x32xbf16, #tpu.memory_space<vmem>>, vector<64x32xbf16>
    %cst_58 = arith.constant dense<0.000000e+00> : vector<8x32xf32>
    %166 = tpu.matmul %164, %165, %cst_58 {dimension_numbers = #tpu.dot_dimension_numbers<[1], [0], [0], [1], [0, 0, 1, 1], [], []>} : vector<8x64xbf16>, vector<64x32xbf16>, vector<8x32xf32> -> vector<8x32xf32>
    %c0_59 = arith.constant 0 : index
    %c0_60 = arith.constant 0 : index
    %167 = vector.load %arg12[%c0_59, %c0_60] : memref<1x32xf32, #tpu.memory_space<vmem>>, vector<1x32xf32>
    %168 = vector.broadcast %167 : vector<1x32xf32> to vector<8x32xf32>
    %169 = arith.addf %166, %168 : vector<8x32xf32>
    %170 = arith.addf %144, %169 : vector<8x32xf32>
    %c0_61 = arith.constant 0 : index
    %c0_62 = arith.constant 0 : index
    %171 = vector.load %arg13[%c0_61, %c0_62] : memref<1x32xf32, #tpu.memory_space<vmem>>, vector<1x32xf32>
    %c0_63 = arith.constant 0 : index
    %c0_64 = arith.constant 0 : index
    %172 = vector.load %arg14[%c0_63, %c0_64] : memref<1x32xf32, #tpu.memory_space<vmem>>, vector<1x32xf32>
    %cst_65 = arith.constant dense<0.000000e+00> : vector<8xf32>
    %173 = vector.multi_reduction <add>, %170, %cst_65 [1] : vector<8x32xf32> to vector<8xf32>
    %174 = vector.shape_cast %173 : vector<8xf32> to vector<8x1xf32>
    %cst_66 = arith.constant 3.200000e+01 : f32
    %175 = vector.broadcast %cst_66 : f32 to vector<8x1xf32>
    %176 = arith.divf %174, %175 : vector<8x1xf32>
    %177 = vector.broadcast %176 : vector<8x1xf32> to vector<8x32xf32>
    %178 = arith.subf %170, %177 : vector<8x32xf32>
    %179 = arith.mulf %178, %178 : vector<8x32xf32>
    %cst_67 = arith.constant dense<0.000000e+00> : vector<8xf32>
    %180 = vector.multi_reduction <add>, %179, %cst_67 [1] : vector<8x32xf32> to vector<8xf32>
    %181 = vector.shape_cast %180 : vector<8xf32> to vector<8x1xf32>
    %cst_68 = arith.constant 3.200000e+01 : f32
    %182 = vector.broadcast %cst_68 : f32 to vector<8x1xf32>
    %183 = arith.divf %181, %182 : vector<8x1xf32>
    %184 = vector.broadcast %176 : vector<8x1xf32> to vector<8x32xf32>
    %185 = arith.subf %170, %184 : vector<8x32xf32>
    %cst_69 = arith.constant 9.99999974E-6 : f32
    %186 = vector.broadcast %cst_69 : f32 to vector<8x1xf32>
    %187 = arith.addf %183, %186 : vector<8x1xf32>
    %188 = math.rsqrt %187 : vector<8x1xf32>
    %189 = vector.broadcast %188 : vector<8x1xf32> to vector<8x32xf32>
    %190 = arith.mulf %185, %189 : vector<8x32xf32>
    %191 = vector.broadcast %171 : vector<1x32xf32> to vector<8x32xf32>
    %192 = arith.mulf %190, %191 : vector<8x32xf32>
    %193 = vector.broadcast %172 : vector<1x32xf32> to vector<8x32xf32>
    %194 = arith.addf %192, %193 : vector<8x32xf32>
    %c0_70 = arith.constant 0 : index
    %c0_71 = arith.constant 0 : index
    %195 = vector.load %arg15[%c0_70, %c0_71] : memref<8x32xf32, #tpu.memory_space<vmem>>, vector<8x32xf32>
    tpu.vector_store %arg15[%c0_70, %c0_71], %194 {strides = array<i32>} : memref<8x32xf32, #tpu.memory_space<vmem>>, vector<8x32xf32>,
    return
  }
  func.func @transform_0(%arg0: i32) -> (i32, i32) {
    %c0_i32 = arith.constant 0 : i32
    %c0_i32_0 = arith.constant 0 : i32
    return %arg0, %c0_i32 : i32, i32
  }
  func.func @transform_1(%arg0: i32) -> i32 {
    %c0_i32 = arith.constant 0 : i32
    %c0_i32_0 = arith.constant 0 : i32
    return %c0_i32 : i32
  }
  func.func @transform_2(%arg0: i32) -> (i32, i32) {
    %c0_i32 = arith.constant 0 : i32
    %c0_i32_0 = arith.constant 0 : i32
    %c0_i32_1 = arith.constant 0 : i32
    return %c0_i32, %c0_i32_0 : i32, i32
  }
  func.func @transform_3(%arg0: i32) -> (i32, i32) {
    %c0_i32 = arith.constant 0 : i32
    %c0_i32_0 = arith.constant 0 : i32
    %c0_i32_1 = arith.constant 0 : i32
    return %c0_i32, %c0_i32_0 : i32, i32
  }
  func.func @transform_4(%arg0: i32) -> (i32, i32) {
    %c0_i32 = arith.constant 0 : i32
    %c0_i32_0 = arith.constant 0 : i32
    %c0_i32_1 = arith.constant 0 : i32
    return %c0_i32, %c0_i32_0 : i32, i32
  }
  func.func @transform_5(%arg0: i32) -> (i32, i32) {
    %c0_i32 = arith.constant 0 : i32
    %c0_i32_0 = arith.constant 0 : i32
    %c0_i32_1 = arith.constant 0 : i32
    return %c0_i32, %c0_i32_0 : i32, i32
  }
  func.func @transform_6(%arg0: i32) -> (i32, i32) {
    %c0_i32 = arith.constant 0 : i32
    %c0_i32_0 = arith.constant 0 : i32
    %c0_i32_1 = arith.constant 0 : i32
    return %c0_i32, %c0_i32_0 : i32, i32
  }
  func.func @transform_7(%arg0: i32) -> (i32, i32) {
    %c0_i32 = arith.constant 0 : i32
    %c0_i32_0 = arith.constant 0 : i32
    %c0_i32_1 = arith.constant 0 : i32
    return %c0_i32, %c0_i32_0 : i32, i32
  }
  func.func @transform_8(%arg0: i32) -> (i32, i32) {
    %c0_i32 = arith.constant 0 : i32
    %c0_i32_0 = arith.constant 0 : i32
    %c0_i32_1 = arith.constant 0 : i32
    return %c0_i32, %c0_i32_0 : i32, i32
  }
  func.func @transform_9(%arg0: i32) -> (i32, i32) {
    %c0_i32 = arith.constant 0 : i32
    %c0_i32_0 = arith.constant 0 : i32
    %c0_i32_1 = arith.constant 0 : i32
    return %c0_i32, %c0_i32_0 : i32, i32
  }
  func.func @transform_10(%arg0: i32) -> (i32, i32) {
    %c0_i32 = arith.constant 0 : i32
    %c0_i32_0 = arith.constant 0 : i32
    %c0_i32_1 = arith.constant 0 : i32
    return %c0_i32, %c0_i32_0 : i32, i32
  }
  func.func @transform_11(%arg0: i32) -> (i32, i32) {
    %c0_i32 = arith.constant 0 : i32
    %c0_i32_0 = arith.constant 0 : i32
    %c0_i32_1 = arith.constant 0 : i32
    return %c0_i32, %c0_i32_0 : i32, i32
  }
  func.func @transform_12(%arg0: i32) -> (i32, i32) {
    %c0_i32 = arith.constant 0 : i32
    %c0_i32_0 = arith.constant 0 : i32
    %c0_i32_1 = arith.constant 0 : i32
    return %c0_i32, %c0_i32_0 : i32, i32
  }
  func.func @transform_13(%arg0: i32) -> (i32, i32) {
    %c0_i32 = arith.constant 0 : i32
    %c0_i32_0 = arith.constant 0 : i32
    %c0_i32_1 = arith.constant 0 : i32
    return %c0_i32, %c0_i32_0 : i32, i32
  }
  func.func @transform_14(%arg0: i32) -> (i32, i32) {
    %c0_i32 = arith.constant 0 : i32
    %c0_i32_0 = arith.constant 0 : i32
    return %arg0, %c0_i32 : i32, i32
  }
}

module attributes {stable_mosaic.version = 11 : i64} {
  func.func @transformer_lsa_kernel(%arg0: i32, %arg1: memref<8x32xbf16, #tpu.memory_space<vmem>>, %arg2: memref<1xf32, #tpu.memory_space<smem>>, %arg3: memref<32x64xbf16, #tpu.memory_space<vmem>>, %arg4: memref<1x64xf32, #tpu.memory_space<vmem>>, %arg5: memref<32x32xbf16, #tpu.memory_space<vmem>>, %arg6: memref<1x32xf32, #tpu.memory_space<vmem>>, %arg7: memref<1x32xf32, #tpu.memory_space<vmem>>, %arg8: memref<1x32xf32, #tpu.memory_space<vmem>>, %arg9: memref<32x64xbf16, #tpu.memory_space<vmem>>, %arg10: memref<1x64xf32, #tpu.memory_space<vmem>>, %arg11: memref<64x32xbf16, #tpu.memory_space<vmem>>, %arg12: memref<1x32xf32, #tpu.memory_space<vmem>>, %arg13: memref<1x32xf32, #tpu.memory_space<vmem>>, %arg14: memref<1x32xf32, #tpu.memory_space<vmem>>, %arg15: memref<8x32xf32, #tpu.memory_space<vmem>>) attributes {dimension_semantics = [#tpu.dimension_semantics<parallel>], iteration_bounds = array<i64: 2>, scalar_prefetch = 0 : i64, scratch_operands = 0 : i64, tpu.core_type = #tpu.core_type<tc>, window_params = [{transform_indices = @transform_0, window_bounds = array<i64: 8, 32>}, {transform_indices = @transform_1, window_bounds = array<i64: 1>}, {pipeline_mode = #tpu.pipeline_mode<synchronous>, transform_indices = @transform_2, window_bounds = array<i64: 32, 64>}, {pipeline_mode = #tpu.pipeline_mode<synchronous>, transform_indices = @transform_3, window_bounds = array<i64: 1, 64>}, {pipeline_mode = #tpu.pipeline_mode<synchronous>, transform_indices = @transform_4, window_bounds = array<i64: 32, 32>}, {pipeline_mode = #tpu.pipeline_mode<synchronous>, transform_indices = @transform_5, window_bounds = array<i64: 1, 32>}, {pipeline_mode = #tpu.pipeline_mode<synchronous>, transform_indices = @transform_6, window_bounds = array<i64: 1, 32>}, {pipeline_mode = #tpu.pipeline_mode<synchronous>, transform_indices = @transform_7, window_bounds = array<i64: 1, 32>}, {pipeline_mode = #tpu.pipeline_mode<synchronous>, transform_indices = @transform_8, window_bounds = array<i64: 32, 64>}, {pipeline_mode = #tpu.pipeline_mode<synchronous>, transform_indices = @transform_9, window_bounds = array<i64: 1, 64>}, {pipeline_mode = #tpu.pipeline_mode<synchronous>, transform_indices = @transform_10, window_bounds = array<i64: 64, 32>}, {pipeline_mode = #tpu.pipeline_mode<synchronous>, transform_indices = @transform_11, window_bounds = array<i64: 1, 32>}, {pipeline_mode = #tpu.pipeline_mode<synchronous>, transform_indices = @transform_12, window_bounds = array<i64: 1, 32>}, {pipeline_mode = #tpu.pipeline_mode<synchronous>, transform_indices = @transform_13, window_bounds = array<i64: 1, 32>}, {transform_indices = @transform_14, window_bounds = array<i64: 8, 32>}]} {
    %c0 = arith.constant 0 : index
    %c0_0 = arith.constant 0 : index
    %0 = vector.load %arg1[%c0, %c0_0] : memref<8x32xbf16, #tpu.memory_space<vmem>>, vector<8x32xbf16>
    %c0_1 = arith.constant 0 : index
    %c0_2 = arith.constant 0 : index
    %1 = vector.load %arg3[%c0_1, %c0_2] : memref<32x64xbf16, #tpu.memory_space<vmem>>, vector<32x64xbf16>
    %cst = arith.constant dense<0.000000e+00> : vector<8x64xf32>
    %2 = tpu.matmul %0, %1, %cst {dimension_numbers = #tpu.dot_dimension_numbers<[1], [0], [0], [1], [0, 0, 1, 1], [], []>} : vector<8x32xbf16>, vector<32x64xbf16>, vector<8x64xf32> -> vector<8x64xf32>
    %c0_3 = arith.constant 0 : index
    %c0_4 = arith.constant 0 : index
    %3 = vector.load %arg4[%c0_3, %c0_4] : memref<1x64xf32, #tpu.memory_space<vmem>>, vector<1x64xf32>
    %4 = vector.broadcast %3 : vector<1x64xf32> to vector<8x64xf32>
    %5 = arith.addf %2, %4 : vector<8x64xf32>
    %6 = vector.extract_strided_slice %5 {offsets = [0, 0], sizes = [8, 32], strides = [1, 1]} : vector<8x64xf32> to vector<8x32xf32>
    %7 = vector.extract_strided_slice %5 {offsets = [0, 32], sizes = [8, 32], strides = [1, 1]} : vector<8x64xf32> to vector<8x32xf32>
    %c0_5 = arith.constant 0 : index
    %8 = memref.load %arg2[%c0_5] : memref<1xf32, #tpu.memory_space<smem>>
    %cst_6 = arith.constant 2.82842708 : f32
    %9 = arith.mulf %8, %cst_6 : f32
    %cst_7 = arith.constant 1.000000e+00 : f32
    %10 = arith.divf %cst_7, %9 : f32
    %11 = vector.broadcast %10 : f32 to vector<8x32xf32>
    %12 = arith.mulf %6, %11 : vector<8x32xf32>
    %13 = arith.truncf %12 : vector<8x32xf32> to vector<8x32xbf16>
    %14 = arith.truncf %7 : vector<8x32xf32> to vector<8x32xbf16>
    %15 = vector.shape_cast %13 : vector<8x32xbf16> to vector<1x8x32xbf16>
    %16 = vector.shape_cast %0 : vector<8x32xbf16> to vector<1x8x32xbf16>
    %17 = vector.shape_cast %14 : vector<8x32xbf16> to vector<1x8x32xbf16>
    %18 = tpu.iota {dimensions = array<i32: 0>} : vector<8x8xi32>
    %19 = tpu.iota {dimensions = array<i32: 1>} : vector<8x8xi32>
    %20 = arith.cmpi eq, %18, %19 : vector<8x8xi32>
    %cst_8 = arith.constant -1.000000e+30 : f32
    %cst_9 = arith.constant 0.000000e+00 : f32
    %21 = vector.broadcast %cst_8 : f32 to vector<8x8xf32>
    %22 = vector.broadcast %cst_9 : f32 to vector<8x8xf32>
    %23 = arith.select %20, %21, %22 : vector<8x8xi1>, vector<8x8xf32>
    %cst_10 = arith.constant 0.000000e+00 : f32
    %24 = vector.broadcast %cst_10 : f32 to vector<8x32xf32>
    %25 = vector.extract_strided_slice %15 {offsets = [0, 0, 0], sizes = [1, 8, 8], strides = [1, 1, 1]} : vector<1x8x32xbf16> to vector<1x8x8xbf16>
    %26 = vector.extract_strided_slice %16 {offsets = [0, 0, 0], sizes = [1, 8, 8], strides = [1, 1, 1]} : vector<1x8x32xbf16> to vector<1x8x8xbf16>
    %27 = vector.extract_strided_slice %17 {offsets = [0, 0, 0], sizes = [1, 8, 8], strides = [1, 1, 1]} : vector<1x8x32xbf16> to vector<1x8x8xbf16>
    "tpu.trace_start"() <{level = 10 : i32, message = "bqd,bkd->bqk"}> : () -> ()
    %cst_11 = arith.constant dense<0.000000e+00> : vector<1x8x8xf32>
    %28 = tpu.matmul %25, %26, %cst_11 {dimension_numbers = #tpu.dot_dimension_numbers<[2], [2], [1], [1], [0, 0, 0, 1, 1, 1], [0], [0]>} : vector<1x8x8xbf16>, vector<1x8x8xbf16>, vector<1x8x8xf32> -> vector<1x8x8xf32>
    "tpu.trace_stop"() : () -> ()
    %29 = vector.shape_cast %23 : vector<8x8xf32> to vector<1x8x8xf32>
    %30 = arith.addf %28, %29 : vector<1x8x8xf32>
    %cst_12 = arith.constant dense<0xFF800000> : vector<1x8xf32>
    %31 = vector.multi_reduction <maximumf>, %30, %cst_12 [2] : vector<1x8x8xf32> to vector<1x8xf32>
    %32 = vector.shape_cast %31 : vector<1x8xf32> to vector<1x8x1xf32>
    %33 = vector.broadcast %32 : vector<1x8x1xf32> to vector<1x8x8xf32>
    %34 = arith.subf %30, %33 : vector<1x8x8xf32>
    %35 = math.exp %34 : vector<1x8x8xf32>
    %cst_13 = arith.constant dense<0.000000e+00> : vector<1x8xf32>
    %36 = vector.multi_reduction <add>, %35, %cst_13 [2] : vector<1x8x8xf32> to vector<1x8xf32>
    %37 = vector.shape_cast %36 : vector<1x8xf32> to vector<1x8x1xf32>
    %38 = tpu.reciprocal %37 {approx = true} : vector<1x8x1xf32> -> vector<1x8x1xf32>
    %39 = vector.broadcast %38 : vector<1x8x1xf32> to vector<1x8x8xf32>
    %40 = arith.mulf %35, %39 : vector<1x8x8xf32>
    %41 = arith.truncf %40 : vector<1x8x8xf32> to vector<1x8x8xbf16>
    "tpu.trace_start"() <{level = 10 : i32, message = "bqk,bkd->bqd"}> : () -> ()
    %cst_14 = arith.constant dense<0.000000e+00> : vector<1x8x8xf32>
    %42 = tpu.matmul %41, %27, %cst_14 {dimension_numbers = #tpu.dot_dimension_numbers<[2], [1], [1], [2], [0, 0, 0, 1, 1, 2], [0], [0]>} : vector<1x8x8xbf16>, vector<1x8x8xbf16>, vector<1x8x8xf32> -> vector<1x8x8xf32>
    "tpu.trace_stop"() : () -> ()
    %43 = vector.shape_cast %42 : vector<1x8x8xf32> to vector<8x8xf32>
    %44 = arith.truncf %43 : vector<8x8xf32> to vector<8x8xbf16>
    %c0_15 = arith.constant 0 : index
    %c0_16 = arith.constant 0 : index
    %45 = vector.load %arg5[%c0_15, %c0_16] : memref<32x32xbf16, #tpu.memory_space<vmem>>, vector<8x32xbf16>
    %cst_17 = arith.constant dense<0.000000e+00> : vector<8x32xf32>
    %46 = tpu.matmul %44, %45, %cst_17 {dimension_numbers = #tpu.dot_dimension_numbers<[1], [0], [0], [1], [0, 0, 1, 1], [], []>} : vector<8x8xbf16>, vector<8x32xbf16>, vector<8x32xf32> -> vector<8x32xf32>
    %47 = arith.addf %24, %46 : vector<8x32xf32>
    %48 = vector.extract_strided_slice %15 {offsets = [0, 0, 8], sizes = [1, 8, 8], strides = [1, 1, 1]} : vector<1x8x32xbf16> to vector<1x8x8xbf16>
    %49 = vector.extract_strided_slice %16 {offsets = [0, 0, 8], sizes = [1, 8, 8], strides = [1, 1, 1]} : vector<1x8x32xbf16> to vector<1x8x8xbf16>
    %50 = vector.extract_strided_slice %17 {offsets = [0, 0, 8], sizes = [1, 8, 8], strides = [1, 1, 1]} : vector<1x8x32xbf16> to vector<1x8x8xbf16>
    "tpu.trace_start"() <{level = 10 : i32, message = "bqd,bkd->bqk"}> : () -> ()
    %cst_18 = arith.constant dense<0.000000e+00> : vector<1x8x8xf32>
    %51 = tpu.matmul %48, %49, %cst_18 {dimension_numbers = #tpu.dot_dimension_numbers<[2], [2], [1], [1], [0, 0, 0, 1, 1, 1], [0], [0]>} : vector<1x8x8xbf16>, vector<1x8x8xbf16>, vector<1x8x8xf32> -> vector<1x8x8xf32>
    "tpu.trace_stop"() : () -> ()
    %52 = vector.shape_cast %23 : vector<8x8xf32> to vector<1x8x8xf32>
    %53 = arith.addf %51, %52 : vector<1x8x8xf32>
    %cst_19 = arith.constant dense<0xFF800000> : vector<1x8xf32>
    %54 = vector.multi_reduction <maximumf>, %53, %cst_19 [2] : vector<1x8x8xf32> to vector<1x8xf32>
    %55 = vector.shape_cast %54 : vector<1x8xf32> to vector<1x8x1xf32>
    %56 = vector.broadcast %55 : vector<1x8x1xf32> to vector<1x8x8xf32>
    %57 = arith.subf %53, %56 : vector<1x8x8xf32>
    %58 = math.exp %57 : vector<1x8x8xf32>
    %cst_20 = arith.constant dense<0.000000e+00> : vector<1x8xf32>
    %59 = vector.multi_reduction <add>, %58, %cst_20 [2] : vector<1x8x8xf32> to vector<1x8xf32>
    %60 = vector.shape_cast %59 : vector<1x8xf32> to vector<1x8x1xf32>
    %61 = tpu.reciprocal %60 {approx = true} : vector<1x8x1xf32> -> vector<1x8x1xf32>
    %62 = vector.broadcast %61 : vector<1x8x1xf32> to vector<1x8x8xf32>
    %63 = arith.mulf %58, %62 : vector<1x8x8xf32>
    %64 = arith.truncf %63 : vector<1x8x8xf32> to vector<1x8x8xbf16>
    "tpu.trace_start"() <{level = 10 : i32, message = "bqk,bkd->bqd"}> : () -> ()
    %cst_21 = arith.constant dense<0.000000e+00> : vector<1x8x8xf32>
    %65 = tpu.matmul %64, %50, %cst_21 {dimension_numbers = #tpu.dot_dimension_numbers<[2], [1], [1], [2], [0, 0, 0, 1, 1, 2], [0], [0]>} : vector<1x8x8xbf16>, vector<1x8x8xbf16>, vector<1x8x8xf32> -> vector<1x8x8xf32>
    "tpu.trace_stop"() : () -> ()
    %66 = vector.shape_cast %65 : vector<1x8x8xf32> to vector<8x8xf32>
    %67 = arith.truncf %66 : vector<8x8xf32> to vector<8x8xbf16>
    %c8 = arith.constant 8 : index
    %c0_22 = arith.constant 0 : index
    %68 = vector.load %arg5[%c8, %c0_22] : memref<32x32xbf16, #tpu.memory_space<vmem>>, vector<8x32xbf16>
    %cst_23 = arith.constant dense<0.000000e+00> : vector<8x32xf32>
    %69 = tpu.matmul %67, %68, %cst_23 {dimension_numbers = #tpu.dot_dimension_numbers<[1], [0], [0], [1], [0, 0, 1, 1], [], []>} : vector<8x8xbf16>, vector<8x32xbf16>, vector<8x32xf32> -> vector<8x32xf32>
    %70 = arith.addf %47, %69 : vector<8x32xf32>
    %71 = vector.extract_strided_slice %15 {offsets = [0, 0, 16], sizes = [1, 8, 8], strides = [1, 1, 1]} : vector<1x8x32xbf16> to vector<1x8x8xbf16>
    %72 = vector.extract_strided_slice %16 {offsets = [0, 0, 16], sizes = [1, 8, 8], strides = [1, 1, 1]} : vector<1x8x32xbf16> to vector<1x8x8xbf16>
    %73 = vector.extract_strided_slice %17 {offsets = [0, 0, 16], sizes = [1, 8, 8], strides = [1, 1, 1]} : vector<1x8x32xbf16> to vector<1x8x8xbf16>
    "tpu.trace_start"() <{level = 10 : i32, message = "bqd,bkd->bqk"}> : () -> ()
    %cst_24 = arith.constant dense<0.000000e+00> : vector<1x8x8xf32>
    %74 = tpu.matmul %71, %72, %cst_24 {dimension_numbers = #tpu.dot_dimension_numbers<[2], [2], [1], [1], [0, 0, 0, 1, 1, 1], [0], [0]>} : vector<1x8x8xbf16>, vector<1x8x8xbf16>, vector<1x8x8xf32> -> vector<1x8x8xf32>
    "tpu.trace_stop"() : () -> ()
    %75 = vector.shape_cast %23 : vector<8x8xf32> to vector<1x8x8xf32>
    %76 = arith.addf %74, %75 : vector<1x8x8xf32>
    %cst_25 = arith.constant dense<0xFF800000> : vector<1x8xf32>
    %77 = vector.multi_reduction <maximumf>, %76, %cst_25 [2] : vector<1x8x8xf32> to vector<1x8xf32>
    %78 = vector.shape_cast %77 : vector<1x8xf32> to vector<1x8x1xf32>
    %79 = vector.broadcast %78 : vector<1x8x1xf32> to vector<1x8x8xf32>
    %80 = arith.subf %76, %79 : vector<1x8x8xf32>
    %81 = math.exp %80 : vector<1x8x8xf32>
    %cst_26 = arith.constant dense<0.000000e+00> : vector<1x8xf32>
    %82 = vector.multi_reduction <add>, %81, %cst_26 [2] : vector<1x8x8xf32> to vector<1x8xf32>
    %83 = vector.shape_cast %82 : vector<1x8xf32> to vector<1x8x1xf32>
    %84 = tpu.reciprocal %83 {approx = true} : vector<1x8x1xf32> -> vector<1x8x1xf32>
    %85 = vector.broadcast %84 : vector<1x8x1xf32> to vector<1x8x8xf32>
    %86 = arith.mulf %81, %85 : vector<1x8x8xf32>
    %87 = arith.truncf %86 : vector<1x8x8xf32> to vector<1x8x8xbf16>
    "tpu.trace_start"() <{level = 10 : i32, message = "bqk,bkd->bqd"}> : () -> ()
    %cst_27 = arith.constant dense<0.000000e+00> : vector<1x8x8xf32>
    %88 = tpu.matmul %87, %73, %cst_27 {dimension_numbers = #tpu.dot_dimension_numbers<[2], [1], [1], [2], [0, 0, 0, 1, 1, 2], [0], [0]>} : vector<1x8x8xbf16>, vector<1x8x8xbf16>, vector<1x8x8xf32> -> vector<1x8x8xf32>
    "tpu.trace_stop"() : () -> ()
    %89 = vector.shape_cast %88 : vector<1x8x8xf32> to vector<8x8xf32>
    %90 = arith.truncf %89 : vector<8x8xf32> to vector<8x8xbf16>
    %c16 = arith.constant 16 : index
    %c0_28 = arith.constant 0 : index
    %91 = vector.load %arg5[%c16, %c0_28] : memref<32x32xbf16, #tpu.memory_space<vmem>>, vector<8x32xbf16>
    %cst_29 = arith.constant dense<0.000000e+00> : vector<8x32xf32>
    %92 = tpu.matmul %90, %91, %cst_29 {dimension_numbers = #tpu.dot_dimension_numbers<[1], [0], [0], [1], [0, 0, 1, 1], [], []>} : vector<8x8xbf16>, vector<8x32xbf16>, vector<8x32xf32> -> vector<8x32xf32>
    %93 = arith.addf %70, %92 : vector<8x32xf32>
    %94 = vector.extract_strided_slice %15 {offsets = [0, 0, 24], sizes = [1, 8, 8], strides = [1, 1, 1]} : vector<1x8x32xbf16> to vector<1x8x8xbf16>
    %95 = vector.extract_strided_slice %16 {offsets = [0, 0, 24], sizes = [1, 8, 8], strides = [1, 1, 1]} : vector<1x8x32xbf16> to vector<1x8x8xbf16>
    %96 = vector.extract_strided_slice %17 {offsets = [0, 0, 24], sizes = [1, 8, 8], strides = [1, 1, 1]} : vector<1x8x32xbf16> to vector<1x8x8xbf16>
    "tpu.trace_start"() <{level = 10 : i32, message = "bqd,bkd->bqk"}> : () -> ()
    %cst_30 = arith.constant dense<0.000000e+00> : vector<1x8x8xf32>
    %97 = tpu.matmul %94, %95, %cst_30 {dimension_numbers = #tpu.dot_dimension_numbers<[2], [2], [1], [1], [0, 0, 0, 1, 1, 1], [0], [0]>} : vector<1x8x8xbf16>, vector<1x8x8xbf16>, vector<1x8x8xf32> -> vector<1x8x8xf32>
    "tpu.trace_stop"() : () -> ()
    %98 = vector.shape_cast %23 : vector<8x8xf32> to vector<1x8x8xf32>
    %99 = arith.addf %97, %98 : vector<1x8x8xf32>
    %cst_31 = arith.constant dense<0xFF800000> : vector<1x8xf32>
    %100 = vector.multi_reduction <maximumf>, %99, %cst_31 [2] : vector<1x8x8xf32> to vector<1x8xf32>
    %101 = vector.shape_cast %100 : vector<1x8xf32> to vector<1x8x1xf32>
    %102 = vector.broadcast %101 : vector<1x8x1xf32> to vector<1x8x8xf32>
    %103 = arith.subf %99, %102 : vector<1x8x8xf32>
    %104 = math.exp %103 : vector<1x8x8xf32>
    %cst_32 = arith.constant dense<0.000000e+00> : vector<1x8xf32>
    %105 = vector.multi_reduction <add>, %104, %cst_32 [2] : vector<1x8x8xf32> to vector<1x8xf32>
    %106 = vector.shape_cast %105 : vector<1x8xf32> to vector<1x8x1xf32>
    %107 = tpu.reciprocal %106 {approx = true} : vector<1x8x1xf32> -> vector<1x8x1xf32>
    %108 = vector.broadcast %107 : vector<1x8x1xf32> to vector<1x8x8xf32>
    %109 = arith.mulf %104, %108 : vector<1x8x8xf32>
    %110 = arith.truncf %109 : vector<1x8x8xf32> to vector<1x8x8xbf16>
    "tpu.trace_start"() <{level = 10 : i32, message = "bqk,bkd->bqd"}> : () -> ()
    %cst_33 = arith.constant dense<0.000000e+00> : vector<1x8x8xf32>
    %111 = tpu.matmul %110, %96, %cst_33 {dimension_numbers = #tpu.dot_dimension_numbers<[2], [1], [1], [2], [0, 0, 0, 1, 1, 2], [0], [0]>} : vector<1x8x8xbf16>, vector<1x8x8xbf16>, vector<1x8x8xf32> -> vector<1x8x8xf32>
    "tpu.trace_stop"() : () -> ()
    %112 = vector.shape_cast %111 : vector<1x8x8xf32> to vector<8x8xf32>
    %113 = arith.truncf %112 : vector<8x8xf32> to vector<8x8xbf16>
    %c24 = arith.constant 24 : index
    %c0_34 = arith.constant 0 : index
    %114 = vector.load %arg5[%c24, %c0_34] : memref<32x32xbf16, #tpu.memory_space<vmem>>, vector<8x32xbf16>
    %cst_35 = arith.constant dense<0.000000e+00> : vector<8x32xf32>
    %115 = tpu.matmul %113, %114, %cst_35 {dimension_numbers = #tpu.dot_dimension_numbers<[1], [0], [0], [1], [0, 0, 1, 1], [], []>} : vector<8x8xbf16>, vector<8x32xbf16>, vector<8x32xf32> -> vector<8x32xf32>
    %116 = arith.addf %93, %115 : vector<8x32xf32>
    %c0_36 = arith.constant 0 : index
    %c0_37 = arith.constant 0 : index
    %117 = vector.load %arg6[%c0_36, %c0_37] : memref<1x32xf32, #tpu.memory_space<vmem>>, vector<1x32xf32>
    %118 = vector.broadcast %117 : vector<1x32xf32> to vector<8x32xf32>
    %119 = arith.addf %116, %118 : vector<8x32xf32>
    %120 = arith.addf %7, %119 : vector<8x32xf32>
    %c0_38 = arith.constant 0 : index
    %c0_39 = arith.constant 0 : index
    %121 = vector.load %arg7[%c0_38, %c0_39] : memref<1x32xf32, #tpu.memory_space<vmem>>, vector<1x32xf32>
    %c0_40 = arith.constant 0 : index
    %c0_41 = arith.constant 0 : index
    %122 = vector.load %arg8[%c0_40, %c0_41] : memref<1x32xf32, #tpu.memory_space<vmem>>, vector<1x32xf32>
    %cst_42 = arith.constant dense<0.000000e+00> : vector<8xf32>
    %123 = vector.multi_reduction <add>, %120, %cst_42 [1] : vector<8x32xf32> to vector<8xf32>
    %124 = vector.shape_cast %123 : vector<8xf32> to vector<8x1xf32>
    %cst_43 = arith.constant 3.200000e+01 : f32
    %125 = vector.broadcast %cst_43 : f32 to vector<8x1xf32>
    %126 = arith.divf %124, %125 : vector<8x1xf32>
    %127 = vector.broadcast %126 : vector<8x1xf32> to vector<8x32xf32>
    %128 = arith.subf %120, %127 : vector<8x32xf32>
    %129 = arith.mulf %128, %128 : vector<8x32xf32>
    %cst_44 = arith.constant dense<0.000000e+00> : vector<8xf32>
    %130 = vector.multi_reduction <add>, %129, %cst_44 [1] : vector<8x32xf32> to vector<8xf32>
    %131 = vector.shape_cast %130 : vector<8xf32> to vector<8x1xf32>
    %cst_45 = arith.constant 3.200000e+01 : f32
    %132 = vector.broadcast %cst_45 : f32 to vector<8x1xf32>
    %133 = arith.divf %131, %132 : vector<8x1xf32>
    %134 = vector.broadcast %126 : vector<8x1xf32> to vector<8x32xf32>
    %135 = arith.subf %120, %134 : vector<8x32xf32>
    %cst_46 = arith.constant 9.99999974E-6 : f32
    %136 = vector.broadcast %cst_46 : f32 to vector<8x1xf32>
    %137 = arith.addf %133, %136 : vector<8x1xf32>
    %138 = math.rsqrt %137 : vector<8x1xf32>
    %139 = vector.broadcast %138 : vector<8x1xf32> to vector<8x32xf32>
    %140 = arith.mulf %135, %139 : vector<8x32xf32>
    %141 = vector.broadcast %121 : vector<1x32xf32> to vector<8x32xf32>
    %142 = arith.mulf %140, %141 : vector<8x32xf32>
    %143 = vector.broadcast %122 : vector<1x32xf32> to vector<8x32xf32>
    %144 = arith.addf %142, %143 : vector<8x32xf32>
    %145 = arith.truncf %144 : vector<8x32xf32> to vector<8x32xbf16>
    %c0_47 = arith.constant 0 : index
    %c0_48 = arith.constant 0 : index
    %146 = vector.load %arg9[%c0_47, %c0_48] : memref<32x64xbf16, #tpu.memory_space<vmem>>, vector<32x64xbf16>
    %cst_49 = arith.constant dense<0.000000e+00> : vector<8x64xf32>
    %147 = tpu.matmul %145, %146, %cst_49 {dimension_numbers = #tpu.dot_dimension_numbers<[1], [0], [0], [1], [0, 0, 1, 1], [], []>} : vector<8x32xbf16>, vector<32x64xbf16>, vector<8x64xf32> -> vector<8x64xf32>
    %c0_50 = arith.constant 0 : index
    %c0_51 = arith.constant 0 : index
    %148 = vector.load %arg10[%c0_50, %c0_51] : memref<1x64xf32, #tpu.memory_space<vmem>>, vector<1x64xf32>
    %149 = vector.broadcast %148 : vector<1x64xf32> to vector<8x64xf32>
    %150 = arith.addf %147, %149 : vector<8x64xf32>
    %151 = arith.mulf %150, %150 : vector<8x64xf32>
    %152 = arith.mulf %150, %151 : vector<8x64xf32>
    %cst_52 = arith.constant 4.471500e-02 : f32
    %153 = vector.broadcast %cst_52 : f32 to vector<8x64xf32>
    %154 = arith.mulf %153, %152 : vector<8x64xf32>
    %155 = arith.addf %150, %154 : vector<8x64xf32>
    %cst_53 = arith.constant 0.797884583 : f32
    %156 = vector.broadcast %cst_53 : f32 to vector<8x64xf32>
    %157 = arith.mulf %156, %155 : vector<8x64xf32>
    %158 = math.tanh %157 : vector<8x64xf32>
    %cst_54 = arith.constant 1.000000e+00 : f32
    %159 = vector.broadcast %cst_54 : f32 to vector<8x64xf32>
    %160 = arith.addf %159, %158 : vector<8x64xf32>
    %cst_55 = arith.constant 5.000000e-01 : f32
    %161 = vector.broadcast %cst_55 : f32 to vector<8x64xf32>
    %162 = arith.mulf %161, %160 : vector<8x64xf32>
    %163 = arith.mulf %150, %162 : vector<8x64xf32>
    %164 = arith.truncf %163 : vector<8x64xf32> to vector<8x64xbf16>
    %c0_56 = arith.constant 0 : index
    %c0_57 = arith.constant 0 : index
    %165 = vector.load %arg11[%c0_56, %c0_57] : memref<64x32xbf16, #tpu.memory_space<vmem>>, vector<64x32xbf16>
    %cst_58 = arith.constant dense<0.000000e+00> : vector<8x32xf32>
    %166 = tpu.matmul %164, %165, %cst_58 {dimension_numbers = #tpu.dot_dimension_numbers<[1], [0], [0], [1], [0, 0, 1, 1], [], []>} : vector<8x64xbf16>, vector<64x32xbf16>, vector<8x32xf32> -> vector<8x32xf32>
    %c0_59 = arith.constant 0 : index
    %c0_60 = arith.constant 0 : index
    %167 = vector.load %arg12[%c0_59, %c0_60] : memref<1x32xf32, #tpu.memory_space<vmem>>, vector<1x32xf32>
    %168 = vector.broadcast %167 : vector<1x32xf32> to vector<8x32xf32>
    %169 = arith.addf %166, %168 : vector<8x32xf32>
    %170 = arith.addf %144, %169 : vector<8x32xf32>
    %c0_61 = arith.constant 0 : index
    %c0_62 = arith.constant 0 : index
    %171 = vector.load %arg13[%c0_61, %c0_62] : memref<1x32xf32, #tpu.memory_space<vmem>>, vector<1x32xf32>
    %c0_63 = arith.constant 0 : index
    %c0_64 = arith.constant 0 : index
    %172 = vector.load %arg14[%c0_63, %c0_64] : memref<1x32xf32, #tpu.memory_space<vmem>>, vector<1x32xf32>
    %cst_65 = arith.constant dense<0.000000e+00> : vector<8xf32>
    %173 = vector.multi_reduction <add>, %170, %cst_65 [1] : vector<8x32xf32> to vector<8xf32>
    %174 = vector.shape_cast %173 : vector<8xf32> to vector<8x1xf32>
    %cst_66 = arith.constant 3.200000e+01 : f32
    %175 = vector.broadcast %cst_66 : f32 to vector<8x1xf32>
    %176 = arith.divf %174, %175 : vector<8x1xf32>
    %177 = vector.broadcast %176 : vector<8x1xf32> to vector<8x32xf32>
    %178 = arith.subf %170, %177 : vector<8x32xf32>
    %179 = arith.mulf %178, %178 : vector<8x32xf32>
    %cst_67 = arith.constant dense<0.000000e+00> : vector<8xf32>
    %180 = vector.multi_reduction <add>, %179, %cst_67 [1] : vector<8x32xf32> to vector<8xf32>
    %181 = vector.shape_cast %180 : vector<8xf32> to vector<8x1xf32>
    %cst_68 = arith.constant 3.200000e+01 : f32
    %182 = vector.broadcast %cst_68 : f32 to vector<8x1xf32>
    %183 = arith.divf %181, %182 : vector<8x1xf32>
    %184 = vector.broadcast %176 : vector<8x1xf32> to vector<8x32xf32>
    %185 = arith.subf %170, %184 : vector<8x32xf32>
    %cst_69 = arith.constant 9.99999974E-6 : f32
    %186 = vector.broadcast %cst_69 : f32 to vector<8x1xf32>
    %187 = arith.addf %183, %186 : vector<8x1xf32>
    %188 = math.rsqrt %187 : vector<8x1xf32>
    %189 = vector.broadcast %188 : vector<8x1xf32> to vector<8x32xf32>
    %190 = arith.mulf %185, %189 : vector<8x32xf32>
    %191 = vector.broadcast %171 : vector<1x32xf32> to vector<8x32xf32>
    %192 = arith.mulf %190, %191 : vector<8x32xf32>
    %193 = vector.broadcast %172 : vector<1x32xf32> to vector<8x32xf32>
    %194 = arith.addf %192, %193 : vector<8x32xf32>
    %c0_70 = arith.constant 0 : index
    %c0_71 = arith.constant 0 : index
    %195 = vector.load %arg15[%c0_70, %c0_71] : memref<8x32xf32, #tpu.memory_space<vmem>>, vector<8x32xf32>
    tpu.vector_store %arg15[%c0_70, %c0_71], %194 {strides = array<i32>} : memref<8x32xf32, #tpu.memory_space<vmem>>, vector<8x32xf32>,
    return
  }
  func.func @transform_0(%arg0: i32) -> (i32, i32) {
    %c0_i32 = arith.constant 0 : i32
    %c0_i32_0 = arith.constant 0 : i32
    return %arg0, %c0_i32 : i32, i32
  }
  func.func @transform_1(%arg0: i32) -> i32 {
    %c0_i32 = arith.constant 0 : i32
    %c0_i32_0 = arith.constant 0 : i32
    return %c0_i32 : i32
  }
  func.func @transform_2(%arg0: i32) -> (i32, i32) {
    %c0_i32 = arith.constant 0 : i32
    %c0_i32_0 = arith.constant 0 : i32
    %c0_i32_1 = arith.constant 0 : i32
    return %c0_i32, %c0_i32_0 : i32, i32
  }
  func.func @transform_3(%arg0: i32) -> (i32, i32) {
    %c0_i32 = arith.constant 0 : i32
    %c0_i32_0 = arith.constant 0 : i32
    %c0_i32_1 = arith.constant 0 : i32
    return %c0_i32, %c0_i32_0 : i32, i32
  }
  func.func @transform_4(%arg0: i32) -> (i32, i32) {
    %c0_i32 = arith.constant 0 : i32
    %c0_i32_0 = arith.constant 0 : i32
    %c0_i32_1 = arith.constant 0 : i32
    return %c0_i32, %c0_i32_0 : i32, i32
  }
  func.func @transform_5(%arg0: i32) -> (i32, i32) {
    %c0_i32 = arith.constant 0 : i32
    %c0_i32_0 = arith.constant 0 : i32
    %c0_i32_1 = arith.constant 0 : i32
    return %c0_i32, %c0_i32_0 : i32, i32
  }
  func.func @transform_6(%arg0: i32) -> (i32, i32) {
    %c0_i32 = arith.constant 0 : i32
    %c0_i32_0 = arith.constant 0 : i32
    %c0_i32_1 = arith.constant 0 : i32
    return %c0_i32, %c0_i32_0 : i32, i32
  }
  func.func @transform_7(%arg0: i32) -> (i32, i32) {
    %c0_i32 = arith.constant 0 : i32
    %c0_i32_0 = arith.constant 0 : i32
    %c0_i32_1 = arith.constant 0 : i32
    return %c0_i32, %c0_i32_0 : i32, i32
  }
  func.func @transform_8(%arg0: i32) -> (i32, i32) {
    %c0_i32 = arith.constant 0 : i32
    %c0_i32_0 = arith.constant 0 : i32
    %c0_i32_1 = arith.constant 0 : i32
    return %c0_i32, %c0_i32_0 : i32, i32
  }
  func.func @transform_9(%arg0: i32) -> (i32, i32) {
    %c0_i32 = arith.constant 0 : i32
    %c0_i32_0 = arith.constant 0 : i32
    %c0_i32_1 = arith.constant 0 : i32
    return %c0_i32, %c0_i32_0 : i32, i32
  }
  func.func @transform_10(%arg0: i32) -> (i32, i32) {
    %c0_i32 = arith.constant 0 : i32
    %c0_i32_0 = arith.constant 0 : i32
    %c0_i32_1 = arith.constant 0 : i32
    return %c0_i32, %c0_i32_0 : i32, i32
  }
  func.func @transform_11(%arg0: i32) -> (i32, i32) {
    %c0_i32 = arith.constant 0 : i32
    %c0_i32_0 = arith.constant 0 : i32
    %c0_i32_1 = arith.constant 0 : i32
    return %c0_i32, %c0_i32_0 : i32, i32
  }
  func.func @transform_12(%arg0: i32) -> (i32, i32) {
    %c0_i32 = arith.constant 0 : i32
    %c0_i32_0 = arith.constant 0 : i32
    %c0_i32_1 = arith.constant 0 : i32
    return %c0_i32, %c0_i32_0 : i32, i32
  }
  func.func @transform_13(%arg0: i32) -> (i32, i32) {
    %c0_i32 = arith.constant 0 : i32
    %c0_i32_0 = arith.constant 0 : i32
    %c0_i32_1 = arith.constant 0 : i32
    return %c0_i32, %c0_i32_0 : i32, i32
  }
  func.func @transform_14(%arg0: i32) -> (i32, i32) {
    %c0_i32 = arith.constant 0 : i32
    %c0_i32_0 = arith.constant 0 : i32
    return %arg0, %c0_i32 : i32, i32
  }
}

</mosaic_0001>

<llo_original>
// kernel: tpu_custom_call.1
$region0: #{tpu_custom_call.1}
  #allocation0 [shape = 'u32[]', space=smem, size = 0x4, offset = 0x4, fixed_abs, tag = 'smem constant byte address 0x4 - core index']
  #allocation1 [shape = 'u32[144,128]{1,0:T(1,128)}', space=vmem, size = 0x12000, scoped, tag = 'internal scratch']
  #allocation2 [shape = 'f32[1]{0:T(128)S(6)}', space=smem, size = 0x200, scoped, tag = 'scoped memory for tpu_custom_call.1']
  %s0 = inlined_call_operand.hbm [shape: bf16[16,32], index: 0, kind: input, shape index: {}]
  %s1 = inlined_call_operand.<no memory space> [shape: f32[1], index: 1, kind: input, shape index: {}]
  %s2 = inlined_call_operand.vmem [shape: bf16[32,64], index: 2, kind: input, shape index: {}]
  %s3 = inlined_call_operand.vmem [shape: f32[1,64], index: 3, kind: input, shape index: {}]
  %s4 = inlined_call_operand.vmem [shape: bf16[32,32], index: 4, kind: input, shape index: {}]
  %s5 = inlined_call_operand.vmem [shape: f32[1,32], index: 5, kind: input, shape index: {}]
  %s6 = inlined_call_operand.vmem [shape: f32[1,32], index: 6, kind: input, shape index: {}]
  %s7 = inlined_call_operand.vmem [shape: f32[1,32], index: 7, kind: input, shape index: {}]
  %s8 = inlined_call_operand.vmem [shape: bf16[32,64], index: 8, kind: input, shape index: {}]
  %s9 = inlined_call_operand.vmem [shape: f32[1,64], index: 9, kind: input, shape index: {}]
  %s10 = inlined_call_operand.vmem [shape: bf16[64,32], index: 10, kind: input, shape index: {}]
  %s11 = inlined_call_operand.vmem [shape: f32[1,32], index: 11, kind: input, shape index: {}]
  %s12 = inlined_call_operand.vmem [shape: f32[1,32], index: 12, kind: input, shape index: {}]
  %s13 = inlined_call_operand.vmem [shape: f32[1,32], index: 13, kind: input, shape index: {}]
  %s14 = inlined_call_operand.hbm [shape: f32[16,32], index: 14, kind: output, shape index: {}]
  %s15 = sld [smem:[#allocation0]]
  $region93: #{tpu_custom_call.1} parent=0
    _
  %s17 = ssub.s32 1, %s15
  %s18 = scalar_select 0, %s17, %s15
  %19 = sst [smem:[#allocation2]] %s1
  $region1: #{tpu_custom_call.1} parent=0
    #allocation3 [shape = 'u8[4096]{0}', space=vmem, size = 0x1000, scoped, tag = 'input window, operand 0']
    #allocation4 [shape = 's32[2]{0}', space=sflag, size = 0x8, scoped, tag = 'scoped memory for tpu_custom_call.1']
    #allocation5 [shape = 's32[2]{0}', space=sflag, size = 0x8, scoped, tag = 'scoped memory for tpu_custom_call.1']
    #allocation6 [shape = 'u8[8192]{0}', space=vmem, size = 0x2000, scoped, tag = 'output window, operand 0']
    %20 = vsyncpa [#allocation4], 0
    %s21 = scalar_lea.sflag [#allocation4], 1
    %22 = vsyncpa %s21, 0
    %23 = vsyncpa [#allocation5], 0
    %s24 = scalar_lea.sflag [#allocation5], 1
    %25 = vsyncpa %s24, 0
    loop: start=0, step=1, limit=4
    $region2: #{tpu_custom_call.1} parent=1 // loop_pre_header
      _
    $region3: #{tpu_custom_call.1} parent=1 // loop_header
      %s27 = sphi 0, %s31
      %p28 = scmp.ge.s32.totalorder %s27, 4
      %s37 = sphi 0, %s39
      %s40 = sphi 0, %s37
      %s41 = sphi 0, %s40
      %s57 = sphi 0, %s41
      %s61 = sphi 0, %s61
      %s63 = sphi 0, %s61
      %s64 = sphi 0, %s63
      %s78 = sphi 0, %s64
      %s82 = sphi 0, %s82
      %s84 = sphi 0, %s82
      %s85 = sphi 0, %s84
      %s99 = sphi 0, %s85
      %s103 = sphi 0, %s103
      %s105 = sphi 0, %s103
      %s106 = sphi 0, %s105
      %s120 = sphi 0, %s106
      %s124 = sphi 0, %s124
      %s126 = sphi 0, %s124
      %s127 = sphi 0, %s126
      %s141 = sphi 0, %s127
      %s145 = sphi 0, %s145
      %s147 = sphi 0, %s145
      %s148 = sphi 0, %s147
      %s162 = sphi 0, %s148
      %s166 = sphi 0, %s166
      %s168 = sphi 0, %s166
      %s169 = sphi 0, %s168
      %s183 = sphi 0, %s169
      %s187 = sphi 0, %s187
      %s189 = sphi 0, %s187
      %s190 = sphi 0, %s189
      %s204 = sphi 0, %s190
      %s208 = sphi 0, %s208
      %s210 = sphi 0, %s208
      %s211 = sphi 0, %s210
      %s225 = sphi 0, %s211
      %s229 = sphi 0, %s229
      %s231 = sphi 0, %s229
      %s232 = sphi 0, %s231
      %s246 = sphi 0, %s232
      %s250 = sphi 0, %s250
      %s252 = sphi 0, %s250
      %s253 = sphi 0, %s252
      %s267 = sphi 0, %s253
      %s271 = sphi 0, %s271
      %s273 = sphi 0, %s271
      %s274 = sphi 0, %s273
      %s288 = sphi 0, %s274
      %s292 = sphi 0, %s292
      %s294 = sphi 0, %s292
      %s295 = sphi 0, %s294
      %s309 = sphi 0, %s295
      %s313 = sphi 0, %s313
      %s315 = sphi 0, %s313
      %s316 = sphi 0, %s315
      %s330 = sphi 0, %s316
      %s336 = sphi 0, %s338
      %s339 = sphi 0, %s336
      %s340 = sphi 0, %s339
      %s356 = sphi 0, %s340
    $region4: #{tpu_custom_call.1} parent=1 // loop_header_branch
      %30 = sbr.rel (%p28) target = $region8
    $region5: #{tpu_custom_call.1} parent=1 // loop_body
      %s32 = ssub.s32 %s27, 1
      %s33 = ssub.s32 %s27, 2
      %s34 = sadd.s32 %s27, 1
      %s35 = ssub.s32 %s27, %s34
      %p36 = scmp.eq.s32.totalorder %s35, 0
      %s38 = sadd.s32 %s37, 1
      %s39 = scalar_select %p36, %s37, %s38
      %p42 = pneg %p36
      %p43 = scmp.eq.s32.totalorder %s27, 1
      %p44 = por %p42, %p43
      %p45 = scmp.ne.s32.totalorder %s37, %s40
      %p46 = scmp.eq.s32.totalorder %s27, 0
      %p47 = por %p45, %p46
      %p48 = scmp.ne.s32.totalorder %s37, %s40
      %p49 = scmp.eq.s32.totalorder %s32, 1
      %p50 = por %p48, %p49
      %p51 = scmp.ne.s32.totalorder %s40, %s41
      %p52 = scmp.eq.s32.totalorder %s32, 0
      %p53 = por %p51, %p52
      %p54 = scmp.ne.s32.totalorder %s40, %s41
      %p55 = scmp.eq.s32.totalorder %s33, 1
      %p56 = por %p54, %p55
      %p58 = scmp.ne.s32.totalorder %s41, %s57
      %p59 = scmp.eq.s32.totalorder %s33, 0
      %p60 = por %p58, %p59
      %s62 = sadd.s32 %s61, 1
      %p65 = scmp.eq.s32.totalorder %s27, 1
      %p66 = scmp.ne.s32.totalorder %s61, %s63
      %p67 = scmp.eq.s32.totalorder %s27, 0
      %p68 = por %p66, %p67
      %p69 = scmp.ne.s32.totalorder %s61, %s63
      %p70 = scmp.eq.s32.totalorder %s32, 1
      %p71 = por %p69, %p70
      %p72 = scmp.ne.s32.totalorder %s63, %s64
      %p73 = scmp.eq.s32.totalorder %s32, 0
      %p74 = por %p72, %p73
      %p75 = scmp.ne.s32.totalorder %s63, %s64
      %p76 = scmp.eq.s32.totalorder %s33, 1
      %p77 = por %p75, %p76
      %p79 = scmp.ne.s32.totalorder %s64, %s78
      %p80 = scmp.eq.s32.totalorder %s33, 0
      %p81 = por %p79, %p80
      %s83 = sadd.s32 %s82, 1
      %p86 = scmp.eq.s32.totalorder %s27, 1
      %p87 = scmp.ne.s32.totalorder %s82, %s84
      %p88 = scmp.eq.s32.totalorder %s27, 0
      %p89 = por %p87, %p88
      %p90 = scmp.ne.s32.totalorder %s82, %s84
      %p91 = scmp.eq.s32.totalorder %s32, 1
      %p92 = por %p90, %p91
      %p93 = scmp.ne.s32.totalorder %s84, %s85
      %p94 = scmp.eq.s32.totalorder %s32, 0
      %p95 = por %p93, %p94
      %p96 = scmp.ne.s32.totalorder %s84, %s85
      %p97 = scmp.eq.s32.totalorder %s33, 1
      %p98 = por %p96, %p97
      %p100 = scmp.ne.s32.totalorder %s85, %s99
      %p101 = scmp.eq.s32.totalorder %s33, 0
      %p102 = por %p100, %p101
      %s104 = sadd.s32 %s103, 1
      %p107 = scmp.eq.s32.totalorder %s27, 1
      %p108 = scmp.ne.s32.totalorder %s103, %s105
      %p109 = scmp.eq.s32.totalorder %s27, 0
      %p110 = por %p108, %p109
      %p111 = scmp.ne.s32.totalorder %s103, %s105
      %p112 = scmp.eq.s32.totalorder %s32, 1
      %p113 = por %p111, %p112
      %p114 = scmp.ne.s32.totalorder %s105, %s106
      %p115 = scmp.eq.s32.totalorder %s32, 0
      %p116 = por %p114, %p115
      %p117 = scmp.ne.s32.totalorder %s105, %s106
      %p118 = scmp.eq.s32.totalorder %s33, 1
      %p119 = por %p117, %p118
      %p121 = scmp.ne.s32.totalorder %s106, %s120
      %p122 = scmp.eq.s32.totalorder %s33, 0
      %p123 = por %p121, %p122
      %s125 = sadd.s32 %s124, 1
      %p128 = scmp.eq.s32.totalorder %s27, 1
      %p129 = scmp.ne.s32.totalorder %s124, %s126
      %p130 = scmp.eq.s32.totalorder %s27, 0
      %p131 = por %p129, %p130
      %p132 = scmp.ne.s32.totalorder %s124, %s126
      %p133 = scmp.eq.s32.totalorder %s32, 1
      %p134 = por %p132, %p133
      %p135 = scmp.ne.s32.totalorder %s126, %s127
      %p136 = scmp.eq.s32.totalorder %s32, 0
      %p137 = por %p135, %p136
      %p138 = scmp.ne.s32.totalorder %s126, %s127
      %p139 = scmp.eq.s32.totalorder %s33, 1
      %p140 = por %p138, %p139
      %p142 = scmp.ne.s32.totalorder %s127, %s141
      %p143 = scmp.eq.s32.totalorder %s33, 0
      %p144 = por %p142, %p143
      %s146 = sadd.s32 %s145, 1
      %p149 = scmp.eq.s32.totalorder %s27, 1
      %p150 = scmp.ne.s32.totalorder %s145, %s147
      %p151 = scmp.eq.s32.totalorder %s27, 0
      %p152 = por %p150, %p151
      %p153 = scmp.ne.s32.totalorder %s145, %s147
      %p154 = scmp.eq.s32.totalorder %s32, 1
      %p155 = por %p153, %p154
      %p156 = scmp.ne.s32.totalorder %s147, %s148
      %p157 = scmp.eq.s32.totalorder %s32, 0
      %p158 = por %p156, %p157
      %p159 = scmp.ne.s32.totalorder %s147, %s148
      %p160 = scmp.eq.s32.totalorder %s33, 1
      %p161 = por %p159, %p160
      %p163 = scmp.ne.s32.totalorder %s148, %s162
      %p164 = scmp.eq.s32.totalorder %s33, 0
      %p165 = por %p163, %p164
      %s167 = sadd.s32 %s166, 1
      %p170 = scmp.eq.s32.totalorder %s27, 1
      %p171 = scmp.ne.s32.totalorder %s166, %s168
      %p172 = scmp.eq.s32.totalorder %s27, 0
      %p173 = por %p171, %p172
      %p174 = scmp.ne.s32.totalorder %s166, %s168
      %p175 = scmp.eq.s32.totalorder %s32, 1
      %p176 = por %p174, %p175
      %p177 = scmp.ne.s32.totalorder %s168, %s169
      %p178 = scmp.eq.s32.totalorder %s32, 0
      %p179 = por %p177, %p178
      %p180 = scmp.ne.s32.totalorder %s168, %s169
      %p181 = scmp.eq.s32.totalorder %s33, 1
      %p182 = por %p180, %p181
      %p184 = scmp.ne.s32.totalorder %s169, %s183
      %p185 = scmp.eq.s32.totalorder %s33, 0
      %p186 = por %p184, %p185
      %s188 = sadd.s32 %s187, 1
      %p191 = scmp.eq.s32.totalorder %s27, 1
      %p192 = scmp.ne.s32.totalorder %s187, %s189
      %p193 = scmp.eq.s32.totalorder %s27, 0
      %p194 = por %p192, %p193
      %p195 = scmp.ne.s32.totalorder %s187, %s189
      %p196 = scmp.eq.s32.totalorder %s32, 1
      %p197 = por %p195, %p196
      %p198 = scmp.ne.s32.totalorder %s189, %s190
      %p199 = scmp.eq.s32.totalorder %s32, 0
      %p200 = por %p198, %p199
      %p201 = scmp.ne.s32.totalorder %s189, %s190
      %p202 = scmp.eq.s32.totalorder %s33, 1
      %p203 = por %p201, %p202
      %p205 = scmp.ne.s32.totalorder %s190, %s204
      %p206 = scmp.eq.s32.totalorder %s33, 0
      %p207 = por %p205, %p206
      %s209 = sadd.s32 %s208, 1
      %p212 = scmp.eq.s32.totalorder %s27, 1
      %p213 = scmp.ne.s32.totalorder %s208, %s210
      %p214 = scmp.eq.s32.totalorder %s27, 0
      %p215 = por %p213, %p214
      %p216 = scmp.ne.s32.totalorder %s208, %s210
      %p217 = scmp.eq.s32.totalorder %s32, 1
      %p218 = por %p216, %p217
      %p219 = scmp.ne.s32.totalorder %s210, %s211
      %p220 = scmp.eq.s32.totalorder %s32, 0
      %p221 = por %p219, %p220
      %p222 = scmp.ne.s32.totalorder %s210, %s211
      %p223 = scmp.eq.s32.totalorder %s33, 1
      %p224 = por %p222, %p223
      %p226 = scmp.ne.s32.totalorder %s211, %s225
      %p227 = scmp.eq.s32.totalorder %s33, 0
      %p228 = por %p226, %p227
      %s230 = sadd.s32 %s229, 1
      %p233 = scmp.eq.s32.totalorder %s27, 1
      %p234 = scmp.ne.s32.totalorder %s229, %s231
      %p235 = scmp.eq.s32.totalorder %s27, 0
      %p236 = por %p234, %p235
      %p237 = scmp.ne.s32.totalorder %s229, %s231
      %p238 = scmp.eq.s32.totalorder %s32, 1
      %p239 = por %p237, %p238
      %p240 = scmp.ne.s32.totalorder %s231, %s232
      %p241 = scmp.eq.s32.totalorder %s32, 0
      %p242 = por %p240, %p241
      %p243 = scmp.ne.s32.totalorder %s231, %s232
      %p244 = scmp.eq.s32.totalorder %s33, 1
      %p245 = por %p243, %p244
      %p247 = scmp.ne.s32.totalorder %s232, %s246
      %p248 = scmp.eq.s32.totalorder %s33, 0
      %p249 = por %p247, %p248
      %s251 = sadd.s32 %s250, 1
      %p254 = scmp.eq.s32.totalorder %s27, 1
      %p255 = scmp.ne.s32.totalorder %s250, %s252
      %p256 = scmp.eq.s32.totalorder %s27, 0
      %p257 = por %p255, %p256
      %p258 = scmp.ne.s32.totalorder %s250, %s252
      %p259 = scmp.eq.s32.totalorder %s32, 1
      %p260 = por %p258, %p259
      %p261 = scmp.ne.s32.totalorder %s252, %s253
      %p262 = scmp.eq.s32.totalorder %s32, 0
      %p263 = por %p261, %p262
      %p264 = scmp.ne.s32.totalorder %s252, %s253
      %p265 = scmp.eq.s32.totalorder %s33, 1
      %p266 = por %p264, %p265
      %p268 = scmp.ne.s32.totalorder %s253, %s267
      %p269 = scmp.eq.s32.totalorder %s33, 0
      %p270 = por %p268, %p269
      %s272 = sadd.s32 %s271, 1
      %p275 = scmp.eq.s32.totalorder %s27, 1
      %p276 = scmp.ne.s32.totalorder %s271, %s273
      %p277 = scmp.eq.s32.totalorder %s27, 0
      %p278 = por %p276, %p277
      %p279 = scmp.ne.s32.totalorder %s271, %s273
      %p280 = scmp.eq.s32.totalorder %s32, 1
      %p281 = por %p279, %p280
      %p282 = scmp.ne.s32.totalorder %s273, %s274
      %p283 = scmp.eq.s32.totalorder %s32, 0
      %p284 = por %p282, %p283
      %p285 = scmp.ne.s32.totalorder %s273, %s274
      %p286 = scmp.eq.s32.totalorder %s33, 1
      %p287 = por %p285, %p286
      %p289 = scmp.ne.s32.totalorder %s274, %s288
      %p290 = scmp.eq.s32.totalorder %s33, 0
      %p291 = por %p289, %p290
      %s293 = sadd.s32 %s292, 1
      %p296 = scmp.eq.s32.totalorder %s27, 1
      %p297 = scmp.ne.s32.totalorder %s292, %s294
      %p298 = scmp.eq.s32.totalorder %s27, 0
      %p299 = por %p297, %p298
      %p300 = scmp.ne.s32.totalorder %s292, %s294
      %p301 = scmp.eq.s32.totalorder %s32, 1
      %p302 = por %p300, %p301
      %p303 = scmp.ne.s32.totalorder %s294, %s295
      %p304 = scmp.eq.s32.totalorder %s32, 0
      %p305 = por %p303, %p304
      %p306 = scmp.ne.s32.totalorder %s294, %s295
      %p307 = scmp.eq.s32.totalorder %s33, 1
      %p308 = por %p306, %p307
      %p310 = scmp.ne.s32.totalorder %s295, %s309
      %p311 = scmp.eq.s32.totalorder %s33, 0
      %p312 = por %p310, %p311
      %s314 = sadd.s32 %s313, 1
      %p317 = scmp.eq.s32.totalorder %s27, 1
      %p318 = scmp.ne.s32.totalorder %s313, %s315
      %p319 = scmp.eq.s32.totalorder %s27, 0
      %p320 = por %p318, %p319
      %p321 = scmp.ne.s32.totalorder %s313, %s315
      %p322 = scmp.eq.s32.totalorder %s32, 1
      %p323 = por %p321, %p322
      %p324 = scmp.ne.s32.totalorder %s315, %s316
      %p325 = scmp.eq.s32.totalorder %s32, 0
      %p326 = por %p324, %p325
      %p327 = scmp.ne.s32.totalorder %s315, %s316
      %p328 = scmp.eq.s32.totalorder %s33, 1
      %p329 = por %p327, %p328
      %p331 = scmp.ne.s32.totalorder %s316, %s330
      %p332 = scmp.eq.s32.totalorder %s33, 0
      %p333 = por %p331, %p332
      %s334 = ssub.s32 %s27, %s34
      %p335 = scmp.eq.s32.totalorder %s334, 0
      %s337 = sadd.s32 %s336, 1
      %s338 = scalar_select %p335, %s336, %s337
      %p341 = pneg %p335
      %p342 = scmp.eq.s32.totalorder %s27, 1
      %p343 = por %p341, %p342
      %p344 = scmp.ne.s32.totalorder %s336, %s339
      %p345 = scmp.eq.s32.totalorder %s27, 0
      %p346 = por %p344, %p345
      %p347 = scmp.ne.s32.totalorder %s336, %s339
      %p348 = scmp.eq.s32.totalorder %s32, 1
      %p349 = por %p347, %p348
      %p350 = scmp.ne.s32.totalorder %s339, %s340
      %p351 = scmp.eq.s32.totalorder %s32, 0
      %p352 = por %p350, %p351
      %p353 = scmp.ne.s32.totalorder %s339, %s340
      %p354 = scmp.eq.s32.totalorder %s33, 1
      %p355 = por %p353, %p354
      %p357 = scmp.ne.s32.totalorder %s340, %s356
      %p358 = scmp.eq.s32.totalorder %s33, 0
      %p359 = por %p357, %p358
      %p360 = scmp.le.s32.totalorder 1, %s27
      %p361 = scmp.lt.s32.totalorder %s27, 3
      %p362 = pnand %p360, %p361
      %p363 = pneg %p362
      // Predicated region
      $region9: #{tpu_custom_call.1} parent=5 // pred_check
        _
      $region10: #{tpu_custom_call.1} parent=5 // pred_check_branch
        %365 = sbr.rel (%p362) target = $region12
      $region11: #{tpu_custom_call.1} parent=5 // pred_region
        %s366 = ssub.s32 %s27, 1
        // Predicated region
        $region13: #{tpu_custom_call.1} parent=11 // pred_check
          %p367 = pneg %p74
        $region14: #{tpu_custom_call.1} parent=11 // pred_check_branch
          %369 = sbr.rel (%p367) target = $region16
        $region15: #{tpu_custom_call.1} parent=11 // pred_region
          _
        $region16: #{tpu_custom_call.1} parent=11 // pred_fallthru
          _
        // Predicated region
        $region17: #{tpu_custom_call.1} parent=11 // pred_check
          %p370 = pneg %p95
        $region18: #{tpu_custom_call.1} parent=11 // pred_check_branch
          %372 = sbr.rel (%p370) target = $region20
        $region19: #{tpu_custom_call.1} parent=11 // pred_region
          _
        $region20: #{tpu_custom_call.1} parent=11 // pred_fallthru
          _
        // Predicated region
        $region21: #{tpu_custom_call.1} parent=11 // pred_check
          %p373 = pneg %p116
        $region22: #{tpu_custom_call.1} parent=11 // pred_check_branch
          %375 = sbr.rel (%p373) target = $region24
        $region23: #{tpu_custom_call.1} parent=11 // pred_region
          _
        $region24: #{tpu_custom_call.1} parent=11 // pred_fallthru
          _
        // Predicated region
        $region25: #{tpu_custom_call.1} parent=11 // pred_check
          %p376 = pneg %p137
        $region26: #{tpu_custom_call.1} parent=11 // pred_check_branch
          %378 = sbr.rel (%p376) target = $region28
        $region27: #{tpu_custom_call.1} parent=11 // pred_region
          _
        $region28: #{tpu_custom_call.1} parent=11 // pred_fallthru
          _
        // Predicated region
        $region29: #{tpu_custom_call.1} parent=11 // pred_check
          %p379 = pneg %p158
        $region30: #{tpu_custom_call.1} parent=11 // pred_check_branch
          %381 = sbr.rel (%p379) target = $region32
        $region31: #{tpu_custom_call.1} parent=11 // pred_region
          _
        $region32: #{tpu_custom_call.1} parent=11 // pred_fallthru
          _
        // Predicated region
        $region33: #{tpu_custom_call.1} parent=11 // pred_check
          %p382 = pneg %p179
        $region34: #{tpu_custom_call.1} parent=11 // pred_check_branch
          %384 = sbr.rel (%p382) target = $region36
        $region35: #{tpu_custom_call.1} parent=11 // pred_region
          _
        $region36: #{tpu_custom_call.1} parent=11 // pred_fallthru
          _
        // Predicated region
        $region37: #{tpu_custom_call.1} parent=11 // pred_check
          %p385 = pneg %p200
        $region38: #{tpu_custom_call.1} parent=11 // pred_check_branch
          %387 = sbr.rel (%p385) target = $region40
        $region39: #{tpu_custom_call.1} parent=11 // pred_region
          _
        $region40: #{tpu_custom_call.1} parent=11 // pred_fallthru
          _
        // Predicated region
        $region41: #{tpu_custom_call.1} parent=11 // pred_check
          %p388 = pneg %p221
        $region42: #{tpu_custom_call.1} parent=11 // pred_check_branch
          %390 = sbr.rel (%p388) target = $region44
        $region43: #{tpu_custom_call.1} parent=11 // pred_region
          _
        $region44: #{tpu_custom_call.1} parent=11 // pred_fallthru
          _
        // Predicated region
        $region45: #{tpu_custom_call.1} parent=11 // pred_check
          %p391 = pneg %p242
        $region46: #{tpu_custom_call.1} parent=11 // pred_check_branch
          %393 = sbr.rel (%p391) target = $region48
        $region47: #{tpu_custom_call.1} parent=11 // pred_region
          _
        $region48: #{tpu_custom_call.1} parent=11 // pred_fallthru
          _
        // Predicated region
        $region49: #{tpu_custom_call.1} parent=11 // pred_check
          %p394 = pneg %p263
        $region50: #{tpu_custom_call.1} parent=11 // pred_check_branch
          %396 = sbr.rel (%p394) target = $region52
        $region51: #{tpu_custom_call.1} parent=11 // pred_region
          _
        $region52: #{tpu_custom_call.1} parent=11 // pred_fallthru
          _
        // Predicated region
        $region53: #{tpu_custom_call.1} parent=11 // pred_check
          %p397 = pneg %p284
        $region54: #{tpu_custom_call.1} parent=11 // pred_check_branch
          %399 = sbr.rel (%p397) target = $region56
        $region55: #{tpu_custom_call.1} parent=11 // pred_region
          _
        $region56: #{tpu_custom_call.1} parent=11 // pred_fallthru
          _
        // Predicated region
        $region57: #{tpu_custom_call.1} parent=11 // pred_check
          %p400 = pneg %p305
        $region58: #{tpu_custom_call.1} parent=11 // pred_check_branch
          %402 = sbr.rel (%p400) target = $region60
        $region59: #{tpu_custom_call.1} parent=11 // pred_region
          _
        $region60: #{tpu_custom_call.1} parent=11 // pred_fallthru
          _
        // Predicated region
        $region61: #{tpu_custom_call.1} parent=11 // pred_check
          %p403 = pneg %p326
        $region62: #{tpu_custom_call.1} parent=11 // pred_check_branch
          %405 = sbr.rel (%p403) target = $region64
        $region63: #{tpu_custom_call.1} parent=11 // pred_region
          _
        $region64: #{tpu_custom_call.1} parent=11 // pred_fallthru
          _
      $region12: #{tpu_custom_call.1} parent=5 // pred_fallthru
        _
      %p406 = scmp.lt.s32.totalorder %s27, 2
      // Predicated region
      $region65: #{tpu_custom_call.1} parent=5 // pred_check
        %p407 = pneg %p406
      $region66: #{tpu_custom_call.1} parent=5 // pred_check_branch
        %409 = sbr.rel (%p407) target = $region68
      $region67: #{tpu_custom_call.1} parent=5 // pred_region
        // Predicated region
        $region69: #{tpu_custom_call.1} parent=67 // pred_check
          %p410 = pneg %p47
        $region70: #{tpu_custom_call.1} parent=67 // pred_check_branch
          %412 = sbr.rel (%p410) target = $region72
        $region71: #{tpu_custom_call.1} parent=67 // pred_region
          %s413 = sand.u32 %s37, 1
          %s414 = scalar_lea.sflag [#allocation4], %s413
          %s415 = sand.u32 %s37, 1
          %s416 = smul.addr %s415, 4
          %s417 = scalar_lea.vmem [#allocation3], %s416
          %s419 = ssub.s32 64, 64
          %420 = vsyncadd %s414, %s419
          %s421 = smul.addr %s27, 64
          %s422 = scalar_lea.hbm %s0, %s421
          %s424 = sshll.u32 %s417, 4
          %s425 = int_to_ptr.vmem [resolvable:$true] %s424
          %427 = dma.hbm_to_vmem [thread:$0]  %s422, 64, %s425, %s414
        $region72: #{tpu_custom_call.1} parent=67 // pred_fallthru
          _
      $region68: #{tpu_custom_call.1} parent=5 // pred_fallthru
        _
      %p428 = scmp.le.s32.totalorder 1, %s27
      %p429 = scmp.lt.s32.totalorder %s27, 3
      %p430 = pnand %p428, %p429
      %p431 = pneg %p430
      // Predicated region
      $region73: #{tpu_custom_call.1} parent=5 // pred_check
        _
      $region74: #{tpu_custom_call.1} parent=5 // pred_check_branch
        %433 = sbr.rel (%p430) target = $region76
      $region75: #{tpu_custom_call.1} parent=5 // pred_region
        %s434 = ssub.s32 %s27, 1
        %s435 = sand.u32 %s40, 1
        %s436 = scalar_lea.sflag [#allocation4], %s435
        %s437 = sand.u32 %s40, 1
        %s438 = smul.addr %s437, 4
        %s439 = scalar_lea.vmem [#allocation3], %s438
        // Predicated region
        $region77: #{tpu_custom_call.1} parent=75 // pred_check
          %p440 = pneg %p53
        $region78: #{tpu_custom_call.1} parent=75 // pred_check_branch
          %442 = sbr.rel (%p440) target = $region80
        $region79: #{tpu_custom_call.1} parent=75 // pred_region
          %443 = dma.done %s436, 64
        $region80: #{tpu_custom_call.1} parent=75 // pred_fallthru
          _
        %s444 = sand.u32 %s40, 1
        %s445 = scalar_lea.sflag [#allocation4], %s444
        %s446 = sand.u32 %s40, 1
        %s447 = smul.addr %s446, 4
        %s448 = scalar_lea.vmem [#allocation3], %s447
        %p449 = pneg %p53
        %p450 = pneg %p50
        %p451 = pneg %p74
        %p452 = pneg %p71
        %p453 = pneg %p95
        %p454 = pneg %p92
        %p455 = pneg %p116
        %p456 = pneg %p113
        %p457 = pneg %p137
        %p458 = pneg %p134
        %p459 = pneg %p158
        %p460 = pneg %p155
        %p461 = pneg %p179
        %p462 = pneg %p176
        %p463 = pneg %p200
        %p464 = pneg %p197
        %p465 = pneg %p221
        %p466 = pneg %p218
        %p467 = pneg %p242
        %p468 = pneg %p239
        %p469 = pneg %p263
        %p470 = pneg %p260
        %p471 = pneg %p284
        %p472 = pneg %p281
        %p473 = pneg %p305
        %p474 = pneg %p302
        %p475 = pneg %p326
        %p476 = pneg %p323
        %p477 = pneg %p352
        %p478 = pneg %p349
        %s479 = sand.u32 %s339, 1
        %s480 = scalar_lea.sflag [#allocation5], %s479
        %s481 = sand.u32 %s339, 1
        %s482 = smul.addr %s481, 8
        %s483 = scalar_lea.vmem [#allocation6], %s482
        %v485 = vld [vmem:[%s439] sm:$0xf]
        %v486 = vld [vmem:[%s2] sm:$0xf]
        %v487 = vld [vmem:[%s2 + $0x4] sm:$0xf]
        %v488 = vld [vmem:[%s2 + $0x8] sm:$0xf]
        %v489 = vld [vmem:[%s2 + $0xc] sm:$0xf]
        %v490 = vld [vmem:[%s3] sm:$0x1]
        %v492 = vlaneseq
        %v493 = vshrl.u32 %v492, 7
        %v494 = vsub.s32 0, %v493
        %v495 = vrot.slane %v490, %v494
        %v501 = vunpack.c.l.b16 %v486
        %v502 = vunpack.c.l.b16 %v487
        %v503 = vunpack.c.l.b16 %v488
        %v504 = vunpack.c.l.b16 %v489
        %v505 = vpack.c.b16 %v502, %v501
        %v506 = vpack.c.b16 %v504, %v503
        %vm509 = vcmask 261120
        %v511 = vsel %vm509, %v485, 0
        %513 = vmatprep.subr.bf16.mxu0 0
        %514 = vmatpush1.bf16.msra.mxu0 %v505
        %515 = vmatprep.subr.bf16.mxu0 0
        %516 = vmatpush1.bf16.msra.mxu0 %v506
        %517 = vmatprep.subr.bf16.mxu0 0
        %518 = vmatpush1.bf16.msra.mxu0 0
        %519 = vmatprep.subr.bf16.mxu0 0
        %520 = vmatpush1.bf16.msra.mxu0 0
        %521 = vmatprep.subr.bf16.mxu0 0
        %522 = vmatpush1.bf16.msra.mxu0 0
        %523 = vmatprep.subr.bf16.mxu0 0
        %524 = vmatpush1.bf16.msra.mxu0 0
        %525 = vmatprep.subr.bf16.mxu0 0
        %526 = vmatpush1.bf16.msra.mxu0 0
        %527 = vmatprep.subr.bf16.mxu0 0
        %528 = vmatpush1.bf16.msra.mxu0 0
        %529 = vmatprep.subr.bf16.mxu0 0
        %530 = vmatpush1.bf16.msra.mxu0 0
        %531 = vmatprep.subr.bf16.mxu0 0
        %532 = vmatpush1.bf16.msra.mxu0 0
        %533 = vmatprep.subr.bf16.mxu0 0
        %534 = vmatpush1.bf16.msra.mxu0 0
        %535 = vmatprep.subr.bf16.mxu0 0
        %536 = vmatpush1.bf16.msra.mxu0 0
        %537 = vmatprep.subr.bf16.mxu0 0
        %538 = vmatpush1.bf16.msra.mxu0 0
        %539 = vmatprep.subr.bf16.mxu0 0
        %540 = vmatpush1.bf16.msra.mxu0 0
        %541 = vmatprep.subr.bf16.mxu0 0
        %542 = vmatpush1.bf16.msra.mxu0 0
        %543 = vmatprep.subr.bf16.mxu0 0
        %544 = vmatpush1.bf16.msra.mxu0 0
        %545 = vmatprep.mubr.bf16.mxu0 0
        %546 = vmatmul.mubr.bf16.gmra.mrb[0].mxu0 %v511
        %v547 = vpop.f32.mrb[0].mxu0
        %v548 = vadd.f32 %v495, %v547
        %v549 = vpop.f32.mrb[0].mxu0
        %v550 = vpop.f32.mrb[0].mxu0
        %v551 = vpop.f32.mrb[0].mxu0
        %552 = vdwg.mxu0
        %s553 = sld [smem:[#allocation2]]
        %s554 = smul.f32 %s553, 2.828427
        %v555 = vstv %s554
        %v556 = vrcp.pop %v555
        %s557 = vtos %v556
        %v558 = vstv %s557
        %v559 = vmul.f32 %v548, %v558
        %v560 = vpack.c.bf16 %v559, %v559
        %v561 = vpack.c.bf16 %v548, %v548
        %v562 = vlaneseq
        %v563 = vshrl.u32 %v562, 7
        %v564 = vlaneseq
        %v565 = vand.u32 %v564, 127
        %vm566 = vcmp.eq.s32.totalorder %v563, %v565
        %v567 = vsel %vm566, -1e+30, 0.0
        %vm568 = vcmask 64512
        %v570 = vsel %vm568, %v560, 0
        %v572 = vsel %vm568, %v485, 0
        %574 = vmatprep.subr.bf16.mxu0 0
        %575 = vmatpush1.bf16.xpose.msra.mxu0 %v572
        %576 = vmatprep.subr.bf16.mxu0 0
        %577 = vmatpush1.bf16.xpose.msra.mxu0 0
        %578 = vmatprep.subr.bf16.mxu0 0
        %579 = vmatpush1.bf16.xpose.msra.mxu0 0
        %580 = vmatprep.subr.bf16.mxu0 0
        %581 = vmatpush1.bf16.xpose.msra.mxu0 0
        %582 = vmatprep.subr.bf16.mxu0 0
        %583 = vmatpush1.bf16.xpose.msra.mxu0 0
        %584 = vmatprep.subr.bf16.mxu0 0
        %585 = vmatpush1.bf16.xpose.msra.mxu0 0
        %586 = vmatprep.subr.bf16.mxu0 0
        %587 = vmatpush1.bf16.xpose.msra.mxu0 0
        %588 = vmatprep.subr.bf16.mxu0 0
        %589 = vmatpush1.bf16.xpose.msra.mxu0 0
        %590 = vmatprep.subr.bf16.mxu0 0
        %591 = vmatpush1.bf16.xpose.msra.mxu0 0
        %592 = vmatprep.subr.bf16.mxu0 0
        %593 = vmatpush1.bf16.xpose.msra.mxu0 0
        %594 = vmatprep.subr.bf16.mxu0 0
        %595 = vmatpush1.bf16.xpose.msra.mxu0 0
        %596 = vmatprep.subr.bf16.mxu0 0
        %597 = vmatpush1.bf16.xpose.msra.mxu0 0
        %598 = vmatprep.subr.bf16.mxu0 0
        %599 = vmatpush1.bf16.xpose.msra.mxu0 0
        %600 = vmatprep.subr.bf16.mxu0 0
        %601 = vmatpush1.bf16.xpose.msra.mxu0 0
        %602 = vmatprep.subr.bf16.mxu0 0
        %603 = vmatpush1.bf16.xpose.msra.mxu0 0
        %604 = vmatprep.subr.bf16.mxu0 0
        %605 = vmatpush1.bf16.xpose.msra.mxu0 0
        %606 = vmatprep.mubr.bf16.mxu0 0
        %607 = vmatmul.mubr.bf16.gmra.mrb[0].mxu0 %v570
        %v608 = vpop.f32.mrb[0].mxu0
        %v609 = vadd.f32 %v567, %v608
        %v610 = vpop.f32.mrb[0].mxu0
        %v611 = vpop.f32.mrb[0].mxu0
        %v612 = vpop.f32.mrb[0].mxu0
        %613 = vdwg.mxu0
        %v614 = vsel %vm568, %v609, -inf
        %615 = vmax.xlane.f32.xlu0 %v614
        %v616 = vpop.xlane.xlu0 %615
        %v617 = vsub.f32 %v609, %v616
        %v618 = vmul.f32 %v617, 1.442695
        %v619 = vpow.pop %v618
        %v620 = vsel %vm568, %v619, 0.0
        %621 = vadd.xlane.f32.xlu0 %v620
        %v622 = vpop.xlane.xlu0 %621
        %v623 = vrcp.pop %v622
        %v624 = vmul.f32 %v619, %v623
        %v625 = vpack.c.bf16 %v624, %v624
        %627 = vrot.lane.b32.xlu0 %v561, 96
        %v628 = vpop.permute.xlu0 %627
        %v630 = vsel %vm568, %v625, 0
        %vm632 = vcmask 1043456
        %v634 = vsel %vm632, %v628, 0
        %636 = vmatprep.subr.bf16.mxu0 0
        %637 = vmatpush1.bf16.msra.mxu0 %v634
        %638 = vmatprep.subr.bf16.mxu0 0
        %639 = vmatpush1.bf16.msra.mxu0 0
        %640 = vmatprep.subr.bf16.mxu0 0
        %641 = vmatpush1.bf16.msra.mxu0 0
        %642 = vmatprep.subr.bf16.mxu0 0
        %643 = vmatpush1.bf16.msra.mxu0 0
        %644 = vmatprep.subr.bf16.mxu0 0
        %645 = vmatpush1.bf16.msra.mxu0 0
        %646 = vmatprep.subr.bf16.mxu0 0
        %647 = vmatpush1.bf16.msra.mxu0 0
        %648 = vmatprep.subr.bf16.mxu0 0
        %649 = vmatpush1.bf16.msra.mxu0 0
        %650 = vmatprep.subr.bf16.mxu0 0
        %651 = vmatpush1.bf16.msra.mxu0 0
        %652 = vmatprep.subr.bf16.mxu0 0
        %653 = vmatpush1.bf16.msra.mxu0 0
        %654 = vmatprep.subr.bf16.mxu0 0
        %655 = vmatpush1.bf16.msra.mxu0 0
        %656 = vmatprep.subr.bf16.mxu0 0
        %657 = vmatpush1.bf16.msra.mxu0 0
        %658 = vmatprep.subr.bf16.mxu0 0
        %659 = vmatpush1.bf16.msra.mxu0 0
        %660 = vmatprep.subr.bf16.mxu0 0
        %661 = vmatpush1.bf16.msra.mxu0 0
        %662 = vmatprep.subr.bf16.mxu0 0
        %663 = vmatpush1.bf16.msra.mxu0 0
        %664 = vmatprep.subr.bf16.mxu0 0
        %665 = vmatpush1.bf16.msra.mxu0 0
        %666 = vmatprep.subr.bf16.mxu0 0
        %667 = vmatpush1.bf16.msra.mxu0 0
        %668 = vmatprep.mubr.bf16.mxu0 0
        %669 = vmatmul.mubr.bf16.gmra.mrb[0].mxu0 %v630
        %v670 = vpop.f32.mrb[0].mxu0
        %v671 = vadd.f32 0.0, %v670
        %v672 = vpop.f32.mrb[0].mxu0
        %v673 = vpop.f32.mrb[0].mxu0
        %v674 = vpop.f32.mrb[0].mxu0
        %675 = vdwg.mxu0
        %v676 = vpack.c.bf16 %v671, %v671
        %v677 = vld [vmem:[%s4] sm:$0xf]
        %679 = vrot.lane.b32.xlu0 %v560, 120
        %v680 = vpop.permute.xlu0 %679
        %v682 = vunpack.c.l.b16 %v485
        %v683 = vpack.c.b16 %v682, %v682
        %684 = vrot.lane.b32.xlu0 %v683, 120
        %v685 = vpop.permute.xlu0 %684
        %v687 = vsel %vm568, %v680, 0
        %v690 = vsel %vm568, %v685, 0
        %692 = vmatprep.subr.bf16.mxu0 0
        %693 = vmatpush1.bf16.xpose.msra.mxu0 %v690
        %694 = vmatprep.subr.bf16.mxu0 0
        %695 = vmatpush1.bf16.xpose.msra.mxu0 0
        %696 = vmatprep.subr.bf16.mxu0 0
        %697 = vmatpush1.bf16.xpose.msra.mxu0 0
        %698 = vmatprep.subr.bf16.mxu0 0
        %699 = vmatpush1.bf16.xpose.msra.mxu0 0
        %700 = vmatprep.subr.bf16.mxu0 0
        %701 = vmatpush1.bf16.xpose.msra.mxu0 0
        %702 = vmatprep.subr.bf16.mxu0 0
        %703 = vmatpush1.bf16.xpose.msra.mxu0 0
        %704 = vmatprep.subr.bf16.mxu0 0
        %705 = vmatpush1.bf16.xpose.msra.mxu0 0
        %706 = vmatprep.subr.bf16.mxu0 0
        %707 = vmatpush1.bf16.xpose.msra.mxu0 0
        %708 = vmatprep.subr.bf16.mxu0 0
        %709 = vmatpush1.bf16.xpose.msra.mxu0 0
        %710 = vmatprep.subr.bf16.mxu0 0
        %711 = vmatpush1.bf16.xpose.msra.mxu0 0
        %712 = vmatprep.subr.bf16.mxu0 0
        %713 = vmatpush1.bf16.xpose.msra.mxu0 0
        %714 = vmatprep.subr.bf16.mxu0 0
        %715 = vmatpush1.bf16.xpose.msra.mxu0 0
        %716 = vmatprep.subr.bf16.mxu0 0
        %717 = vmatpush1.bf16.xpose.msra.mxu0 0
        %718 = vmatprep.subr.bf16.mxu0 0
        %719 = vmatpush1.bf16.xpose.msra.mxu0 0
        %720 = vmatprep.subr.bf16.mxu0 0
        %721 = vmatpush1.bf16.xpose.msra.mxu0 0
        %722 = vmatprep.subr.bf16.mxu0 0
        %723 = vmatpush1.bf16.xpose.msra.mxu0 0
        %724 = vmatprep.mubr.bf16.mxu0 0
        %725 = vmatmul.mubr.bf16.gmra.mrb[0].mxu0 %v687
        %v726 = vpop.f32.mrb[0].mxu0
        %v727 = vadd.f32 %v567, %v726
        %v728 = vpop.f32.mrb[0].mxu0
        %v729 = vpop.f32.mrb[0].mxu0
        %v730 = vpop.f32.mrb[0].mxu0
        %731 = vdwg.mxu0
        %v732 = vsel %vm568, %v727, -inf
        %733 = vmax.xlane.f32.xlu0 %v732
        %v734 = vpop.xlane.xlu0 %733
        %v735 = vsub.f32 %v727, %v734
        %v736 = vmul.f32 %v735, 1.442695
        %v737 = vpow.pop %v736
        %v738 = vsel %vm568, %v737, 0.0
        %739 = vadd.xlane.f32.xlu0 %v738
        %v740 = vpop.xlane.xlu0 %739
        %v741 = vrcp.pop %v740
        %v742 = vmul.f32 %v737, %v741
        %v743 = vpack.c.bf16 %v742, %v742
        %744 = vrot.lane.b32.xlu0 %v561, 88
        %v745 = vpop.permute.xlu0 %744
        %v747 = vsel %vm568, %v743, 0
        %v750 = vsel %vm632, %v745, 0
        %752 = vmatprep.subr.bf16.mxu0 0
        %753 = vmatpush1.bf16.msra.mxu0 %v750
        %754 = vmatprep.subr.bf16.mxu0 0
        %755 = vmatpush1.bf16.msra.mxu0 0
        %756 = vmatprep.subr.bf16.mxu0 0
        %757 = vmatpush1.bf16.msra.mxu0 0
        %758 = vmatprep.subr.bf16.mxu0 0
        %759 = vmatpush1.bf16.msra.mxu0 0
        %760 = vmatprep.subr.bf16.mxu0 0
        %761 = vmatpush1.bf16.msra.mxu0 0
        %762 = vmatprep.subr.bf16.mxu0 0
        %763 = vmatpush1.bf16.msra.mxu0 0
        %764 = vmatprep.subr.bf16.mxu0 0
        %765 = vmatpush1.bf16.msra.mxu0 0
        %766 = vmatprep.subr.bf16.mxu0 0
        %767 = vmatpush1.bf16.msra.mxu0 0
        %768 = vmatprep.subr.bf16.mxu0 0
        %769 = vmatpush1.bf16.msra.mxu0 0
        %770 = vmatprep.subr.bf16.mxu0 0
        %771 = vmatpush1.bf16.msra.mxu0 0
        %772 = vmatprep.subr.bf16.mxu0 0
        %773 = vmatpush1.bf16.msra.mxu0 0
        %774 = vmatprep.subr.bf16.mxu0 0
        %775 = vmatpush1.bf16.msra.mxu0 0
        %776 = vmatprep.subr.bf16.mxu0 0
        %777 = vmatpush1.bf16.msra.mxu0 0
        %778 = vmatprep.subr.bf16.mxu0 0
        %779 = vmatpush1.bf16.msra.mxu0 0
        %780 = vmatprep.subr.bf16.mxu0 0
        %781 = vmatpush1.bf16.msra.mxu0 0
        %782 = vmatprep.subr.bf16.mxu0 0
        %783 = vmatpush1.bf16.msra.mxu0 0
        %784 = vmatprep.mubr.bf16.mxu0 0
        %785 = vmatmul.mubr.bf16.gmra.mrb[0].mxu0 %v747
        %v786 = vpop.f32.mrb[0].mxu0
        %v787 = vadd.f32 0.0, %v786
        %v788 = vpop.f32.mrb[0].mxu0
        %v789 = vpop.f32.mrb[0].mxu0
        %v790 = vpop.f32.mrb[0].mxu0
        %791 = vdwg.mxu0
        %v792 = vpack.c.bf16 %v787, %v787
        %v793 = vld [vmem:[%s4 + $0x4] sm:$0xf]
        %v795 = vsel %vm568, %v792, 0
        %v798 = vsel %vm632, %v793, 0
        %800 = vmatprep.subr.bf16.mxu0 0
        %801 = vmatpush1.bf16.msra.mxu0 %v798
        %802 = vmatprep.subr.bf16.mxu0 0
        %803 = vmatpush1.bf16.msra.mxu0 0
        %804 = vmatprep.subr.bf16.mxu0 0
        %805 = vmatpush1.bf16.msra.mxu0 0
        %806 = vmatprep.subr.bf16.mxu0 0
        %807 = vmatpush1.bf16.msra.mxu0 0
        %808 = vmatprep.subr.bf16.mxu0 0
        %809 = vmatpush1.bf16.msra.mxu0 0
        %810 = vmatprep.subr.bf16.mxu0 0
        %811 = vmatpush1.bf16.msra.mxu0 0
        %812 = vmatprep.subr.bf16.mxu0 0
        %813 = vmatpush1.bf16.msra.mxu0 0
        %814 = vmatprep.subr.bf16.mxu0 0
        %815 = vmatpush1.bf16.msra.mxu0 0
        %816 = vmatprep.subr.bf16.mxu0 0
        %817 = vmatpush1.bf16.msra.mxu0 0
        %818 = vmatprep.subr.bf16.mxu0 0
        %819 = vmatpush1.bf16.msra.mxu0 0
        %820 = vmatprep.subr.bf16.mxu0 0
        %821 = vmatpush1.bf16.msra.mxu0 0
        %822 = vmatprep.subr.bf16.mxu0 0
        %823 = vmatpush1.bf16.msra.mxu0 0
        %824 = vmatprep.subr.bf16.mxu0 0
        %825 = vmatpush1.bf16.msra.mxu0 0
        %826 = vmatprep.subr.bf16.mxu0 0
        %827 = vmatpush1.bf16.msra.mxu0 0
        %828 = vmatprep.subr.bf16.mxu0 0
        %829 = vmatpush1.bf16.msra.mxu0 0
        %830 = vmatprep.subr.bf16.mxu0 0
        %831 = vmatpush1.bf16.msra.mxu0 0
        %832 = vmatprep.mubr.bf16.mxu0 0
        %833 = vmatmul.mubr.bf16.gmra.mrb[0].mxu0 %v795
        %v834 = vpop.f32.mrb[0].mxu0
        %v835 = vadd.f32 0.0, %v834
        %v836 = vpop.f32.mrb[0].mxu0
        %v837 = vpop.f32.mrb[0].mxu0
        %v838 = vpop.f32.mrb[0].mxu0
        %839 = vdwg.mxu0
        %v841 = vsel %vm568, %v676, 0
        %v844 = vsel %vm632, %v677, 0
        %846 = vmatprep.subr.bf16.mxu0 0
        %847 = vmatpush1.bf16.msra.mxu0 %v844
        %848 = vmatprep.subr.bf16.mxu0 0
        %849 = vmatpush1.bf16.msra.mxu0 0
        %850 = vmatprep.subr.bf16.mxu0 0
        %851 = vmatpush1.bf16.msra.mxu0 0
        %852 = vmatprep.subr.bf16.mxu0 0
        %853 = vmatpush1.bf16.msra.mxu0 0
        %854 = vmatprep.subr.bf16.mxu0 0
        %855 = vmatpush1.bf16.msra.mxu0 0
        %856 = vmatprep.subr.bf16.mxu0 0
        %857 = vmatpush1.bf16.msra.mxu0 0
        %858 = vmatprep.subr.bf16.mxu0 0
        %859 = vmatpush1.bf16.msra.mxu0 0
        %860 = vmatprep.subr.bf16.mxu0 0
        %861 = vmatpush1.bf16.msra.mxu0 0
        %862 = vmatprep.subr.bf16.mxu0 0
        %863 = vmatpush1.bf16.msra.mxu0 0
        %864 = vmatprep.subr.bf16.mxu0 0
        %865 = vmatpush1.bf16.msra.mxu0 0
        %866 = vmatprep.subr.bf16.mxu0 0
        %867 = vmatpush1.bf16.msra.mxu0 0
        %868 = vmatprep.subr.bf16.mxu0 0
        %869 = vmatpush1.bf16.msra.mxu0 0
        %870 = vmatprep.subr.bf16.mxu0 0
        %871 = vmatpush1.bf16.msra.mxu0 0
        %872 = vmatprep.subr.bf16.mxu0 0
        %873 = vmatpush1.bf16.msra.mxu0 0
        %874 = vmatprep.subr.bf16.mxu0 0
        %875 = vmatpush1.bf16.msra.mxu0 0
        %876 = vmatprep.subr.bf16.mxu0 0
        %877 = vmatpush1.bf16.msra.mxu0 0
        %878 = vmatprep.mubr.bf16.mxu0 0
        %879 = vmatmul.mubr.bf16.gmra.mrb[0].mxu0 %v841
        %v880 = vpop.f32.mrb[0].mxu0
        %v881 = vadd.f32 %v835, %v880
        %v882 = vpop.f32.mrb[0].mxu0
        %v883 = vpop.f32.mrb[0].mxu0
        %v884 = vpop.f32.mrb[0].mxu0
        %885 = vdwg.mxu0
        %886 = vrot.lane.b32.xlu0 %v560, 112
        %v887 = vpop.permute.xlu0 %886
        %888 = vrot.lane.b32.xlu0 %v683, 112
        %v889 = vpop.permute.xlu0 %888
        %v891 = vsel %vm568, %v887, 0
        %v894 = vsel %vm568, %v889, 0
        %896 = vmatprep.subr.bf16.mxu0 0
        %897 = vmatpush1.bf16.xpose.msra.mxu0 %v894
        %898 = vmatprep.subr.bf16.mxu0 0
        %899 = vmatpush1.bf16.xpose.msra.mxu0 0
        %900 = vmatprep.subr.bf16.mxu0 0
        %901 = vmatpush1.bf16.xpose.msra.mxu0 0
        %902 = vmatprep.subr.bf16.mxu0 0
        %903 = vmatpush1.bf16.xpose.msra.mxu0 0
        %904 = vmatprep.subr.bf16.mxu0 0
        %905 = vmatpush1.bf16.xpose.msra.mxu0 0
        %906 = vmatprep.subr.bf16.mxu0 0
        %907 = vmatpush1.bf16.xpose.msra.mxu0 0
        %908 = vmatprep.subr.bf16.mxu0 0
        %909 = vmatpush1.bf16.xpose.msra.mxu0 0
        %910 = vmatprep.subr.bf16.mxu0 0
        %911 = vmatpush1.bf16.xpose.msra.mxu0 0
        %912 = vmatprep.subr.bf16.mxu0 0
        %913 = vmatpush1.bf16.xpose.msra.mxu0 0
        %914 = vmatprep.subr.bf16.mxu0 0
        %915 = vmatpush1.bf16.xpose.msra.mxu0 0
        %916 = vmatprep.subr.bf16.mxu0 0
        %917 = vmatpush1.bf16.xpose.msra.mxu0 0
        %918 = vmatprep.subr.bf16.mxu0 0
        %919 = vmatpush1.bf16.xpose.msra.mxu0 0
        %920 = vmatprep.subr.bf16.mxu0 0
        %921 = vmatpush1.bf16.xpose.msra.mxu0 0
        %922 = vmatprep.subr.bf16.mxu0 0
        %923 = vmatpush1.bf16.xpose.msra.mxu0 0
        %924 = vmatprep.subr.bf16.mxu0 0
        %925 = vmatpush1.bf16.xpose.msra.mxu0 0
        %926 = vmatprep.subr.bf16.mxu0 0
        %927 = vmatpush1.bf16.xpose.msra.mxu0 0
        %928 = vmatprep.mubr.bf16.mxu0 0
        %929 = vmatmul.mubr.bf16.gmra.mrb[0].mxu0 %v891
        %v930 = vpop.f32.mrb[0].mxu0
        %v931 = vadd.f32 %v567, %v930
        %v932 = vpop.f32.mrb[0].mxu0
        %v933 = vpop.f32.mrb[0].mxu0
        %v934 = vpop.f32.mrb[0].mxu0
        %935 = vdwg.mxu0
        %v936 = vsel %vm568, %v931, -inf
        %937 = vmax.xlane.f32.xlu0 %v936
        %v938 = vpop.xlane.xlu0 %937
        %v939 = vsub.f32 %v931, %v938
        %v940 = vmul.f32 %v939, 1.442695
        %v941 = vpow.pop %v940
        %v942 = vsel %vm568, %v941, 0.0
        %943 = vadd.xlane.f32.xlu0 %v942
        %v944 = vpop.xlane.xlu0 %943
        %v945 = vrcp.pop %v944
        %v946 = vmul.f32 %v941, %v945
        %v947 = vpack.c.bf16 %v946, %v946
        %948 = vrot.lane.b32.xlu0 %v561, 80
        %v949 = vpop.permute.xlu0 %948
        %v951 = vsel %vm568, %v947, 0
        %v954 = vsel %vm632, %v949, 0
        %956 = vmatprep.subr.bf16.mxu0 0
        %957 = vmatpush1.bf16.msra.mxu0 %v954
        %958 = vmatprep.subr.bf16.mxu0 0
        %959 = vmatpush1.bf16.msra.mxu0 0
        %960 = vmatprep.subr.bf16.mxu0 0
        %961 = vmatpush1.bf16.msra.mxu0 0
        %962 = vmatprep.subr.bf16.mxu0 0
        %963 = vmatpush1.bf16.msra.mxu0 0
        %964 = vmatprep.subr.bf16.mxu0 0
        %965 = vmatpush1.bf16.msra.mxu0 0
        %966 = vmatprep.subr.bf16.mxu0 0
        %967 = vmatpush1.bf16.msra.mxu0 0
        %968 = vmatprep.subr.bf16.mxu0 0
        %969 = vmatpush1.bf16.msra.mxu0 0
        %970 = vmatprep.subr.bf16.mxu0 0
        %971 = vmatpush1.bf16.msra.mxu0 0
        %972 = vmatprep.subr.bf16.mxu0 0
        %973 = vmatpush1.bf16.msra.mxu0 0
        %974 = vmatprep.subr.bf16.mxu0 0
        %975 = vmatpush1.bf16.msra.mxu0 0
        %976 = vmatprep.subr.bf16.mxu0 0
        %977 = vmatpush1.bf16.msra.mxu0 0
        %978 = vmatprep.subr.bf16.mxu0 0
        %979 = vmatpush1.bf16.msra.mxu0 0
        %980 = vmatprep.subr.bf16.mxu0 0
        %981 = vmatpush1.bf16.msra.mxu0 0
        %982 = vmatprep.subr.bf16.mxu0 0
        %983 = vmatpush1.bf16.msra.mxu0 0
        %984 = vmatprep.subr.bf16.mxu0 0
        %985 = vmatpush1.bf16.msra.mxu0 0
        %986 = vmatprep.subr.bf16.mxu0 0
        %987 = vmatpush1.bf16.msra.mxu0 0
        %988 = vmatprep.mubr.bf16.mxu0 0
        %989 = vmatmul.mubr.bf16.gmra.mrb[0].mxu0 %v951
        %v990 = vpop.f32.mrb[0].mxu0
        %v991 = vadd.f32 0.0, %v990
        %v992 = vpop.f32.mrb[0].mxu0
        %v993 = vpop.f32.mrb[0].mxu0
        %v994 = vpop.f32.mrb[0].mxu0
        %995 = vdwg.mxu0
        %v996 = vpack.c.bf16 %v991, %v991
        %v997 = vld [vmem:[%s4 + $0x8] sm:$0xf]
        %v999 = vsel %vm568, %v996, 0
        %v1002 = vsel %vm632, %v997, 0
        %1004 = vmatprep.subr.bf16.mxu0 0
        %1005 = vmatpush1.bf16.msra.mxu0 %v1002
        %1006 = vmatprep.subr.bf16.mxu0 0
        %1007 = vmatpush1.bf16.msra.mxu0 0
        %1008 = vmatprep.subr.bf16.mxu0 0
        %1009 = vmatpush1.bf16.msra.mxu0 0
        %1010 = vmatprep.subr.bf16.mxu0 0
        %1011 = vmatpush1.bf16.msra.mxu0 0
        %1012 = vmatprep.subr.bf16.mxu0 0
        %1013 = vmatpush1.bf16.msra.mxu0 0
        %1014 = vmatprep.subr.bf16.mxu0 0
        %1015 = vmatpush1.bf16.msra.mxu0 0
        %1016 = vmatprep.subr.bf16.mxu0 0
        %1017 = vmatpush1.bf16.msra.mxu0 0
        %1018 = vmatprep.subr.bf16.mxu0 0
        %1019 = vmatpush1.bf16.msra.mxu0 0
        %1020 = vmatprep.subr.bf16.mxu0 0
        %1021 = vmatpush1.bf16.msra.mxu0 0
        %1022 = vmatprep.subr.bf16.mxu0 0
        %1023 = vmatpush1.bf16.msra.mxu0 0
        %1024 = vmatprep.subr.bf16.mxu0 0
        %1025 = vmatpush1.bf16.msra.mxu0 0
        %1026 = vmatprep.subr.bf16.mxu0 0
        %1027 = vmatpush1.bf16.msra.mxu0 0
        %1028 = vmatprep.subr.bf16.mxu0 0
        %1029 = vmatpush1.bf16.msra.mxu0 0
        %1030 = vmatprep.subr.bf16.mxu0 0
        %1031 = vmatpush1.bf16.msra.mxu0 0
        %1032 = vmatprep.subr.bf16.mxu0 0
        %1033 = vmatpush1.bf16.msra.mxu0 0
        %1034 = vmatprep.subr.bf16.mxu0 0
        %1035 = vmatpush1.bf16.msra.mxu0 0
        %1036 = vmatprep.mubr.bf16.mxu0 0
        %1037 = vmatmul.mubr.bf16.gmra.mrb[0].mxu0 %v999
        %v1038 = vpop.f32.mrb[0].mxu0
        %v1039 = vadd.f32 0.0, %v1038
        %v1040 = vpop.f32.mrb[0].mxu0
        %v1041 = vpop.f32.mrb[0].mxu0
        %v1042 = vpop.f32.mrb[0].mxu0
        %1043 = vdwg.mxu0
        %v1044 = vadd.f32 %v881, %v1039
        %1045 = vrot.lane.b32.xlu0 %v560, 104
        %v1046 = vpop.permute.xlu0 %1045
        %1047 = vrot.lane.b32.xlu0 %v683, 104
        %v1048 = vpop.permute.xlu0 %1047
        %v1050 = vsel %vm568, %v1046, 0
        %v1053 = vsel %vm568, %v1048, 0
        %1055 = vmatprep.subr.bf16.mxu0 0
        %1056 = vmatpush1.bf16.xpose.msra.mxu0 %v1053
        %1057 = vmatprep.subr.bf16.mxu0 0
        %1058 = vmatpush1.bf16.xpose.msra.mxu0 0
        %1059 = vmatprep.subr.bf16.mxu0 0
        %1060 = vmatpush1.bf16.xpose.msra.mxu0 0
        %1061 = vmatprep.subr.bf16.mxu0 0
        %1062 = vmatpush1.bf16.xpose.msra.mxu0 0
        %1063 = vmatprep.subr.bf16.mxu0 0
        %1064 = vmatpush1.bf16.xpose.msra.mxu0 0
        %1065 = vmatprep.subr.bf16.mxu0 0
        %1066 = vmatpush1.bf16.xpose.msra.mxu0 0
        %1067 = vmatprep.subr.bf16.mxu0 0
        %1068 = vmatpush1.bf16.xpose.msra.mxu0 0
        %1069 = vmatprep.subr.bf16.mxu0 0
        %1070 = vmatpush1.bf16.xpose.msra.mxu0 0
        %1071 = vmatprep.subr.bf16.mxu0 0
        %1072 = vmatpush1.bf16.xpose.msra.mxu0 0
        %1073 = vmatprep.subr.bf16.mxu0 0
        %1074 = vmatpush1.bf16.xpose.msra.mxu0 0
        %1075 = vmatprep.subr.bf16.mxu0 0
        %1076 = vmatpush1.bf16.xpose.msra.mxu0 0
        %1077 = vmatprep.subr.bf16.mxu0 0
        %1078 = vmatpush1.bf16.xpose.msra.mxu0 0
        %1079 = vmatprep.subr.bf16.mxu0 0
        %1080 = vmatpush1.bf16.xpose.msra.mxu0 0
        %1081 = vmatprep.subr.bf16.mxu0 0
        %1082 = vmatpush1.bf16.xpose.msra.mxu0 0
        %1083 = vmatprep.subr.bf16.mxu0 0
        %1084 = vmatpush1.bf16.xpose.msra.mxu0 0
        %1085 = vmatprep.subr.bf16.mxu0 0
        %1086 = vmatpush1.bf16.xpose.msra.mxu0 0
        %1087 = vmatprep.mubr.bf16.mxu0 0
        %1088 = vmatmul.mubr.bf16.gmra.mrb[0].mxu0 %v1050
        %v1089 = vpop.f32.mrb[0].mxu0
        %v1090 = vadd.f32 %v567, %v1089
        %v1091 = vpop.f32.mrb[0].mxu0
        %v1092 = vpop.f32.mrb[0].mxu0
        %v1093 = vpop.f32.mrb[0].mxu0
        %1094 = vdwg.mxu0
        %v1095 = vsel %vm568, %v1090, -inf
        %1096 = vmax.xlane.f32.xlu0 %v1095
        %v1097 = vpop.xlane.xlu0 %1096
        %v1098 = vsub.f32 %v1090, %v1097
        %v1099 = vmul.f32 %v1098, 1.442695
        %v1100 = vpow.pop %v1099
        %v1101 = vsel %vm568, %v1100, 0.0
        %1102 = vadd.xlane.f32.xlu0 %v1101
        %v1103 = vpop.xlane.xlu0 %1102
        %v1104 = vrcp.pop %v1103
        %v1105 = vmul.f32 %v1100, %v1104
        %v1106 = vpack.c.bf16 %v1105, %v1105
        %1107 = vrot.lane.b32.xlu0 %v561, 72
        %v1108 = vpop.permute.xlu0 %1107
        %v1110 = vsel %vm568, %v1106, 0
        %v1113 = vsel %vm632, %v1108, 0
        %1115 = vmatprep.subr.bf16.mxu0 0
        %1116 = vmatpush1.bf16.msra.mxu0 %v1113
        %1117 = vmatprep.subr.bf16.mxu0 0
        %1118 = vmatpush1.bf16.msra.mxu0 0
        %1119 = vmatprep.subr.bf16.mxu0 0
        %1120 = vmatpush1.bf16.msra.mxu0 0
        %1121 = vmatprep.subr.bf16.mxu0 0
        %1122 = vmatpush1.bf16.msra.mxu0 0
        %1123 = vmatprep.subr.bf16.mxu0 0
        %1124 = vmatpush1.bf16.msra.mxu0 0
        %1125 = vmatprep.subr.bf16.mxu0 0
        %1126 = vmatpush1.bf16.msra.mxu0 0
        %1127 = vmatprep.subr.bf16.mxu0 0
        %1128 = vmatpush1.bf16.msra.mxu0 0
        %1129 = vmatprep.subr.bf16.mxu0 0
        %1130 = vmatpush1.bf16.msra.mxu0 0
        %1131 = vmatprep.subr.bf16.mxu0 0
        %1132 = vmatpush1.bf16.msra.mxu0 0
        %1133 = vmatprep.subr.bf16.mxu0 0
        %1134 = vmatpush1.bf16.msra.mxu0 0
        %1135 = vmatprep.subr.bf16.mxu0 0
        %1136 = vmatpush1.bf16.msra.mxu0 0
        %1137 = vmatprep.subr.bf16.mxu0 0
        %1138 = vmatpush1.bf16.msra.mxu0 0
        %1139 = vmatprep.subr.bf16.mxu0 0
        %1140 = vmatpush1.bf16.msra.mxu0 0
        %1141 = vmatprep.subr.bf16.mxu0 0
        %1142 = vmatpush1.bf16.msra.mxu0 0
        %1143 = vmatprep.subr.bf16.mxu0 0
        %1144 = vmatpush1.bf16.msra.mxu0 0
        %1145 = vmatprep.subr.bf16.mxu0 0
        %1146 = vmatpush1.bf16.msra.mxu0 0
        %1147 = vmatprep.mubr.bf16.mxu0 0
        %1148 = vmatmul.mubr.bf16.gmra.mrb[0].mxu0 %v1110
        %v1149 = vpop.f32.mrb[0].mxu0
        %v1150 = vadd.f32 0.0, %v1149
        %v1151 = vpop.f32.mrb[0].mxu0
        %v1152 = vpop.f32.mrb[0].mxu0
        %v1153 = vpop.f32.mrb[0].mxu0
        %1154 = vdwg.mxu0
        %v1155 = vpack.c.bf16 %v1150, %v1150
        %v1156 = vld [vmem:[%s4 + $0xc] sm:$0xf]
        %v1158 = vsel %vm568, %v1155, 0
        %v1161 = vsel %vm632, %v1156, 0
        %1163 = vmatprep.subr.bf16.mxu0 0
        %1164 = vmatpush1.bf16.msra.mxu0 %v1161
        %1165 = vmatprep.subr.bf16.mxu0 0
        %1166 = vmatpush1.bf16.msra.mxu0 0
        %1167 = vmatprep.subr.bf16.mxu0 0
        %1168 = vmatpush1.bf16.msra.mxu0 0
        %1169 = vmatprep.subr.bf16.mxu0 0
        %1170 = vmatpush1.bf16.msra.mxu0 0
        %1171 = vmatprep.subr.bf16.mxu0 0
        %1172 = vmatpush1.bf16.msra.mxu0 0
        %1173 = vmatprep.subr.bf16.mxu0 0
        %1174 = vmatpush1.bf16.msra.mxu0 0
        %1175 = vmatprep.subr.bf16.mxu0 0
        %1176 = vmatpush1.bf16.msra.mxu0 0
        %1177 = vmatprep.subr.bf16.mxu0 0
        %1178 = vmatpush1.bf16.msra.mxu0 0
        %1179 = vmatprep.subr.bf16.mxu0 0
        %1180 = vmatpush1.bf16.msra.mxu0 0
        %1181 = vmatprep.subr.bf16.mxu0 0
        %1182 = vmatpush1.bf16.msra.mxu0 0
        %1183 = vmatprep.subr.bf16.mxu0 0
        %1184 = vmatpush1.bf16.msra.mxu0 0
        %1185 = vmatprep.subr.bf16.mxu0 0
        %1186 = vmatpush1.bf16.msra.mxu0 0
        %1187 = vmatprep.subr.bf16.mxu0 0
        %1188 = vmatpush1.bf16.msra.mxu0 0
        %1189 = vmatprep.subr.bf16.mxu0 0
        %1190 = vmatpush1.bf16.msra.mxu0 0
        %1191 = vmatprep.subr.bf16.mxu0 0
        %1192 = vmatpush1.bf16.msra.mxu0 0
        %1193 = vmatprep.subr.bf16.mxu0 0
        %1194 = vmatpush1.bf16.msra.mxu0 0
        %1195 = vmatprep.mubr.bf16.mxu0 0
        %1196 = vmatmul.mubr.bf16.gmra.mrb[0].mxu0 %v1158
        %v1197 = vpop.f32.mrb[0].mxu0
        %v1198 = vadd.f32 0.0, %v1197
        %v1199 = vpop.f32.mrb[0].mxu0
        %v1200 = vpop.f32.mrb[0].mxu0
        %v1201 = vpop.f32.mrb[0].mxu0
        %1202 = vdwg.mxu0
        %v1203 = vadd.f32 %v1044, %v1198
        %v1204 = vld [vmem:[%s5] sm:$0x1]
        %v1206 = vlaneseq
        %v1207 = vshrl.u32 %v1206, 7
        %v1208 = vsub.s32 0, %v1207
        %v1209 = vrot.slane %v1204, %v1208
        %v1211 = vadd.f32 %v1203, %v1209
        %1213 = vrot.lane.b32.xlu0 %v1211, 32
        %v1214 = vpop.permute.xlu0 %1213
        %v1216 = vadd.f32 %v548, %v1214
        %v1217 = vld [vmem:[%s6] sm:$0x1]
        %v1218 = vld [vmem:[%s7] sm:$0x1]
        %1220 = vrot.lane.b32.xlu0 %v1216, 96
        %v1221 = vpop.permute.xlu0 %1220
        %v1223 = vsel %vm509, %v1221, 0.0
        %1224 = vadd.xlane.f32.xlu0 %v1223
        %v1225 = vpop.xlane.xlu0 %1224
        %v1226 = vrcp.pop 32.0
        %v1227 = vmul.f32 %v1225, %v1226
        %v1228 = vsub.f32 %v1216, %v1227
        %v1229 = vmul.f32 %v1228, %v1228
        %1231 = vrot.lane.b32.xlu0 %v1229, 96
        %v1232 = vpop.permute.xlu0 %1231
        %v1234 = vsel %vm509, %v1232, 0.0
        %1235 = vadd.xlane.f32.xlu0 %v1234
        %v1236 = vpop.xlane.xlu0 %1235
        %v1237 = vmul.f32 %v1236, %v1226
        %v1238 = vadd.f32 %v1237, 1e-05
        %v1239 = vrsqrt.pop %v1238
        %v1240 = vmul.f32 %v1228, %v1239
        %v1242 = vlaneseq
        %v1243 = vshrl.u32 %v1242, 7
        %v1244 = vsub.s32 0, %v1243
        %v1245 = vrot.slane %v1217, %v1244
        %1246 = vrot.lane.b32.xlu0 %v1245, 32
        %v1247 = vpop.permute.xlu0 %1246
        %v1249 = vmul.f32 %v1240, %v1247
        %v1251 = vlaneseq
        %v1252 = vshrl.u32 %v1251, 7
        %v1253 = vsub.s32 0, %v1252
        %v1254 = vrot.slane %v1218, %v1253
        %1255 = vrot.lane.b32.xlu0 %v1254, 32
        %v1256 = vpop.permute.xlu0 %1255
        %v1258 = vadd.f32 %v1249, %v1256
        %v1259 = vpack.c.bf16 %v1258, %v1258
        %v1260 = vld [vmem:[%s8] sm:$0xf]
        %v1261 = vld [vmem:[%s8 + $0x4] sm:$0xf]
        %v1262 = vld [vmem:[%s8 + $0x8] sm:$0xf]
        %v1263 = vld [vmem:[%s8 + $0xc] sm:$0xf]
        %v1264 = vld [vmem:[%s9] sm:$0x1]
        %v1266 = vlaneseq
        %v1267 = vshrl.u32 %v1266, 7
        %v1268 = vsub.s32 0, %v1267
        %v1269 = vrot.slane %v1264, %v1268
        %1272 = vrot.lane.b32.xlu0 %v1259, 96
        %v1273 = vpop.permute.xlu0 %1272
        %v1278 = vunpack.c.l.b16 %v1260
        %v1279 = vunpack.c.l.b16 %v1261
        %v1280 = vunpack.c.l.b16 %v1262
        %v1281 = vunpack.c.l.b16 %v1263
        %v1282 = vpack.c.b16 %v1279, %v1278
        %v1283 = vpack.c.b16 %v1281, %v1280
        %v1287 = vsel %vm509, %v1273, 0
        %1289 = vmatprep.subr.bf16.mxu0 0
        %1290 = vmatpush1.bf16.msra.mxu0 %v1282
        %1291 = vmatprep.subr.bf16.mxu0 0
        %1292 = vmatpush1.bf16.msra.mxu0 %v1283
        %1293 = vmatprep.subr.bf16.mxu0 0
        %1294 = vmatpush1.bf16.msra.mxu0 0
        %1295 = vmatprep.subr.bf16.mxu0 0
        %1296 = vmatpush1.bf16.msra.mxu0 0
        %1297 = vmatprep.subr.bf16.mxu0 0
        %1298 = vmatpush1.bf16.msra.mxu0 0
        %1299 = vmatprep.subr.bf16.mxu0 0
        %1300 = vmatpush1.bf16.msra.mxu0 0
        %1301 = vmatprep.subr.bf16.mxu0 0
        %1302 = vmatpush1.bf16.msra.mxu0 0
        %1303 = vmatprep.subr.bf16.mxu0 0
        %1304 = vmatpush1.bf16.msra.mxu0 0
        %1305 = vmatprep.subr.bf16.mxu0 0
        %1306 = vmatpush1.bf16.msra.mxu0 0
        %1307 = vmatprep.subr.bf16.mxu0 0
        %1308 = vmatpush1.bf16.msra.mxu0 0
        %1309 = vmatprep.subr.bf16.mxu0 0
        %1310 = vmatpush1.bf16.msra.mxu0 0
        %1311 = vmatprep.subr.bf16.mxu0 0
        %1312 = vmatpush1.bf16.msra.mxu0 0
        %1313 = vmatprep.subr.bf16.mxu0 0
        %1314 = vmatpush1.bf16.msra.mxu0 0
        %1315 = vmatprep.subr.bf16.mxu0 0
        %1316 = vmatpush1.bf16.msra.mxu0 0
        %1317 = vmatprep.subr.bf16.mxu0 0
        %1318 = vmatpush1.bf16.msra.mxu0 0
        %1319 = vmatprep.subr.bf16.mxu0 0
        %1320 = vmatpush1.bf16.msra.mxu0 0
        %1321 = vmatprep.mubr.bf16.mxu0 0
        %1322 = vmatmul.mubr.bf16.gmra.mrb[0].mxu0 %v1287
        %v1323 = vpop.f32.mrb[0].mxu0
        %v1324 = vadd.f32 %v1269, %v1323
        %v1325 = vpop.f32.mrb[0].mxu0
        %v1326 = vpop.f32.mrb[0].mxu0
        %v1327 = vpop.f32.mrb[0].mxu0
        %1328 = vdwg.mxu0
        %v1329 = vmul.f32 %v1324, %v1324
        %v1330 = vmul.f32 %v1324, %v1329
        %v1331 = vmul.f32 %v1330, 0.044715
        %v1332 = vadd.f32 %v1324, %v1331
        %v1333 = vmul.f32 %v1332, 0.7978846
        %v1334 = vtanh.pop %v1333
        %v1335 = vadd.f32 %v1334, 1.0
        %v1336 = vmul.f32 %v1335, 0.5
        %v1337 = vmul.f32 %v1324, %v1336
        %v1338 = vpack.c.bf16 %v1337, %v1337
        %v1339 = vld [vmem:[%s10] sm:$0xf]
        %v1340 = vld [vmem:[%s10 + $0x4] sm:$0xf]
        %v1341 = vld [vmem:[%s10 + $0x8] sm:$0xf]
        %v1342 = vld [vmem:[%s10 + $0xc] sm:$0xf]
        %v1343 = vld [vmem:[%s10 + $0x10] sm:$0xf]
        %v1344 = vld [vmem:[%s10 + $0x14] sm:$0xf]
        %v1345 = vld [vmem:[%s10 + $0x18] sm:$0xf]
        %v1346 = vld [vmem:[%s10 + $0x1c] sm:$0xf]
        %v1347 = vld [vmem:[%s11] sm:$0x1]
        %v1349 = vlaneseq
        %v1350 = vshrl.u32 %v1349, 7
        %v1351 = vsub.s32 0, %v1350
        %v1352 = vrot.slane %v1347, %v1351
        %v1362 = vunpack.c.l.b16 %v1339
        %v1363 = vunpack.c.l.b16 %v1340
        %v1364 = vunpack.c.l.b16 %v1341
        %v1365 = vunpack.c.l.b16 %v1342
        %v1366 = vunpack.c.l.b16 %v1343
        %v1367 = vunpack.c.l.b16 %v1344
        %v1368 = vunpack.c.l.b16 %v1345
        %v1369 = vunpack.c.l.b16 %v1346
        %v1370 = vpack.c.b16 %v1363, %v1362
        %v1371 = vpack.c.b16 %v1365, %v1364
        %v1372 = vpack.c.b16 %v1367, %v1366
        %v1373 = vpack.c.b16 %v1369, %v1368
        %vm1378 = vcmask 523264
        %v1380 = vsel %vm1378, %v1338, 0
        %1382 = vmatprep.subr.bf16.mxu0 0
        %1383 = vmatpush1.bf16.msra.mxu0 %v1370
        %1384 = vmatprep.subr.bf16.mxu0 0
        %1385 = vmatpush1.bf16.msra.mxu0 %v1371
        %1386 = vmatprep.subr.bf16.mxu0 0
        %1387 = vmatpush1.bf16.msra.mxu0 %v1372
        %1388 = vmatprep.subr.bf16.mxu0 0
        %1389 = vmatpush1.bf16.msra.mxu0 %v1373
        %1390 = vmatprep.subr.bf16.mxu0 0
        %1391 = vmatpush1.bf16.msra.mxu0 0
        %1392 = vmatprep.subr.bf16.mxu0 0
        %1393 = vmatpush1.bf16.msra.mxu0 0
        %1394 = vmatprep.subr.bf16.mxu0 0
        %1395 = vmatpush1.bf16.msra.mxu0 0
        %1396 = vmatprep.subr.bf16.mxu0 0
        %1397 = vmatpush1.bf16.msra.mxu0 0
        %1398 = vmatprep.subr.bf16.mxu0 0
        %1399 = vmatpush1.bf16.msra.mxu0 0
        %1400 = vmatprep.subr.bf16.mxu0 0
        %1401 = vmatpush1.bf16.msra.mxu0 0
        %1402 = vmatprep.subr.bf16.mxu0 0
        %1403 = vmatpush1.bf16.msra.mxu0 0
        %1404 = vmatprep.subr.bf16.mxu0 0
        %1405 = vmatpush1.bf16.msra.mxu0 0
        %1406 = vmatprep.subr.bf16.mxu0 0
        %1407 = vmatpush1.bf16.msra.mxu0 0
        %1408 = vmatprep.subr.bf16.mxu0 0
        %1409 = vmatpush1.bf16.msra.mxu0 0
        %1410 = vmatprep.subr.bf16.mxu0 0
        %1411 = vmatpush1.bf16.msra.mxu0 0
        %1412 = vmatprep.subr.bf16.mxu0 0
        %1413 = vmatpush1.bf16.msra.mxu0 0
        %1414 = vmatprep.mubr.bf16.mxu0 0
        %1415 = vmatmul.mubr.bf16.gmra.mrb[0].mxu0 %v1380
        %v1416 = vpop.f32.mrb[0].mxu0
        %v1417 = vadd.f32 %v1352, %v1416
        %v1418 = vpop.f32.mrb[0].mxu0
        %v1419 = vpop.f32.mrb[0].mxu0
        %v1420 = vpop.f32.mrb[0].mxu0
        %1421 = vdwg.mxu0
        %1423 = vrot.lane.b32.xlu0 %v1417, 32
        %v1424 = vpop.permute.xlu0 %1423
        %v1426 = vadd.f32 %v1258, %v1424
        %v1427 = vld [vmem:[%s12] sm:$0x1]
        %v1428 = vld [vmem:[%s13] sm:$0x1]
        %1430 = vrot.lane.b32.xlu0 %v1426, 96
        %v1431 = vpop.permute.xlu0 %1430
        %v1433 = vsel %vm509, %v1431, 0.0
        %1434 = vadd.xlane.f32.xlu0 %v1433
        %v1435 = vpop.xlane.xlu0 %1434
        %v1436 = vmul.f32 %v1435, %v1226
        %v1437 = vsub.f32 %v1426, %v1436
        %v1438 = vmul.f32 %v1437, %v1437
        %1440 = vrot.lane.b32.xlu0 %v1438, 96
        %v1441 = vpop.permute.xlu0 %1440
        %v1443 = vsel %vm509, %v1441, 0.0
        %1444 = vadd.xlane.f32.xlu0 %v1443
        %v1445 = vpop.xlane.xlu0 %1444
        %v1446 = vmul.f32 %v1445, %v1226
        %v1447 = vadd.f32 %v1446, 1e-05
        %v1448 = vrsqrt.pop %v1447
        %v1449 = vmul.f32 %v1437, %v1448
        %v1451 = vlaneseq
        %v1452 = vshrl.u32 %v1451, 7
        %v1453 = vsub.s32 0, %v1452
        %v1454 = vrot.slane %v1427, %v1453
        %1455 = vrot.lane.b32.xlu0 %v1454, 32
        %v1456 = vpop.permute.xlu0 %1455
        %v1458 = vmul.f32 %v1449, %v1456
        %v1460 = vlaneseq
        %v1461 = vshrl.u32 %v1460, 7
        %v1462 = vsub.s32 0, %v1461
        %v1463 = vrot.slane %v1428, %v1462
        %1464 = vrot.lane.b32.xlu0 %v1463, 32
        %v1465 = vpop.permute.xlu0 %1464
        %v1467 = vadd.f32 %v1458, %v1465
        %1469 = vrot.lane.b32.xlu0 %v1467, 96
        %v1470 = vpop.permute.xlu0 %1469
        %1472 = vst.msk [vmem:[%s483] sm:$0xff] %vm509, %v1470
        %s1473 = sand.u32 %s339, 1
        %s1474 = scalar_lea.sflag [#allocation5], %s1473
        %s1475 = sand.u32 %s339, 1
        %s1476 = smul.addr %s1475, 8
        %s1477 = scalar_lea.vmem [#allocation6], %s1476
        // Predicated region
        $region81: #{tpu_custom_call.1} parent=75 // pred_check
          %p1478 = pneg %p349
        $region82: #{tpu_custom_call.1} parent=75 // pred_check_branch
          %1480 = sbr.rel (%p1478) target = $region84
        $region83: #{tpu_custom_call.1} parent=75 // pred_region
          %s1482 = ssub.s32 128, 128
          %1483 = vsyncadd %s1474, %s1482
          %s1484 = smul.addr %s32, 128
          %s1485 = scalar_lea.hbm %s14, %s1484
          %s1487 = sshll.u32 %s1477, 4
          %s1488 = int_to_ptr.vmem [resolvable:$true] %s1487
          %1490 = dma.vmem_to_hbm [thread:$0]  %s1488, 128, %s1485, %s1474
        $region84: #{tpu_custom_call.1} parent=75 // pred_fallthru
          _
      $region76: #{tpu_custom_call.1} parent=5 // pred_fallthru
        _
      %p1491 = scmp.le.s32.totalorder 2, %s27
      // Predicated region
      $region85: #{tpu_custom_call.1} parent=5 // pred_check
        %p1492 = pneg %p1491
      $region86: #{tpu_custom_call.1} parent=5 // pred_check_branch
        %1494 = sbr.rel (%p1492) target = $region88
      $region87: #{tpu_custom_call.1} parent=5 // pred_region
        %s1495 = ssub.s32 %s27, 2
        // Predicated region
        $region89: #{tpu_custom_call.1} parent=87 // pred_check
          %p1496 = pneg %p355
        $region90: #{tpu_custom_call.1} parent=87 // pred_check_branch
          %1498 = sbr.rel (%p1496) target = $region92
        $region91: #{tpu_custom_call.1} parent=87 // pred_region
          %s1499 = sand.u32 %s340, 1
          %s1500 = scalar_lea.sflag [#allocation5], %s1499
          %s1501 = sand.u32 %s340, 1
          %s1502 = smul.addr %s1501, 8
          %s1503 = scalar_lea.vmem [#allocation6], %s1502
          %1504 = dma.done %s1500, 128
        $region92: #{tpu_custom_call.1} parent=87 // pred_fallthru
          _
      $region88: #{tpu_custom_call.1} parent=5 // pred_fallthru
        _
    $region6: #{tpu_custom_call.1} parent=1 // loop_footer
      %s31 = sadd.s32 1, %s27
    $region7: #{tpu_custom_call.1} parent=1 // loop_footer_branch
      %26 = sbr.rel target = $region3
    $region8: #{tpu_custom_call.1} parent=1 // loop_exit
      _
    %1505 = vsyncpa [#allocation4], 1
    %s1506 = scalar_lea.sflag [#allocation4], 1
    %1507 = vsyncpa %s1506, 1
    %1508 = vsyncpa [#allocation5], 1
    %s1509 = scalar_lea.sflag [#allocation5], 1
    %1510 = vsyncpa %s1509, 1

// kernel: tpu_custom_call.1
$region0: #{tpu_custom_call.1}
  #allocation0 [shape = 'u32[]', space=smem, size = 0x4, offset = 0x4, fixed_abs, tag = 'smem constant byte address 0x4 - core index']
  #allocation1 [shape = 'u32[144,128]{1,0:T(1,128)}', space=vmem, size = 0x12000, scoped, tag = 'internal scratch']
  #allocation2 [shape = 'f32[1]{0:T(128)S(6)}', space=smem, size = 0x200, scoped, tag = 'scoped memory for tpu_custom_call.1']
  %s0 = inlined_call_operand.hbm [shape: bf16[16,32], index: 0, kind: input, shape index: {}]
  %s1 = inlined_call_operand.<no memory space> [shape: f32[1], index: 1, kind: input, shape index: {}]
  %s2 = inlined_call_operand.vmem [shape: bf16[32,64], index: 2, kind: input, shape index: {}]
  %s3 = inlined_call_operand.vmem [shape: f32[1,64], index: 3, kind: input, shape index: {}]
  %s4 = inlined_call_operand.vmem [shape: bf16[32,32], index: 4, kind: input, shape index: {}]
  %s5 = inlined_call_operand.vmem [shape: f32[1,32], index: 5, kind: input, shape index: {}]
  %s6 = inlined_call_operand.vmem [shape: f32[1,32], index: 6, kind: input, shape index: {}]
  %s7 = inlined_call_operand.vmem [shape: f32[1,32], index: 7, kind: input, shape index: {}]
  %s8 = inlined_call_operand.vmem [shape: bf16[32,64], index: 8, kind: input, shape index: {}]
  %s9 = inlined_call_operand.vmem [shape: f32[1,64], index: 9, kind: input, shape index: {}]
  %s10 = inlined_call_operand.vmem [shape: bf16[64,32], index: 10, kind: input, shape index: {}]
  %s11 = inlined_call_operand.vmem [shape: f32[1,32], index: 11, kind: input, shape index: {}]
  %s12 = inlined_call_operand.vmem [shape: f32[1,32], index: 12, kind: input, shape index: {}]
  %s13 = inlined_call_operand.vmem [shape: f32[1,32], index: 13, kind: input, shape index: {}]
  %s14 = inlined_call_operand.hbm [shape: f32[16,32], index: 14, kind: output, shape index: {}]
  %s15 = sld [smem:[#allocation0]]
  $region93: #{tpu_custom_call.1} parent=0
    _
  %s17 = ssub.s32 1, %s15
  %s18 = scalar_select 0, %s17, %s15
  %19 = sst [smem:[#allocation2]] %s1
  $region1: #{tpu_custom_call.1} parent=0
    #allocation3 [shape = 'u8[4096]{0}', space=vmem, size = 0x1000, scoped, tag = 'input window, operand 0']
    #allocation4 [shape = 's32[2]{0}', space=sflag, size = 0x8, scoped, tag = 'scoped memory for tpu_custom_call.1']
    #allocation5 [shape = 's32[2]{0}', space=sflag, size = 0x8, scoped, tag = 'scoped memory for tpu_custom_call.1']
    #allocation6 [shape = 'u8[8192]{0}', space=vmem, size = 0x2000, scoped, tag = 'output window, operand 0']
    %20 = vsyncpa [#allocation4], 0
    %s21 = scalar_lea.sflag [#allocation4], 1
    %22 = vsyncpa %s21, 0
    %23 = vsyncpa [#allocation5], 0
    %s24 = scalar_lea.sflag [#allocation5], 1
    %25 = vsyncpa %s24, 0
    loop: start=0, step=1, limit=4
    $region2: #{tpu_custom_call.1} parent=1 // loop_pre_header
      _
    $region3: #{tpu_custom_call.1} parent=1 // loop_header
      %s27 = sphi 0, %s31
      %p28 = scmp.ge.s32.totalorder %s27, 4
      %s37 = sphi 0, %s39
      %s40 = sphi 0, %s37
      %s41 = sphi 0, %s40
      %s57 = sphi 0, %s41
      %s61 = sphi 0, %s61
      %s63 = sphi 0, %s61
      %s64 = sphi 0, %s63
      %s78 = sphi 0, %s64
      %s82 = sphi 0, %s82
      %s84 = sphi 0, %s82
      %s85 = sphi 0, %s84
      %s99 = sphi 0, %s85
      %s103 = sphi 0, %s103
      %s105 = sphi 0, %s103
      %s106 = sphi 0, %s105
      %s120 = sphi 0, %s106
      %s124 = sphi 0, %s124
      %s126 = sphi 0, %s124
      %s127 = sphi 0, %s126
      %s141 = sphi 0, %s127
      %s145 = sphi 0, %s145
      %s147 = sphi 0, %s145
      %s148 = sphi 0, %s147
      %s162 = sphi 0, %s148
      %s166 = sphi 0, %s166
      %s168 = sphi 0, %s166
      %s169 = sphi 0, %s168
      %s183 = sphi 0, %s169
      %s187 = sphi 0, %s187
      %s189 = sphi 0, %s187
      %s190 = sphi 0, %s189
      %s204 = sphi 0, %s190
      %s208 = sphi 0, %s208
      %s210 = sphi 0, %s208
      %s211 = sphi 0, %s210
      %s225 = sphi 0, %s211
      %s229 = sphi 0, %s229
      %s231 = sphi 0, %s229
      %s232 = sphi 0, %s231
      %s246 = sphi 0, %s232
      %s250 = sphi 0, %s250
      %s252 = sphi 0, %s250
      %s253 = sphi 0, %s252
      %s267 = sphi 0, %s253
      %s271 = sphi 0, %s271
      %s273 = sphi 0, %s271
      %s274 = sphi 0, %s273
      %s288 = sphi 0, %s274
      %s292 = sphi 0, %s292
      %s294 = sphi 0, %s292
      %s295 = sphi 0, %s294
      %s309 = sphi 0, %s295
      %s313 = sphi 0, %s313
      %s315 = sphi 0, %s313
      %s316 = sphi 0, %s315
      %s330 = sphi 0, %s316
      %s336 = sphi 0, %s338
      %s339 = sphi 0, %s336
      %s340 = sphi 0, %s339
      %s356 = sphi 0, %s340
    $region4: #{tpu_custom_call.1} parent=1 // loop_header_branch
      %30 = sbr.rel (%p28) target = $region8
    $region5: #{tpu_custom_call.1} parent=1 // loop_body
      %s32 = ssub.s32 %s27, 1
      %s33 = ssub.s32 %s27, 2
      %s34 = sadd.s32 %s27, 1
      %s35 = ssub.s32 %s27, %s34
      %p36 = scmp.eq.s32.totalorder %s35, 0
      %s38 = sadd.s32 %s37, 1
      %s39 = scalar_select %p36, %s37, %s38
      %p42 = pneg %p36
      %p43 = scmp.eq.s32.totalorder %s27, 1
      %p44 = por %p42, %p43
      %p45 = scmp.ne.s32.totalorder %s37, %s40
      %p46 = scmp.eq.s32.totalorder %s27, 0
      %p47 = por %p45, %p46
      %p48 = scmp.ne.s32.totalorder %s37, %s40
      %p49 = scmp.eq.s32.totalorder %s32, 1
      %p50 = por %p48, %p49
      %p51 = scmp.ne.s32.totalorder %s40, %s41
      %p52 = scmp.eq.s32.totalorder %s32, 0
      %p53 = por %p51, %p52
      %p54 = scmp.ne.s32.totalorder %s40, %s41
      %p55 = scmp.eq.s32.totalorder %s33, 1
      %p56 = por %p54, %p55
      %p58 = scmp.ne.s32.totalorder %s41, %s57
      %p59 = scmp.eq.s32.totalorder %s33, 0
      %p60 = por %p58, %p59
      %s62 = sadd.s32 %s61, 1
      %p65 = scmp.eq.s32.totalorder %s27, 1
      %p66 = scmp.ne.s32.totalorder %s61, %s63
      %p67 = scmp.eq.s32.totalorder %s27, 0
      %p68 = por %p66, %p67
      %p69 = scmp.ne.s32.totalorder %s61, %s63
      %p70 = scmp.eq.s32.totalorder %s32, 1
      %p71 = por %p69, %p70
      %p72 = scmp.ne.s32.totalorder %s63, %s64
      %p73 = scmp.eq.s32.totalorder %s32, 0
      %p74 = por %p72, %p73
      %p75 = scmp.ne.s32.totalorder %s63, %s64
      %p76 = scmp.eq.s32.totalorder %s33, 1
      %p77 = por %p75, %p76
      %p79 = scmp.ne.s32.totalorder %s64, %s78
      %p80 = scmp.eq.s32.totalorder %s33, 0
      %p81 = por %p79, %p80
      %s83 = sadd.s32 %s82, 1
      %p86 = scmp.eq.s32.totalorder %s27, 1
      %p87 = scmp.ne.s32.totalorder %s82, %s84
      %p88 = scmp.eq.s32.totalorder %s27, 0
      %p89 = por %p87, %p88
      %p90 = scmp.ne.s32.totalorder %s82, %s84
      %p91 = scmp.eq.s32.totalorder %s32, 1
      %p92 = por %p90, %p91
      %p93 = scmp.ne.s32.totalorder %s84, %s85
      %p94 = scmp.eq.s32.totalorder %s32, 0
      %p95 = por %p93, %p94
      %p96 = scmp.ne.s32.totalorder %s84, %s85
      %p97 = scmp.eq.s32.totalorder %s33, 1
      %p98 = por %p96, %p97
      %p100 = scmp.ne.s32.totalorder %s85, %s99
      %p101 = scmp.eq.s32.totalorder %s33, 0
      %p102 = por %p100, %p101
      %s104 = sadd.s32 %s103, 1
      %p107 = scmp.eq.s32.totalorder %s27, 1
      %p108 = scmp.ne.s32.totalorder %s103, %s105
      %p109 = scmp.eq.s32.totalorder %s27, 0
      %p110 = por %p108, %p109
      %p111 = scmp.ne.s32.totalorder %s103, %s105
      %p112 = scmp.eq.s32.totalorder %s32, 1
      %p113 = por %p111, %p112
      %p114 = scmp.ne.s32.totalorder %s105, %s106
      %p115 = scmp.eq.s32.totalorder %s32, 0
      %p116 = por %p114, %p115
      %p117 = scmp.ne.s32.totalorder %s105, %s106
      %p118 = scmp.eq.s32.totalorder %s33, 1
      %p119 = por %p117, %p118
      %p121 = scmp.ne.s32.totalorder %s106, %s120
      %p122 = scmp.eq.s32.totalorder %s33, 0
      %p123 = por %p121, %p122
      %s125 = sadd.s32 %s124, 1
      %p128 = scmp.eq.s32.totalorder %s27, 1
      %p129 = scmp.ne.s32.totalorder %s124, %s126
      %p130 = scmp.eq.s32.totalorder %s27, 0
      %p131 = por %p129, %p130
      %p132 = scmp.ne.s32.totalorder %s124, %s126
      %p133 = scmp.eq.s32.totalorder %s32, 1
      %p134 = por %p132, %p133
      %p135 = scmp.ne.s32.totalorder %s126, %s127
      %p136 = scmp.eq.s32.totalorder %s32, 0
      %p137 = por %p135, %p136
      %p138 = scmp.ne.s32.totalorder %s126, %s127
      %p139 = scmp.eq.s32.totalorder %s33, 1
      %p140 = por %p138, %p139
      %p142 = scmp.ne.s32.totalorder %s127, %s141
      %p143 = scmp.eq.s32.totalorder %s33, 0
      %p144 = por %p142, %p143
      %s146 = sadd.s32 %s145, 1
      %p149 = scmp.eq.s32.totalorder %s27, 1
      %p150 = scmp.ne.s32.totalorder %s145, %s147
      %p151 = scmp.eq.s32.totalorder %s27, 0
      %p152 = por %p150, %p151
      %p153 = scmp.ne.s32.totalorder %s145, %s147
      %p154 = scmp.eq.s32.totalorder %s32, 1
      %p155 = por %p153, %p154
      %p156 = scmp.ne.s32.totalorder %s147, %s148
      %p157 = scmp.eq.s32.totalorder %s32, 0
      %p158 = por %p156, %p157
      %p159 = scmp.ne.s32.totalorder %s147, %s148
      %p160 = scmp.eq.s32.totalorder %s33, 1
      %p161 = por %p159, %p160
      %p163 = scmp.ne.s32.totalorder %s148, %s162
      %p164 = scmp.eq.s32.totalorder %s33, 0
      %p165 = por %p163, %p164
      %s167 = sadd.s32 %s166, 1
      %p170 = scmp.eq.s32.totalorder %s27, 1
      %p171 = scmp.ne.s32.totalorder %s166, %s168
      %p172 = scmp.eq.s32.totalorder %s27, 0
      %p173 = por %p171, %p172
      %p174 = scmp.ne.s32.totalorder %s166, %s168
      %p175 = scmp.eq.s32.totalorder %s32, 1
      %p176 = por %p174, %p175
      %p177 = scmp.ne.s32.totalorder %s168, %s169
      %p178 = scmp.eq.s32.totalorder %s32, 0
      %p179 = por %p177, %p178
      %p180 = scmp.ne.s32.totalorder %s168, %s169
      %p181 = scmp.eq.s32.totalorder %s33, 1
      %p182 = por %p180, %p181
      %p184 = scmp.ne.s32.totalorder %s169, %s183
      %p185 = scmp.eq.s32.totalorder %s33, 0
      %p186 = por %p184, %p185
      %s188 = sadd.s32 %s187, 1
      %p191 = scmp.eq.s32.totalorder %s27, 1
      %p192 = scmp.ne.s32.totalorder %s187, %s189
      %p193 = scmp.eq.s32.totalorder %s27, 0
      %p194 = por %p192, %p193
      %p195 = scmp.ne.s32.totalorder %s187, %s189
      %p196 = scmp.eq.s32.totalorder %s32, 1
      %p197 = por %p195, %p196
      %p198 = scmp.ne.s32.totalorder %s189, %s190
      %p199 = scmp.eq.s32.totalorder %s32, 0
      %p200 = por %p198, %p199
      %p201 = scmp.ne.s32.totalorder %s189, %s190
      %p202 = scmp.eq.s32.totalorder %s33, 1
      %p203 = por %p201, %p202
      %p205 = scmp.ne.s32.totalorder %s190, %s204
      %p206 = scmp.eq.s32.totalorder %s33, 0
      %p207 = por %p205, %p206
      %s209 = sadd.s32 %s208, 1
      %p212 = scmp.eq.s32.totalorder %s27, 1
      %p213 = scmp.ne.s32.totalorder %s208, %s210
      %p214 = scmp.eq.s32.totalorder %s27, 0
      %p215 = por %p213, %p214
      %p216 = scmp.ne.s32.totalorder %s208, %s210
      %p217 = scmp.eq.s32.totalorder %s32, 1
      %p218 = por %p216, %p217
      %p219 = scmp.ne.s32.totalorder %s210, %s211
      %p220 = scmp.eq.s32.totalorder %s32, 0
      %p221 = por %p219, %p220
      %p222 = scmp.ne.s32.totalorder %s210, %s211
      %p223 = scmp.eq.s32.totalorder %s33, 1
      %p224 = por %p222, %p223
      %p226 = scmp.ne.s32.totalorder %s211, %s225
      %p227 = scmp.eq.s32.totalorder %s33, 0
      %p228 = por %p226, %p227
      %s230 = sadd.s32 %s229, 1
      %p233 = scmp.eq.s32.totalorder %s27, 1
      %p234 = scmp.ne.s32.totalorder %s229, %s231
      %p235 = scmp.eq.s32.totalorder %s27, 0
      %p236 = por %p234, %p235
      %p237 = scmp.ne.s32.totalorder %s229, %s231
      %p238 = scmp.eq.s32.totalorder %s32, 1
      %p239 = por %p237, %p238
      %p240 = scmp.ne.s32.totalorder %s231, %s232
      %p241 = scmp.eq.s32.totalorder %s32, 0
      %p242 = por %p240, %p241
      %p243 = scmp.ne.s32.totalorder %s231, %s232
      %p244 = scmp.eq.s32.totalorder %s33, 1
      %p245 = por %p243, %p244
      %p247 = scmp.ne.s32.totalorder %s232, %s246
      %p248 = scmp.eq.s32.totalorder %s33, 0
      %p249 = por %p247, %p248
      %s251 = sadd.s32 %s250, 1
      %p254 = scmp.eq.s32.totalorder %s27, 1
      %p255 = scmp.ne.s32.totalorder %s250, %s252
      %p256 = scmp.eq.s32.totalorder %s27, 0
      %p257 = por %p255, %p256
      %p258 = scmp.ne.s32.totalorder %s250, %s252
      %p259 = scmp.eq.s32.totalorder %s32, 1
      %p260 = por %p258, %p259
      %p261 = scmp.ne.s32.totalorder %s252, %s253
      %p262 = scmp.eq.s32.totalorder %s32, 0
      %p263 = por %p261, %p262
      %p264 = scmp.ne.s32.totalorder %s252, %s253
      %p265 = scmp.eq.s32.totalorder %s33, 1
      %p266 = por %p264, %p265
      %p268 = scmp.ne.s32.totalorder %s253, %s267
      %p269 = scmp.eq.s32.totalorder %s33, 0
      %p270 = por %p268, %p269
      %s272 = sadd.s32 %s271, 1
      %p275 = scmp.eq.s32.totalorder %s27, 1
      %p276 = scmp.ne.s32.totalorder %s271, %s273
      %p277 = scmp.eq.s32.totalorder %s27, 0
      %p278 = por %p276, %p277
      %p279 = scmp.ne.s32.totalorder %s271, %s273
      %p280 = scmp.eq.s32.totalorder %s32, 1
      %p281 = por %p279, %p280
      %p282 = scmp.ne.s32.totalorder %s273, %s274
      %p283 = scmp.eq.s32.totalorder %s32, 0
      %p284 = por %p282, %p283
      %p285 = scmp.ne.s32.totalorder %s273, %s274
      %p286 = scmp.eq.s32.totalorder %s33, 1
      %p287 = por %p285, %p286
      %p289 = scmp.ne.s32.totalorder %s274, %s288
      %p290 = scmp.eq.s32.totalorder %s33, 0
      %p291 = por %p289, %p290
      %s293 = sadd.s32 %s292, 1
      %p296 = scmp.eq.s32.totalorder %s27, 1
      %p297 = scmp.ne.s32.totalorder %s292, %s294
      %p298 = scmp.eq.s32.totalorder %s27, 0
      %p299 = por %p297, %p298
      %p300 = scmp.ne.s32.totalorder %s292, %s294
      %p301 = scmp.eq.s32.totalorder %s32, 1
      %p302 = por %p300, %p301
      %p303 = scmp.ne.s32.totalorder %s294, %s295
      %p304 = scmp.eq.s32.totalorder %s32, 0
      %p305 = por %p303, %p304
      %p306 = scmp.ne.s32.totalorder %s294, %s295
      %p307 = scmp.eq.s32.totalorder %s33, 1
      %p308 = por %p306, %p307
      %p310 = scmp.ne.s32.totalorder %s295, %s309
      %p311 = scmp.eq.s32.totalorder %s33, 0
      %p312 = por %p310, %p311
      %s314 = sadd.s32 %s313, 1
      %p317 = scmp.eq.s32.totalorder %s27, 1
      %p318 = scmp.ne.s32.totalorder %s313, %s315
      %p319 = scmp.eq.s32.totalorder %s27, 0
      %p320 = por %p318, %p319
      %p321 = scmp.ne.s32.totalorder %s313, %s315
      %p322 = scmp.eq.s32.totalorder %s32, 1
      %p323 = por %p321, %p322
      %p324 = scmp.ne.s32.totalorder %s315, %s316
      %p325 = scmp.eq.s32.totalorder %s32, 0
      %p326 = por %p324, %p325
      %p327 = scmp.ne.s32.totalorder %s315, %s316
      %p328 = scmp.eq.s32.totalorder %s33, 1
      %p329 = por %p327, %p328
      %p331 = scmp.ne.s32.totalorder %s316, %s330
      %p332 = scmp.eq.s32.totalorder %s33, 0
      %p333 = por %p331, %p332
      %s334 = ssub.s32 %s27, %s34
      %p335 = scmp.eq.s32.totalorder %s334, 0
      %s337 = sadd.s32 %s336, 1
      %s338 = scalar_select %p335, %s336, %s337
      %p341 = pneg %p335
      %p342 = scmp.eq.s32.totalorder %s27, 1
      %p343 = por %p341, %p342
      %p344 = scmp.ne.s32.totalorder %s336, %s339
      %p345 = scmp.eq.s32.totalorder %s27, 0
      %p346 = por %p344, %p345
      %p347 = scmp.ne.s32.totalorder %s336, %s339
      %p348 = scmp.eq.s32.totalorder %s32, 1
      %p349 = por %p347, %p348
      %p350 = scmp.ne.s32.totalorder %s339, %s340
      %p351 = scmp.eq.s32.totalorder %s32, 0
      %p352 = por %p350, %p351
      %p353 = scmp.ne.s32.totalorder %s339, %s340
      %p354 = scmp.eq.s32.totalorder %s33, 1
      %p355 = por %p353, %p354
      %p357 = scmp.ne.s32.totalorder %s340, %s356
      %p358 = scmp.eq.s32.totalorder %s33, 0
      %p359 = por %p357, %p358
      %p360 = scmp.le.s32.totalorder 1, %s27
      %p361 = scmp.lt.s32.totalorder %s27, 3
      %p362 = pnand %p360, %p361
      %p363 = pneg %p362
      // Predicated region
      $region9: #{tpu_custom_call.1} parent=5 // pred_check
        _
      $region10: #{tpu_custom_call.1} parent=5 // pred_check_branch
        %365 = sbr.rel (%p362) target = $region12
      $region11: #{tpu_custom_call.1} parent=5 // pred_region
        %s366 = ssub.s32 %s27, 1
        // Predicated region
        $region13: #{tpu_custom_call.1} parent=11 // pred_check
          %p367 = pneg %p74
        $region14: #{tpu_custom_call.1} parent=11 // pred_check_branch
          %369 = sbr.rel (%p367) target = $region16
        $region15: #{tpu_custom_call.1} parent=11 // pred_region
          _
        $region16: #{tpu_custom_call.1} parent=11 // pred_fallthru
          _
        // Predicated region
        $region17: #{tpu_custom_call.1} parent=11 // pred_check
          %p370 = pneg %p95
        $region18: #{tpu_custom_call.1} parent=11 // pred_check_branch
          %372 = sbr.rel (%p370) target = $region20
        $region19: #{tpu_custom_call.1} parent=11 // pred_region
          _
        $region20: #{tpu_custom_call.1} parent=11 // pred_fallthru
          _
        // Predicated region
        $region21: #{tpu_custom_call.1} parent=11 // pred_check
          %p373 = pneg %p116
        $region22: #{tpu_custom_call.1} parent=11 // pred_check_branch
          %375 = sbr.rel (%p373) target = $region24
        $region23: #{tpu_custom_call.1} parent=11 // pred_region
          _
        $region24: #{tpu_custom_call.1} parent=11 // pred_fallthru
          _
        // Predicated region
        $region25: #{tpu_custom_call.1} parent=11 // pred_check
          %p376 = pneg %p137
        $region26: #{tpu_custom_call.1} parent=11 // pred_check_branch
          %378 = sbr.rel (%p376) target = $region28
        $region27: #{tpu_custom_call.1} parent=11 // pred_region
          _
        $region28: #{tpu_custom_call.1} parent=11 // pred_fallthru
          _
        // Predicated region
        $region29: #{tpu_custom_call.1} parent=11 // pred_check
          %p379 = pneg %p158
        $region30: #{tpu_custom_call.1} parent=11 // pred_check_branch
          %381 = sbr.rel (%p379) target = $region32
        $region31: #{tpu_custom_call.1} parent=11 // pred_region
          _
        $region32: #{tpu_custom_call.1} parent=11 // pred_fallthru
          _
        // Predicated region
        $region33: #{tpu_custom_call.1} parent=11 // pred_check
          %p382 = pneg %p179
        $region34: #{tpu_custom_call.1} parent=11 // pred_check_branch
          %384 = sbr.rel (%p382) target = $region36
        $region35: #{tpu_custom_call.1} parent=11 // pred_region
          _
        $region36: #{tpu_custom_call.1} parent=11 // pred_fallthru
          _
        // Predicated region
        $region37: #{tpu_custom_call.1} parent=11 // pred_check
          %p385 = pneg %p200
        $region38: #{tpu_custom_call.1} parent=11 // pred_check_branch
          %387 = sbr.rel (%p385) target = $region40
        $region39: #{tpu_custom_call.1} parent=11 // pred_region
          _
        $region40: #{tpu_custom_call.1} parent=11 // pred_fallthru
          _
        // Predicated region
        $region41: #{tpu_custom_call.1} parent=11 // pred_check
          %p388 = pneg %p221
        $region42: #{tpu_custom_call.1} parent=11 // pred_check_branch
          %390 = sbr.rel (%p388) target = $region44
        $region43: #{tpu_custom_call.1} parent=11 // pred_region
          _
        $region44: #{tpu_custom_call.1} parent=11 // pred_fallthru
          _
        // Predicated region
        $region45: #{tpu_custom_call.1} parent=11 // pred_check
          %p391 = pneg %p242
        $region46: #{tpu_custom_call.1} parent=11 // pred_check_branch
          %393 = sbr.rel (%p391) target = $region48
        $region47: #{tpu_custom_call.1} parent=11 // pred_region
          _
        $region48: #{tpu_custom_call.1} parent=11 // pred_fallthru
          _
        // Predicated region
        $region49: #{tpu_custom_call.1} parent=11 // pred_check
          %p394 = pneg %p263
        $region50: #{tpu_custom_call.1} parent=11 // pred_check_branch
          %396 = sbr.rel (%p394) target = $region52
        $region51: #{tpu_custom_call.1} parent=11 // pred_region
          _
        $region52: #{tpu_custom_call.1} parent=11 // pred_fallthru
          _
        // Predicated region
        $region53: #{tpu_custom_call.1} parent=11 // pred_check
          %p397 = pneg %p284
        $region54: #{tpu_custom_call.1} parent=11 // pred_check_branch
          %399 = sbr.rel (%p397) target = $region56
        $region55: #{tpu_custom_call.1} parent=11 // pred_region
          _
        $region56: #{tpu_custom_call.1} parent=11 // pred_fallthru
          _
        // Predicated region
        $region57: #{tpu_custom_call.1} parent=11 // pred_check
          %p400 = pneg %p305
        $region58: #{tpu_custom_call.1} parent=11 // pred_check_branch
          %402 = sbr.rel (%p400) target = $region60
        $region59: #{tpu_custom_call.1} parent=11 // pred_region
          _
        $region60: #{tpu_custom_call.1} parent=11 // pred_fallthru
          _
        // Predicated region
        $region61: #{tpu_custom_call.1} parent=11 // pred_check
          %p403 = pneg %p326
        $region62: #{tpu_custom_call.1} parent=11 // pred_check_branch
          %405 = sbr.rel (%p403) target = $region64
        $region63: #{tpu_custom_call.1} parent=11 // pred_region
          _
        $region64: #{tpu_custom_call.1} parent=11 // pred_fallthru
          _
      $region12: #{tpu_custom_call.1} parent=5 // pred_fallthru
        _
      %p406 = scmp.lt.s32.totalorder %s27, 2
      // Predicated region
      $region65: #{tpu_custom_call.1} parent=5 // pred_check
        %p407 = pneg %p406
      $region66: #{tpu_custom_call.1} parent=5 // pred_check_branch
        %409 = sbr.rel (%p407) target = $region68
      $region67: #{tpu_custom_call.1} parent=5 // pred_region
        // Predicated region
        $region69: #{tpu_custom_call.1} parent=67 // pred_check
          %p410 = pneg %p47
        $region70: #{tpu_custom_call.1} parent=67 // pred_check_branch
          %412 = sbr.rel (%p410) target = $region72
        $region71: #{tpu_custom_call.1} parent=67 // pred_region
          %s413 = sand.u32 %s37, 1
          %s414 = scalar_lea.sflag [#allocation4], %s413
          %s415 = sand.u32 %s37, 1
          %s416 = smul.addr %s415, 4
          %s417 = scalar_lea.vmem [#allocation3], %s416
          %s419 = ssub.s32 64, 64
          %420 = vsyncadd %s414, %s419
          %s421 = smul.addr %s27, 64
          %s422 = scalar_lea.hbm %s0, %s421
          %s424 = sshll.u32 %s417, 4
          %s425 = int_to_ptr.vmem [resolvable:$true] %s424
          %427 = dma.hbm_to_vmem [thread:$0]  %s422, 64, %s425, %s414
        $region72: #{tpu_custom_call.1} parent=67 // pred_fallthru
          _
      $region68: #{tpu_custom_call.1} parent=5 // pred_fallthru
        _
      %p428 = scmp.le.s32.totalorder 1, %s27
      %p429 = scmp.lt.s32.totalorder %s27, 3
      %p430 = pnand %p428, %p429
      %p431 = pneg %p430
      // Predicated region
      $region73: #{tpu_custom_call.1} parent=5 // pred_check
        _
      $region74: #{tpu_custom_call.1} parent=5 // pred_check_branch
        %433 = sbr.rel (%p430) target = $region76
      $region75: #{tpu_custom_call.1} parent=5 // pred_region
        %s434 = ssub.s32 %s27, 1
        %s435 = sand.u32 %s40, 1
        %s436 = scalar_lea.sflag [#allocation4], %s435
        %s437 = sand.u32 %s40, 1
        %s438 = smul.addr %s437, 4
        %s439 = scalar_lea.vmem [#allocation3], %s438
        // Predicated region
        $region77: #{tpu_custom_call.1} parent=75 // pred_check
          %p440 = pneg %p53
        $region78: #{tpu_custom_call.1} parent=75 // pred_check_branch
          %442 = sbr.rel (%p440) target = $region80
        $region79: #{tpu_custom_call.1} parent=75 // pred_region
          %443 = dma.done %s436, 64
        $region80: #{tpu_custom_call.1} parent=75 // pred_fallthru
          _
        %s444 = sand.u32 %s40, 1
        %s445 = scalar_lea.sflag [#allocation4], %s444
        %s446 = sand.u32 %s40, 1
        %s447 = smul.addr %s446, 4
        %s448 = scalar_lea.vmem [#allocation3], %s447
        %p449 = pneg %p53
        %p450 = pneg %p50
        %p451 = pneg %p74
        %p452 = pneg %p71
        %p453 = pneg %p95
        %p454 = pneg %p92
        %p455 = pneg %p116
        %p456 = pneg %p113
        %p457 = pneg %p137
        %p458 = pneg %p134
        %p459 = pneg %p158
        %p460 = pneg %p155
        %p461 = pneg %p179
        %p462 = pneg %p176
        %p463 = pneg %p200
        %p464 = pneg %p197
        %p465 = pneg %p221
        %p466 = pneg %p218
        %p467 = pneg %p242
        %p468 = pneg %p239
        %p469 = pneg %p263
        %p470 = pneg %p260
        %p471 = pneg %p284
        %p472 = pneg %p281
        %p473 = pneg %p305
        %p474 = pneg %p302
        %p475 = pneg %p326
        %p476 = pneg %p323
        %p477 = pneg %p352
        %p478 = pneg %p349
        %s479 = sand.u32 %s339, 1
        %s480 = scalar_lea.sflag [#allocation5], %s479
        %s481 = sand.u32 %s339, 1
        %s482 = smul.addr %s481, 8
        %s483 = scalar_lea.vmem [#allocation6], %s482
        %v485 = vld [vmem:[%s439] sm:$0xf]
        %v486 = vld [vmem:[%s2] sm:$0xf]
        %v487 = vld [vmem:[%s2 + $0x4] sm:$0xf]
        %v488 = vld [vmem:[%s2 + $0x8] sm:$0xf]
        %v489 = vld [vmem:[%s2 + $0xc] sm:$0xf]
        %v490 = vld [vmem:[%s3] sm:$0x1]
        %v492 = vlaneseq
        %v493 = vshrl.u32 %v492, 7
        %v494 = vsub.s32 0, %v493
        %v495 = vrot.slane %v490, %v494
        %v501 = vunpack.c.l.b16 %v486
        %v502 = vunpack.c.l.b16 %v487
        %v503 = vunpack.c.l.b16 %v488
        %v504 = vunpack.c.l.b16 %v489
        %v505 = vpack.c.b16 %v502, %v501
        %v506 = vpack.c.b16 %v504, %v503
        %vm509 = vcmask 261120
        %v511 = vsel %vm509, %v485, 0
        %513 = vmatprep.subr.bf16.mxu0 0
        %514 = vmatpush1.bf16.msra.mxu0 %v505
        %515 = vmatprep.subr.bf16.mxu0 0
        %516 = vmatpush1.bf16.msra.mxu0 %v506
        %517 = vmatprep.subr.bf16.mxu0 0
        %518 = vmatpush1.bf16.msra.mxu0 0
        %519 = vmatprep.subr.bf16.mxu0 0
        %520 = vmatpush1.bf16.msra.mxu0 0
        %521 = vmatprep.subr.bf16.mxu0 0
        %522 = vmatpush1.bf16.msra.mxu0 0
        %523 = vmatprep.subr.bf16.mxu0 0
        %524 = vmatpush1.bf16.msra.mxu0 0
        %525 = vmatprep.subr.bf16.mxu0 0
        %526 = vmatpush1.bf16.msra.mxu0 0
        %527 = vmatprep.subr.bf16.mxu0 0
        %528 = vmatpush1.bf16.msra.mxu0 0
        %529 = vmatprep.subr.bf16.mxu0 0
        %530 = vmatpush1.bf16.msra.mxu0 0
        %531 = vmatprep.subr.bf16.mxu0 0
        %532 = vmatpush1.bf16.msra.mxu0 0
        %533 = vmatprep.subr.bf16.mxu0 0
        %534 = vmatpush1.bf16.msra.mxu0 0
        %535 = vmatprep.subr.bf16.mxu0 0
        %536 = vmatpush1.bf16.msra.mxu0 0
        %537 = vmatprep.subr.bf16.mxu0 0
        %538 = vmatpush1.bf16.msra.mxu0 0
        %539 = vmatprep.subr.bf16.mxu0 0
        %540 = vmatpush1.bf16.msra.mxu0 0
        %541 = vmatprep.subr.bf16.mxu0 0
        %542 = vmatpush1.bf16.msra.mxu0 0
        %543 = vmatprep.subr.bf16.mxu0 0
        %544 = vmatpush1.bf16.msra.mxu0 0
        %545 = vmatprep.mubr.bf16.mxu0 0
        %546 = vmatmul.mubr.bf16.gmra.mrb[0].mxu0 %v511
        %v547 = vpop.f32.mrb[0].mxu0
        %v548 = vadd.f32 %v495, %v547
        %v549 = vpop.f32.mrb[0].mxu0
        %v550 = vpop.f32.mrb[0].mxu0
        %v551 = vpop.f32.mrb[0].mxu0
        %552 = vdwg.mxu0
        %s553 = sld [smem:[#allocation2]]
        %s554 = smul.f32 %s553, 2.828427
        %v555 = vstv %s554
        %v556 = vrcp.pop %v555
        %s557 = vtos %v556
        %v558 = vstv %s557
        %v559 = vmul.f32 %v548, %v558
        %v560 = vpack.c.bf16 %v559, %v559
        %v561 = vpack.c.bf16 %v548, %v548
        %v562 = vlaneseq
        %v563 = vshrl.u32 %v562, 7
        %v564 = vlaneseq
        %v565 = vand.u32 %v564, 127
        %vm566 = vcmp.eq.s32.totalorder %v563, %v565
        %v567 = vsel %vm566, -1e+30, 0.0
        %vm568 = vcmask 64512
        %v570 = vsel %vm568, %v560, 0
        %v572 = vsel %vm568, %v485, 0
        %574 = vmatprep.subr.bf16.mxu0 0
        %575 = vmatpush1.bf16.xpose.msra.mxu0 %v572
        %576 = vmatprep.subr.bf16.mxu0 0
        %577 = vmatpush1.bf16.xpose.msra.mxu0 0
        %578 = vmatprep.subr.bf16.mxu0 0
        %579 = vmatpush1.bf16.xpose.msra.mxu0 0
        %580 = vmatprep.subr.bf16.mxu0 0
        %581 = vmatpush1.bf16.xpose.msra.mxu0 0
        %582 = vmatprep.subr.bf16.mxu0 0
        %583 = vmatpush1.bf16.xpose.msra.mxu0 0
        %584 = vmatprep.subr.bf16.mxu0 0
        %585 = vmatpush1.bf16.xpose.msra.mxu0 0
        %586 = vmatprep.subr.bf16.mxu0 0
        %587 = vmatpush1.bf16.xpose.msra.mxu0 0
        %588 = vmatprep.subr.bf16.mxu0 0
        %589 = vmatpush1.bf16.xpose.msra.mxu0 0
        %590 = vmatprep.subr.bf16.mxu0 0
        %591 = vmatpush1.bf16.xpose.msra.mxu0 0
        %592 = vmatprep.subr.bf16.mxu0 0
        %593 = vmatpush1.bf16.xpose.msra.mxu0 0
        %594 = vmatprep.subr.bf16.mxu0 0
        %595 = vmatpush1.bf16.xpose.msra.mxu0 0
        %596 = vmatprep.subr.bf16.mxu0 0
        %597 = vmatpush1.bf16.xpose.msra.mxu0 0
        %598 = vmatprep.subr.bf16.mxu0 0
        %599 = vmatpush1.bf16.xpose.msra.mxu0 0
        %600 = vmatprep.subr.bf16.mxu0 0
        %601 = vmatpush1.bf16.xpose.msra.mxu0 0
        %602 = vmatprep.subr.bf16.mxu0 0
        %603 = vmatpush1.bf16.xpose.msra.mxu0 0
        %604 = vmatprep.subr.bf16.mxu0 0
        %605 = vmatpush1.bf16.xpose.msra.mxu0 0
        %606 = vmatprep.mubr.bf16.mxu0 0
        %607 = vmatmul.mubr.bf16.gmra.mrb[0].mxu0 %v570
        %v608 = vpop.f32.mrb[0].mxu0
        %v609 = vadd.f32 %v567, %v608
        %v610 = vpop.f32.mrb[0].mxu0
        %v611 = vpop.f32.mrb[0].mxu0
        %v612 = vpop.f32.mrb[0].mxu0
        %613 = vdwg.mxu0
        %v614 = vsel %vm568, %v609, -inf
        %615 = vmax.xlane.f32.xlu0 %v614
        %v616 = vpop.xlane.xlu0 %615
        %v617 = vsub.f32 %v609, %v616
        %v618 = vmul.f32 %v617, 1.442695
        %v619 = vpow.pop %v618
        %v620 = vsel %vm568, %v619, 0.0
        %621 = vadd.xlane.f32.xlu0 %v620
        %v622 = vpop.xlane.xlu0 %621
        %v623 = vrcp.pop %v622
        %v624 = vmul.f32 %v619, %v623
        %v625 = vpack.c.bf16 %v624, %v624
        %627 = vrot.lane.b32.xlu0 %v561, 96
        %v628 = vpop.permute.xlu0 %627
        %v630 = vsel %vm568, %v625, 0
        %vm632 = vcmask 1043456
        %v634 = vsel %vm632, %v628, 0
        %636 = vmatprep.subr.bf16.mxu0 0
        %637 = vmatpush1.bf16.msra.mxu0 %v634
        %638 = vmatprep.subr.bf16.mxu0 0
        %639 = vmatpush1.bf16.msra.mxu0 0
        %640 = vmatprep.subr.bf16.mxu0 0
        %641 = vmatpush1.bf16.msra.mxu0 0
        %642 = vmatprep.subr.bf16.mxu0 0
        %643 = vmatpush1.bf16.msra.mxu0 0
        %644 = vmatprep.subr.bf16.mxu0 0
        %645 = vmatpush1.bf16.msra.mxu0 0
        %646 = vmatprep.subr.bf16.mxu0 0
        %647 = vmatpush1.bf16.msra.mxu0 0
        %648 = vmatprep.subr.bf16.mxu0 0
        %649 = vmatpush1.bf16.msra.mxu0 0
        %650 = vmatprep.subr.bf16.mxu0 0
        %651 = vmatpush1.bf16.msra.mxu0 0
        %652 = vmatprep.subr.bf16.mxu0 0
        %653 = vmatpush1.bf16.msra.mxu0 0
        %654 = vmatprep.subr.bf16.mxu0 0
        %655 = vmatpush1.bf16.msra.mxu0 0
        %656 = vmatprep.subr.bf16.mxu0 0
        %657 = vmatpush1.bf16.msra.mxu0 0
        %658 = vmatprep.subr.bf16.mxu0 0
        %659 = vmatpush1.bf16.msra.mxu0 0
        %660 = vmatprep.subr.bf16.mxu0 0
        %661 = vmatpush1.bf16.msra.mxu0 0
        %662 = vmatprep.subr.bf16.mxu0 0
        %663 = vmatpush1.bf16.msra.mxu0 0
        %664 = vmatprep.subr.bf16.mxu0 0
        %665 = vmatpush1.bf16.msra.mxu0 0
        %666 = vmatprep.subr.bf16.mxu0 0
        %667 = vmatpush1.bf16.msra.mxu0 0
        %668 = vmatprep.mubr.bf16.mxu0 0
        %669 = vmatmul.mubr.bf16.gmra.mrb[0].mxu0 %v630
        %v670 = vpop.f32.mrb[0].mxu0
        %v671 = vadd.f32 0.0, %v670
        %v672 = vpop.f32.mrb[0].mxu0
        %v673 = vpop.f32.mrb[0].mxu0
        %v674 = vpop.f32.mrb[0].mxu0
        %675 = vdwg.mxu0
        %v676 = vpack.c.bf16 %v671, %v671
        %v677 = vld [vmem:[%s4] sm:$0xf]
        %679 = vrot.lane.b32.xlu0 %v560, 120
        %v680 = vpop.permute.xlu0 %679
        %v682 = vunpack.c.l.b16 %v485
        %v683 = vpack.c.b16 %v682, %v682
        %684 = vrot.lane.b32.xlu0 %v683, 120
        %v685 = vpop.permute.xlu0 %684
        %v687 = vsel %vm568, %v680, 0
        %v690 = vsel %vm568, %v685, 0
        %692 = vmatprep.subr.bf16.mxu0 0
        %693 = vmatpush1.bf16.xpose.msra.mxu0 %v690
        %694 = vmatprep.subr.bf16.mxu0 0
        %695 = vmatpush1.bf16.xpose.msra.mxu0 0
        %696 = vmatprep.subr.bf16.mxu0 0
        %697 = vmatpush1.bf16.xpose.msra.mxu0 0
        %698 = vmatprep.subr.bf16.mxu0 0
        %699 = vmatpush1.bf16.xpose.msra.mxu0 0
        %700 = vmatprep.subr.bf16.mxu0 0
        %701 = vmatpush1.bf16.xpose.msra.mxu0 0
        %702 = vmatprep.subr.bf16.mxu0 0
        %703 = vmatpush1.bf16.xpose.msra.mxu0 0
        %704 = vmatprep.subr.bf16.mxu0 0
        %705 = vmatpush1.bf16.xpose.msra.mxu0 0
        %706 = vmatprep.subr.bf16.mxu0 0
        %707 = vmatpush1.bf16.xpose.msra.mxu0 0
        %708 = vmatprep.subr.bf16.mxu0 0
        %709 = vmatpush1.bf16.xpose.msra.mxu0 0
        %710 = vmatprep.subr.bf16.mxu0 0
        %711 = vmatpush1.bf16.xpose.msra.mxu0 0
        %712 = vmatprep.subr.bf16.mxu0 0
        %713 = vmatpush1.bf16.xpose.msra.mxu0 0
        %714 = vmatprep.subr.bf16.mxu0 0
        %715 = vmatpush1.bf16.xpose.msra.mxu0 0
        %716 = vmatprep.subr.bf16.mxu0 0
        %717 = vmatpush1.bf16.xpose.msra.mxu0 0
        %718 = vmatprep.subr.bf16.mxu0 0
        %719 = vmatpush1.bf16.xpose.msra.mxu0 0
        %720 = vmatprep.subr.bf16.mxu0 0
        %721 = vmatpush1.bf16.xpose.msra.mxu0 0
        %722 = vmatprep.subr.bf16.mxu0 0
        %723 = vmatpush1.bf16.xpose.msra.mxu0 0
        %724 = vmatprep.mubr.bf16.mxu0 0
        %725 = vmatmul.mubr.bf16.gmra.mrb[0].mxu0 %v687
        %v726 = vpop.f32.mrb[0].mxu0
        %v727 = vadd.f32 %v567, %v726
        %v728 = vpop.f32.mrb[0].mxu0
        %v729 = vpop.f32.mrb[0].mxu0
        %v730 = vpop.f32.mrb[0].mxu0
        %731 = vdwg.mxu0
        %v732 = vsel %vm568, %v727, -inf
        %733 = vmax.xlane.f32.xlu0 %v732
        %v734 = vpop.xlane.xlu0 %733
        %v735 = vsub.f32 %v727, %v734
        %v736 = vmul.f32 %v735, 1.442695
        %v737 = vpow.pop %v736
        %v738 = vsel %vm568, %v737, 0.0
        %739 = vadd.xlane.f32.xlu0 %v738
        %v740 = vpop.xlane.xlu0 %739
        %v741 = vrcp.pop %v740
        %v742 = vmul.f32 %v737, %v741
        %v743 = vpack.c.bf16 %v742, %v742
        %744 = vrot.lane.b32.xlu0 %v561, 88
        %v745 = vpop.permute.xlu0 %744
        %v747 = vsel %vm568, %v743, 0
        %v750 = vsel %vm632, %v745, 0
        %752 = vmatprep.subr.bf16.mxu0 0
        %753 = vmatpush1.bf16.msra.mxu0 %v750
        %754 = vmatprep.subr.bf16.mxu0 0
        %755 = vmatpush1.bf16.msra.mxu0 0
        %756 = vmatprep.subr.bf16.mxu0 0
        %757 = vmatpush1.bf16.msra.mxu0 0
        %758 = vmatprep.subr.bf16.mxu0 0
        %759 = vmatpush1.bf16.msra.mxu0 0
        %760 = vmatprep.subr.bf16.mxu0 0
        %761 = vmatpush1.bf16.msra.mxu0 0
        %762 = vmatprep.subr.bf16.mxu0 0
        %763 = vmatpush1.bf16.msra.mxu0 0
        %764 = vmatprep.subr.bf16.mxu0 0
        %765 = vmatpush1.bf16.msra.mxu0 0
        %766 = vmatprep.subr.bf16.mxu0 0
        %767 = vmatpush1.bf16.msra.mxu0 0
        %768 = vmatprep.subr.bf16.mxu0 0
        %769 = vmatpush1.bf16.msra.mxu0 0
        %770 = vmatprep.subr.bf16.mxu0 0
        %771 = vmatpush1.bf16.msra.mxu0 0
        %772 = vmatprep.subr.bf16.mxu0 0
        %773 = vmatpush1.bf16.msra.mxu0 0
        %774 = vmatprep.subr.bf16.mxu0 0
        %775 = vmatpush1.bf16.msra.mxu0 0
        %776 = vmatprep.subr.bf16.mxu0 0
        %777 = vmatpush1.bf16.msra.mxu0 0
        %778 = vmatprep.subr.bf16.mxu0 0
        %779 = vmatpush1.bf16.msra.mxu0 0
        %780 = vmatprep.subr.bf16.mxu0 0
        %781 = vmatpush1.bf16.msra.mxu0 0
        %782 = vmatprep.subr.bf16.mxu0 0
        %783 = vmatpush1.bf16.msra.mxu0 0
        %784 = vmatprep.mubr.bf16.mxu0 0
        %785 = vmatmul.mubr.bf16.gmra.mrb[0].mxu0 %v747
        %v786 = vpop.f32.mrb[0].mxu0
        %v787 = vadd.f32 0.0, %v786
        %v788 = vpop.f32.mrb[0].mxu0
        %v789 = vpop.f32.mrb[0].mxu0
        %v790 = vpop.f32.mrb[0].mxu0
        %791 = vdwg.mxu0
        %v792 = vpack.c.bf16 %v787, %v787
        %v793 = vld [vmem:[%s4 + $0x4] sm:$0xf]
        %v795 = vsel %vm568, %v792, 0
        %v798 = vsel %vm632, %v793, 0
        %800 = vmatprep.subr.bf16.mxu0 0
        %801 = vmatpush1.bf16.msra.mxu0 %v798
        %802 = vmatprep.subr.bf16.mxu0 0
        %803 = vmatpush1.bf16.msra.mxu0 0
        %804 = vmatprep.subr.bf16.mxu0 0
        %805 = vmatpush1.bf16.msra.mxu0 0
        %806 = vmatprep.subr.bf16.mxu0 0
        %807 = vmatpush1.bf16.msra.mxu0 0
        %808 = vmatprep.subr.bf16.mxu0 0
        %809 = vmatpush1.bf16.msra.mxu0 0
        %810 = vmatprep.subr.bf16.mxu0 0
        %811 = vmatpush1.bf16.msra.mxu0 0
        %812 = vmatprep.subr.bf16.mxu0 0
        %813 = vmatpush1.bf16.msra.mxu0 0
        %814 = vmatprep.subr.bf16.mxu0 0
        %815 = vmatpush1.bf16.msra.mxu0 0
        %816 = vmatprep.subr.bf16.mxu0 0
        %817 = vmatpush1.bf16.msra.mxu0 0
        %818 = vmatprep.subr.bf16.mxu0 0
        %819 = vmatpush1.bf16.msra.mxu0 0
        %820 = vmatprep.subr.bf16.mxu0 0
        %821 = vmatpush1.bf16.msra.mxu0 0
        %822 = vmatprep.subr.bf16.mxu0 0
        %823 = vmatpush1.bf16.msra.mxu0 0
        %824 = vmatprep.subr.bf16.mxu0 0
        %825 = vmatpush1.bf16.msra.mxu0 0
        %826 = vmatprep.subr.bf16.mxu0 0
        %827 = vmatpush1.bf16.msra.mxu0 0
        %828 = vmatprep.subr.bf16.mxu0 0
        %829 = vmatpush1.bf16.msra.mxu0 0
        %830 = vmatprep.subr.bf16.mxu0 0
        %831 = vmatpush1.bf16.msra.mxu0 0
        %832 = vmatprep.mubr.bf16.mxu0 0
        %833 = vmatmul.mubr.bf16.gmra.mrb[0].mxu0 %v795
        %v834 = vpop.f32.mrb[0].mxu0
        %v835 = vadd.f32 0.0, %v834
        %v836 = vpop.f32.mrb[0].mxu0
        %v837 = vpop.f32.mrb[0].mxu0
        %v838 = vpop.f32.mrb[0].mxu0
        %839 = vdwg.mxu0
        %v841 = vsel %vm568, %v676, 0
        %v844 = vsel %vm632, %v677, 0
        %846 = vmatprep.subr.bf16.mxu0 0
        %847 = vmatpush1.bf16.msra.mxu0 %v844
        %848 = vmatprep.subr.bf16.mxu0 0
        %849 = vmatpush1.bf16.msra.mxu0 0
        %850 = vmatprep.subr.bf16.mxu0 0
        %851 = vmatpush1.bf16.msra.mxu0 0
        %852 = vmatprep.subr.bf16.mxu0 0
        %853 = vmatpush1.bf16.msra.mxu0 0
        %854 = vmatprep.subr.bf16.mxu0 0
        %855 = vmatpush1.bf16.msra.mxu0 0
        %856 = vmatprep.subr.bf16.mxu0 0
        %857 = vmatpush1.bf16.msra.mxu0 0
        %858 = vmatprep.subr.bf16.mxu0 0
        %859 = vmatpush1.bf16.msra.mxu0 0
        %860 = vmatprep.subr.bf16.mxu0 0
        %861 = vmatpush1.bf16.msra.mxu0 0
        %862 = vmatprep.subr.bf16.mxu0 0
        %863 = vmatpush1.bf16.msra.mxu0 0
        %864 = vmatprep.subr.bf16.mxu0 0
        %865 = vmatpush1.bf16.msra.mxu0 0
        %866 = vmatprep.subr.bf16.mxu0 0
        %867 = vmatpush1.bf16.msra.mxu0 0
        %868 = vmatprep.subr.bf16.mxu0 0
        %869 = vmatpush1.bf16.msra.mxu0 0
        %870 = vmatprep.subr.bf16.mxu0 0
        %871 = vmatpush1.bf16.msra.mxu0 0
        %872 = vmatprep.subr.bf16.mxu0 0
        %873 = vmatpush1.bf16.msra.mxu0 0
        %874 = vmatprep.subr.bf16.mxu0 0
        %875 = vmatpush1.bf16.msra.mxu0 0
        %876 = vmatprep.subr.bf16.mxu0 0
        %877 = vmatpush1.bf16.msra.mxu0 0
        %878 = vmatprep.mubr.bf16.mxu0 0
        %879 = vmatmul.mubr.bf16.gmra.mrb[0].mxu0 %v841
        %v880 = vpop.f32.mrb[0].mxu0
        %v881 = vadd.f32 %v835, %v880
        %v882 = vpop.f32.mrb[0].mxu0
        %v883 = vpop.f32.mrb[0].mxu0
        %v884 = vpop.f32.mrb[0].mxu0
        %885 = vdwg.mxu0
        %886 = vrot.lane.b32.xlu0 %v560, 112
        %v887 = vpop.permute.xlu0 %886
        %888 = vrot.lane.b32.xlu0 %v683, 112
        %v889 = vpop.permute.xlu0 %888
        %v891 = vsel %vm568, %v887, 0
        %v894 = vsel %vm568, %v889, 0
        %896 = vmatprep.subr.bf16.mxu0 0
        %897 = vmatpush1.bf16.xpose.msra.mxu0 %v894
        %898 = vmatprep.subr.bf16.mxu0 0
        %899 = vmatpush1.bf16.xpose.msra.mxu0 0
        %900 = vmatprep.subr.bf16.mxu0 0
        %901 = vmatpush1.bf16.xpose.msra.mxu0 0
        %902 = vmatprep.subr.bf16.mxu0 0
        %903 = vmatpush1.bf16.xpose.msra.mxu0 0
        %904 = vmatprep.subr.bf16.mxu0 0
        %905 = vmatpush1.bf16.xpose.msra.mxu0 0
        %906 = vmatprep.subr.bf16.mxu0 0
        %907 = vmatpush1.bf16.xpose.msra.mxu0 0
        %908 = vmatprep.subr.bf16.mxu0 0
        %909 = vmatpush1.bf16.xpose.msra.mxu0 0
        %910 = vmatprep.subr.bf16.mxu0 0
        %911 = vmatpush1.bf16.xpose.msra.mxu0 0
        %912 = vmatprep.subr.bf16.mxu0 0
        %913 = vmatpush1.bf16.xpose.msra.mxu0 0
        %914 = vmatprep.subr.bf16.mxu0 0
        %915 = vmatpush1.bf16.xpose.msra.mxu0 0
        %916 = vmatprep.subr.bf16.mxu0 0
        %917 = vmatpush1.bf16.xpose.msra.mxu0 0
        %918 = vmatprep.subr.bf16.mxu0 0
        %919 = vmatpush1.bf16.xpose.msra.mxu0 0
        %920 = vmatprep.subr.bf16.mxu0 0
        %921 = vmatpush1.bf16.xpose.msra.mxu0 0
        %922 = vmatprep.subr.bf16.mxu0 0
        %923 = vmatpush1.bf16.xpose.msra.mxu0 0
        %924 = vmatprep.subr.bf16.mxu0 0
        %925 = vmatpush1.bf16.xpose.msra.mxu0 0
        %926 = vmatprep.subr.bf16.mxu0 0
        %927 = vmatpush1.bf16.xpose.msra.mxu0 0
        %928 = vmatprep.mubr.bf16.mxu0 0
        %929 = vmatmul.mubr.bf16.gmra.mrb[0].mxu0 %v891
        %v930 = vpop.f32.mrb[0].mxu0
        %v931 = vadd.f32 %v567, %v930
        %v932 = vpop.f32.mrb[0].mxu0
        %v933 = vpop.f32.mrb[0].mxu0
        %v934 = vpop.f32.mrb[0].mxu0
        %935 = vdwg.mxu0
        %v936 = vsel %vm568, %v931, -inf
        %937 = vmax.xlane.f32.xlu0 %v936
        %v938 = vpop.xlane.xlu0 %937
        %v939 = vsub.f32 %v931, %v938
        %v940 = vmul.f32 %v939, 1.442695
        %v941 = vpow.pop %v940
        %v942 = vsel %vm568, %v941, 0.0
        %943 = vadd.xlane.f32.xlu0 %v942
        %v944 = vpop.xlane.xlu0 %943
        %v945 = vrcp.pop %v944
        %v946 = vmul.f32 %v941, %v945
        %v947 = vpack.c.bf16 %v946, %v946
        %948 = vrot.lane.b32.xlu0 %v561, 80
        %v949 = vpop.permute.xlu0 %948
        %v951 = vsel %vm568, %v947, 0
        %v954 = vsel %vm632, %v949, 0
        %956 = vmatprep.subr.bf16.mxu0 0
        %957 = vmatpush1.bf16.msra.mxu0 %v954
        %958 = vmatprep.subr.bf16.mxu0 0
        %959 = vmatpush1.bf16.msra.mxu0 0
        %960 = vmatprep.subr.bf16.mxu0 0
        %961 = vmatpush1.bf16.msra.mxu0 0
        %962 = vmatprep.subr.bf16.mxu0 0
        %963 = vmatpush1.bf16.msra.mxu0 0
        %964 = vmatprep.subr.bf16.mxu0 0
        %965 = vmatpush1.bf16.msra.mxu0 0
        %966 = vmatprep.subr.bf16.mxu0 0
        %967 = vmatpush1.bf16.msra.mxu0 0
        %968 = vmatprep.subr.bf16.mxu0 0
        %969 = vmatpush1.bf16.msra.mxu0 0
        %970 = vmatprep.subr.bf16.mxu0 0
        %971 = vmatpush1.bf16.msra.mxu0 0
        %972 = vmatprep.subr.bf16.mxu0 0
        %973 = vmatpush1.bf16.msra.mxu0 0
        %974 = vmatprep.subr.bf16.mxu0 0
        %975 = vmatpush1.bf16.msra.mxu0 0
        %976 = vmatprep.subr.bf16.mxu0 0
        %977 = vmatpush1.bf16.msra.mxu0 0
        %978 = vmatprep.subr.bf16.mxu0 0
        %979 = vmatpush1.bf16.msra.mxu0 0
        %980 = vmatprep.subr.bf16.mxu0 0
        %981 = vmatpush1.bf16.msra.mxu0 0
        %982 = vmatprep.subr.bf16.mxu0 0
        %983 = vmatpush1.bf16.msra.mxu0 0
        %984 = vmatprep.subr.bf16.mxu0 0
        %985 = vmatpush1.bf16.msra.mxu0 0
        %986 = vmatprep.subr.bf16.mxu0 0
        %987 = vmatpush1.bf16.msra.mxu0 0
        %988 = vmatprep.mubr.bf16.mxu0 0
        %989 = vmatmul.mubr.bf16.gmra.mrb[0].mxu0 %v951
        %v990 = vpop.f32.mrb[0].mxu0
        %v991 = vadd.f32 0.0, %v990
        %v992 = vpop.f32.mrb[0].mxu0
        %v993 = vpop.f32.mrb[0].mxu0
        %v994 = vpop.f32.mrb[0].mxu0
        %995 = vdwg.mxu0
        %v996 = vpack.c.bf16 %v991, %v991
        %v997 = vld [vmem:[%s4 + $0x8] sm:$0xf]
        %v999 = vsel %vm568, %v996, 0
        %v1002 = vsel %vm632, %v997, 0
        %1004 = vmatprep.subr.bf16.mxu0 0
        %1005 = vmatpush1.bf16.msra.mxu0 %v1002
        %1006 = vmatprep.subr.bf16.mxu0 0
        %1007 = vmatpush1.bf16.msra.mxu0 0
        %1008 = vmatprep.subr.bf16.mxu0 0
        %1009 = vmatpush1.bf16.msra.mxu0 0
        %1010 = vmatprep.subr.bf16.mxu0 0
        %1011 = vmatpush1.bf16.msra.mxu0 0
        %1012 = vmatprep.subr.bf16.mxu0 0
        %1013 = vmatpush1.bf16.msra.mxu0 0
        %1014 = vmatprep.subr.bf16.mxu0 0
        %1015 = vmatpush1.bf16.msra.mxu0 0
        %1016 = vmatprep.subr.bf16.mxu0 0
        %1017 = vmatpush1.bf16.msra.mxu0 0
        %1018 = vmatprep.subr.bf16.mxu0 0
        %1019 = vmatpush1.bf16.msra.mxu0 0
        %1020 = vmatprep.subr.bf16.mxu0 0
        %1021 = vmatpush1.bf16.msra.mxu0 0
        %1022 = vmatprep.subr.bf16.mxu0 0
        %1023 = vmatpush1.bf16.msra.mxu0 0
        %1024 = vmatprep.subr.bf16.mxu0 0
        %1025 = vmatpush1.bf16.msra.mxu0 0
        %1026 = vmatprep.subr.bf16.mxu0 0
        %1027 = vmatpush1.bf16.msra.mxu0 0
        %1028 = vmatprep.subr.bf16.mxu0 0
        %1029 = vmatpush1.bf16.msra.mxu0 0
        %1030 = vmatprep.subr.bf16.mxu0 0
        %1031 = vmatpush1.bf16.msra.mxu0 0
        %1032 = vmatprep.subr.bf16.mxu0 0
        %1033 = vmatpush1.bf16.msra.mxu0 0
        %1034 = vmatprep.subr.bf16.mxu0 0
        %1035 = vmatpush1.bf16.msra.mxu0 0
        %1036 = vmatprep.mubr.bf16.mxu0 0
        %1037 = vmatmul.mubr.bf16.gmra.mrb[0].mxu0 %v999
        %v1038 = vpop.f32.mrb[0].mxu0
        %v1039 = vadd.f32 0.0, %v1038
        %v1040 = vpop.f32.mrb[0].mxu0
        %v1041 = vpop.f32.mrb[0].mxu0
        %v1042 = vpop.f32.mrb[0].mxu0
        %1043 = vdwg.mxu0
        %v1044 = vadd.f32 %v881, %v1039
        %1045 = vrot.lane.b32.xlu0 %v560, 104
        %v1046 = vpop.permute.xlu0 %1045
        %1047 = vrot.lane.b32.xlu0 %v683, 104
        %v1048 = vpop.permute.xlu0 %1047
        %v1050 = vsel %vm568, %v1046, 0
        %v1053 = vsel %vm568, %v1048, 0
        %1055 = vmatprep.subr.bf16.mxu0 0
        %1056 = vmatpush1.bf16.xpose.msra.mxu0 %v1053
        %1057 = vmatprep.subr.bf16.mxu0 0
        %1058 = vmatpush1.bf16.xpose.msra.mxu0 0
        %1059 = vmatprep.subr.bf16.mxu0 0
        %1060 = vmatpush1.bf16.xpose.msra.mxu0 0
        %1061 = vmatprep.subr.bf16.mxu0 0
        %1062 = vmatpush1.bf16.xpose.msra.mxu0 0
        %1063 = vmatprep.subr.bf16.mxu0 0
        %1064 = vmatpush1.bf16.xpose.msra.mxu0 0
        %1065 = vmatprep.subr.bf16.mxu0 0
        %1066 = vmatpush1.bf16.xpose.msra.mxu0 0
        %1067 = vmatprep.subr.bf16.mxu0 0
        %1068 = vmatpush1.bf16.xpose.msra.mxu0 0
        %1069 = vmatprep.subr.bf16.mxu0 0
        %1070 = vmatpush1.bf16.xpose.msra.mxu0 0
        %1071 = vmatprep.subr.bf16.mxu0 0
        %1072 = vmatpush1.bf16.xpose.msra.mxu0 0
        %1073 = vmatprep.subr.bf16.mxu0 0
        %1074 = vmatpush1.bf16.xpose.msra.mxu0 0
        %1075 = vmatprep.subr.bf16.mxu0 0
        %1076 = vmatpush1.bf16.xpose.msra.mxu0 0
        %1077 = vmatprep.subr.bf16.mxu0 0
        %1078 = vmatpush1.bf16.xpose.msra.mxu0 0
        %1079 = vmatprep.subr.bf16.mxu0 0
        %1080 = vmatpush1.bf16.xpose.msra.mxu0 0
        %1081 = vmatprep.subr.bf16.mxu0 0
        %1082 = vmatpush1.bf16.xpose.msra.mxu0 0
        %1083 = vmatprep.subr.bf16.mxu0 0
        %1084 = vmatpush1.bf16.xpose.msra.mxu0 0
        %1085 = vmatprep.subr.bf16.mxu0 0
        %1086 = vmatpush1.bf16.xpose.msra.mxu0 0
        %1087 = vmatprep.mubr.bf16.mxu0 0
        %1088 = vmatmul.mubr.bf16.gmra.mrb[0].mxu0 %v1050
        %v1089 = vpop.f32.mrb[0].mxu0
        %v1090 = vadd.f32 %v567, %v1089
        %v1091 = vpop.f32.mrb[0].mxu0
        %v1092 = vpop.f32.mrb[0].mxu0
        %v1093 = vpop.f32.mrb[0].mxu0
        %1094 = vdwg.mxu0
        %v1095 = vsel %vm568, %v1090, -inf
        %1096 = vmax.xlane.f32.xlu0 %v1095
        %v1097 = vpop.xlane.xlu0 %1096
        %v1098 = vsub.f32 %v1090, %v1097
        %v1099 = vmul.f32 %v1098, 1.442695
        %v1100 = vpow.pop %v1099
        %v1101 = vsel %vm568, %v1100, 0.0
        %1102 = vadd.xlane.f32.xlu0 %v1101
        %v1103 = vpop.xlane.xlu0 %1102
        %v1104 = vrcp.pop %v1103
        %v1105 = vmul.f32 %v1100, %v1104
        %v1106 = vpack.c.bf16 %v1105, %v1105
        %1107 = vrot.lane.b32.xlu0 %v561, 72
        %v1108 = vpop.permute.xlu0 %1107
        %v1110 = vsel %vm568, %v1106, 0
        %v1113 = vsel %vm632, %v1108, 0
        %1115 = vmatprep.subr.bf16.mxu0 0
        %1116 = vmatpush1.bf16.msra.mxu0 %v1113
        %1117 = vmatprep.subr.bf16.mxu0 0
        %1118 = vmatpush1.bf16.msra.mxu0 0
        %1119 = vmatprep.subr.bf16.mxu0 0
        %1120 = vmatpush1.bf16.msra.mxu0 0
        %1121 = vmatprep.subr.bf16.mxu0 0
        %1122 = vmatpush1.bf16.msra.mxu0 0
        %1123 = vmatprep.subr.bf16.mxu0 0
        %1124 = vmatpush1.bf16.msra.mxu0 0
        %1125 = vmatprep.subr.bf16.mxu0 0
        %1126 = vmatpush1.bf16.msra.mxu0 0
        %1127 = vmatprep.subr.bf16.mxu0 0
        %1128 = vmatpush1.bf16.msra.mxu0 0
        %1129 = vmatprep.subr.bf16.mxu0 0
        %1130 = vmatpush1.bf16.msra.mxu0 0
        %1131 = vmatprep.subr.bf16.mxu0 0
        %1132 = vmatpush1.bf16.msra.mxu0 0
        %1133 = vmatprep.subr.bf16.mxu0 0
        %1134 = vmatpush1.bf16.msra.mxu0 0
        %1135 = vmatprep.subr.bf16.mxu0 0
        %1136 = vmatpush1.bf16.msra.mxu0 0
        %1137 = vmatprep.subr.bf16.mxu0 0
        %1138 = vmatpush1.bf16.msra.mxu0 0
        %1139 = vmatprep.subr.bf16.mxu0 0
        %1140 = vmatpush1.bf16.msra.mxu0 0
        %1141 = vmatprep.subr.bf16.mxu0 0
        %1142 = vmatpush1.bf16.msra.mxu0 0
        %1143 = vmatprep.subr.bf16.mxu0 0
        %1144 = vmatpush1.bf16.msra.mxu0 0
        %1145 = vmatprep.subr.bf16.mxu0 0
        %1146 = vmatpush1.bf16.msra.mxu0 0
        %1147 = vmatprep.mubr.bf16.mxu0 0
        %1148 = vmatmul.mubr.bf16.gmra.mrb[0].mxu0 %v1110
        %v1149 = vpop.f32.mrb[0].mxu0
        %v1150 = vadd.f32 0.0, %v1149
        %v1151 = vpop.f32.mrb[0].mxu0
        %v1152 = vpop.f32.mrb[0].mxu0
        %v1153 = vpop.f32.mrb[0].mxu0
        %1154 = vdwg.mxu0
        %v1155 = vpack.c.bf16 %v1150, %v1150
        %v1156 = vld [vmem:[%s4 + $0xc] sm:$0xf]
        %v1158 = vsel %vm568, %v1155, 0
        %v1161 = vsel %vm632, %v1156, 0
        %1163 = vmatprep.subr.bf16.mxu0 0
        %1164 = vmatpush1.bf16.msra.mxu0 %v1161
        %1165 = vmatprep.subr.bf16.mxu0 0
        %1166 = vmatpush1.bf16.msra.mxu0 0
        %1167 = vmatprep.subr.bf16.mxu0 0
        %1168 = vmatpush1.bf16.msra.mxu0 0
        %1169 = vmatprep.subr.bf16.mxu0 0
        %1170 = vmatpush1.bf16.msra.mxu0 0
        %1171 = vmatprep.subr.bf16.mxu0 0
        %1172 = vmatpush1.bf16.msra.mxu0 0
        %1173 = vmatprep.subr.bf16.mxu0 0
        %1174 = vmatpush1.bf16.msra.mxu0 0
        %1175 = vmatprep.subr.bf16.mxu0 0
        %1176 = vmatpush1.bf16.msra.mxu0 0
        %1177 = vmatprep.subr.bf16.mxu0 0
        %1178 = vmatpush1.bf16.msra.mxu0 0
        %1179 = vmatprep.subr.bf16.mxu0 0
        %1180 = vmatpush1.bf16.msra.mxu0 0
        %1181 = vmatprep.subr.bf16.mxu0 0
        %1182 = vmatpush1.bf16.msra.mxu0 0
        %1183 = vmatprep.subr.bf16.mxu0 0
        %1184 = vmatpush1.bf16.msra.mxu0 0
        %1185 = vmatprep.subr.bf16.mxu0 0
        %1186 = vmatpush1.bf16.msra.mxu0 0
        %1187 = vmatprep.subr.bf16.mxu0 0
        %1188 = vmatpush1.bf16.msra.mxu0 0
        %1189 = vmatprep.subr.bf16.mxu0 0
        %1190 = vmatpush1.bf16.msra.mxu0 0
        %1191 = vmatprep.subr.bf16.mxu0 0
        %1192 = vmatpush1.bf16.msra.mxu0 0
        %1193 = vmatprep.subr.bf16.mxu0 0
        %1194 = vmatpush1.bf16.msra.mxu0 0
        %1195 = vmatprep.mubr.bf16.mxu0 0
        %1196 = vmatmul.mubr.bf16.gmra.mrb[0].mxu0 %v1158
        %v1197 = vpop.f32.mrb[0].mxu0
        %v1198 = vadd.f32 0.0, %v1197
        %v1199 = vpop.f32.mrb[0].mxu0
        %v1200 = vpop.f32.mrb[0].mxu0
        %v1201 = vpop.f32.mrb[0].mxu0
        %1202 = vdwg.mxu0
        %v1203 = vadd.f32 %v1044, %v1198
        %v1204 = vld [vmem:[%s5] sm:$0x1]
        %v1206 = vlaneseq
        %v1207 = vshrl.u32 %v1206, 7
        %v1208 = vsub.s32 0, %v1207
        %v1209 = vrot.slane %v1204, %v1208
        %v1211 = vadd.f32 %v1203, %v1209
        %1213 = vrot.lane.b32.xlu0 %v1211, 32
        %v1214 = vpop.permute.xlu0 %1213
        %v1216 = vadd.f32 %v548, %v1214
        %v1217 = vld [vmem:[%s6] sm:$0x1]
        %v1218 = vld [vmem:[%s7] sm:$0x1]
        %1220 = vrot.lane.b32.xlu0 %v1216, 96
        %v1221 = vpop.permute.xlu0 %1220
        %v1223 = vsel %vm509, %v1221, 0.0
        %1224 = vadd.xlane.f32.xlu0 %v1223
        %v1225 = vpop.xlane.xlu0 %1224
        %v1226 = vrcp.pop 32.0
        %v1227 = vmul.f32 %v1225, %v1226
        %v1228 = vsub.f32 %v1216, %v1227
        %v1229 = vmul.f32 %v1228, %v1228
        %1231 = vrot.lane.b32.xlu0 %v1229, 96
        %v1232 = vpop.permute.xlu0 %1231
        %v1234 = vsel %vm509, %v1232, 0.0
        %1235 = vadd.xlane.f32.xlu0 %v1234
        %v1236 = vpop.xlane.xlu0 %1235
        %v1237 = vmul.f32 %v1236, %v1226
        %v1238 = vadd.f32 %v1237, 1e-05
        %v1239 = vrsqrt.pop %v1238
        %v1240 = vmul.f32 %v1228, %v1239
        %v1242 = vlaneseq
        %v1243 = vshrl.u32 %v1242, 7
        %v1244 = vsub.s32 0, %v1243
        %v1245 = vrot.slane %v1217, %v1244
        %1246 = vrot.lane.b32.xlu0 %v1245, 32
        %v1247 = vpop.permute.xlu0 %1246
        %v1249 = vmul.f32 %v1240, %v1247
        %v1251 = vlaneseq
        %v1252 = vshrl.u32 %v1251, 7
        %v1253 = vsub.s32 0, %v1252
        %v1254 = vrot.slane %v1218, %v1253
        %1255 = vrot.lane.b32.xlu0 %v1254, 32
        %v1256 = vpop.permute.xlu0 %1255
        %v1258 = vadd.f32 %v1249, %v1256
        %v1259 = vpack.c.bf16 %v1258, %v1258
        %v1260 = vld [vmem:[%s8] sm:$0xf]
        %v1261 = vld [vmem:[%s8 + $0x4] sm:$0xf]
        %v1262 = vld [vmem:[%s8 + $0x8] sm:$0xf]
        %v1263 = vld [vmem:[%s8 + $0xc] sm:$0xf]
        %v1264 = vld [vmem:[%s9] sm:$0x1]
        %v1266 = vlaneseq
        %v1267 = vshrl.u32 %v1266, 7
        %v1268 = vsub.s32 0, %v1267
        %v1269 = vrot.slane %v1264, %v1268
        %1272 = vrot.lane.b32.xlu0 %v1259, 96
        %v1273 = vpop.permute.xlu0 %1272
        %v1278 = vunpack.c.l.b16 %v1260
        %v1279 = vunpack.c.l.b16 %v1261
        %v1280 = vunpack.c.l.b16 %v1262
        %v1281 = vunpack.c.l.b16 %v1263
        %v1282 = vpack.c.b16 %v1279, %v1278
        %v1283 = vpack.c.b16 %v1281, %v1280
        %v1287 = vsel %vm509, %v1273, 0
        %1289 = vmatprep.subr.bf16.mxu0 0
        %1290 = vmatpush1.bf16.msra.mxu0 %v1282
        %1291 = vmatprep.subr.bf16.mxu0 0
        %1292 = vmatpush1.bf16.msra.mxu0 %v1283
        %1293 = vmatprep.subr.bf16.mxu0 0
        %1294 = vmatpush1.bf16.msra.mxu0 0
        %1295 = vmatprep.subr.bf16.mxu0 0
        %1296 = vmatpush1.bf16.msra.mxu0 0
        %1297 = vmatprep.subr.bf16.mxu0 0
        %1298 = vmatpush1.bf16.msra.mxu0 0
        %1299 = vmatprep.subr.bf16.mxu0 0
        %1300 = vmatpush1.bf16.msra.mxu0 0
        %1301 = vmatprep.subr.bf16.mxu0 0
        %1302 = vmatpush1.bf16.msra.mxu0 0
        %1303 = vmatprep.subr.bf16.mxu0 0
        %1304 = vmatpush1.bf16.msra.mxu0 0
        %1305 = vmatprep.subr.bf16.mxu0 0
        %1306 = vmatpush1.bf16.msra.mxu0 0
        %1307 = vmatprep.subr.bf16.mxu0 0
        %1308 = vmatpush1.bf16.msra.mxu0 0
        %1309 = vmatprep.subr.bf16.mxu0 0
        %1310 = vmatpush1.bf16.msra.mxu0 0
        %1311 = vmatprep.subr.bf16.mxu0 0
        %1312 = vmatpush1.bf16.msra.mxu0 0
        %1313 = vmatprep.subr.bf16.mxu0 0
        %1314 = vmatpush1.bf16.msra.mxu0 0
        %1315 = vmatprep.subr.bf16.mxu0 0
        %1316 = vmatpush1.bf16.msra.mxu0 0
        %1317 = vmatprep.subr.bf16.mxu0 0
        %1318 = vmatpush1.bf16.msra.mxu0 0
        %1319 = vmatprep.subr.bf16.mxu0 0
        %1320 = vmatpush1.bf16.msra.mxu0 0
        %1321 = vmatprep.mubr.bf16.mxu0 0
        %1322 = vmatmul.mubr.bf16.gmra.mrb[0].mxu0 %v1287
        %v1323 = vpop.f32.mrb[0].mxu0
        %v1324 = vadd.f32 %v1269, %v1323
        %v1325 = vpop.f32.mrb[0].mxu0
        %v1326 = vpop.f32.mrb[0].mxu0
        %v1327 = vpop.f32.mrb[0].mxu0
        %1328 = vdwg.mxu0
        %v1329 = vmul.f32 %v1324, %v1324
        %v1330 = vmul.f32 %v1324, %v1329
        %v1331 = vmul.f32 %v1330, 0.044715
        %v1332 = vadd.f32 %v1324, %v1331
        %v1333 = vmul.f32 %v1332, 0.7978846
        %v1334 = vtanh.pop %v1333
        %v1335 = vadd.f32 %v1334, 1.0
        %v1336 = vmul.f32 %v1335, 0.5
        %v1337 = vmul.f32 %v1324, %v1336
        %v1338 = vpack.c.bf16 %v1337, %v1337
        %v1339 = vld [vmem:[%s10] sm:$0xf]
        %v1340 = vld [vmem:[%s10 + $0x4] sm:$0xf]
        %v1341 = vld [vmem:[%s10 + $0x8] sm:$0xf]
        %v1342 = vld [vmem:[%s10 + $0xc] sm:$0xf]
        %v1343 = vld [vmem:[%s10 + $0x10] sm:$0xf]
        %v1344 = vld [vmem:[%s10 + $0x14] sm:$0xf]
        %v1345 = vld [vmem:[%s10 + $0x18] sm:$0xf]
        %v1346 = vld [vmem:[%s10 + $0x1c] sm:$0xf]
        %v1347 = vld [vmem:[%s11] sm:$0x1]
        %v1349 = vlaneseq
        %v1350 = vshrl.u32 %v1349, 7
        %v1351 = vsub.s32 0, %v1350
        %v1352 = vrot.slane %v1347, %v1351
        %v1362 = vunpack.c.l.b16 %v1339
        %v1363 = vunpack.c.l.b16 %v1340
        %v1364 = vunpack.c.l.b16 %v1341
        %v1365 = vunpack.c.l.b16 %v1342
        %v1366 = vunpack.c.l.b16 %v1343
        %v1367 = vunpack.c.l.b16 %v1344
        %v1368 = vunpack.c.l.b16 %v1345
        %v1369 = vunpack.c.l.b16 %v1346
        %v1370 = vpack.c.b16 %v1363, %v1362
        %v1371 = vpack.c.b16 %v1365, %v1364
        %v1372 = vpack.c.b16 %v1367, %v1366
        %v1373 = vpack.c.b16 %v1369, %v1368
        %vm1378 = vcmask 523264
        %v1380 = vsel %vm1378, %v1338, 0
        %1382 = vmatprep.subr.bf16.mxu0 0
        %1383 = vmatpush1.bf16.msra.mxu0 %v1370
        %1384 = vmatprep.subr.bf16.mxu0 0
        %1385 = vmatpush1.bf16.msra.mxu0 %v1371
        %1386 = vmatprep.subr.bf16.mxu0 0
        %1387 = vmatpush1.bf16.msra.mxu0 %v1372
        %1388 = vmatprep.subr.bf16.mxu0 0
        %1389 = vmatpush1.bf16.msra.mxu0 %v1373
        %1390 = vmatprep.subr.bf16.mxu0 0
        %1391 = vmatpush1.bf16.msra.mxu0 0
        %1392 = vmatprep.subr.bf16.mxu0 0
        %1393 = vmatpush1.bf16.msra.mxu0 0
        %1394 = vmatprep.subr.bf16.mxu0 0
        %1395 = vmatpush1.bf16.msra.mxu0 0
        %1396 = vmatprep.subr.bf16.mxu0 0
        %1397 = vmatpush1.bf16.msra.mxu0 0
        %1398 = vmatprep.subr.bf16.mxu0 0
        %1399 = vmatpush1.bf16.msra.mxu0 0
        %1400 = vmatprep.subr.bf16.mxu0 0
        %1401 = vmatpush1.bf16.msra.mxu0 0
        %1402 = vmatprep.subr.bf16.mxu0 0
        %1403 = vmatpush1.bf16.msra.mxu0 0
        %1404 = vmatprep.subr.bf16.mxu0 0
        %1405 = vmatpush1.bf16.msra.mxu0 0
        %1406 = vmatprep.subr.bf16.mxu0 0
        %1407 = vmatpush1.bf16.msra.mxu0 0
        %1408 = vmatprep.subr.bf16.mxu0 0
        %1409 = vmatpush1.bf16.msra.mxu0 0
        %1410 = vmatprep.subr.bf16.mxu0 0
        %1411 = vmatpush1.bf16.msra.mxu0 0
        %1412 = vmatprep.subr.bf16.mxu0 0
        %1413 = vmatpush1.bf16.msra.mxu0 0
        %1414 = vmatprep.mubr.bf16.mxu0 0
        %1415 = vmatmul.mubr.bf16.gmra.mrb[0].mxu0 %v1380
        %v1416 = vpop.f32.mrb[0].mxu0
        %v1417 = vadd.f32 %v1352, %v1416
        %v1418 = vpop.f32.mrb[0].mxu0
        %v1419 = vpop.f32.mrb[0].mxu0
        %v1420 = vpop.f32.mrb[0].mxu0
        %1421 = vdwg.mxu0
        %1423 = vrot.lane.b32.xlu0 %v1417, 32
        %v1424 = vpop.permute.xlu0 %1423
        %v1426 = vadd.f32 %v1258, %v1424
        %v1427 = vld [vmem:[%s12] sm:$0x1]
        %v1428 = vld [vmem:[%s13] sm:$0x1]
        %1430 = vrot.lane.b32.xlu0 %v1426, 96
        %v1431 = vpop.permute.xlu0 %1430
        %v1433 = vsel %vm509, %v1431, 0.0
        %1434 = vadd.xlane.f32.xlu0 %v1433
        %v1435 = vpop.xlane.xlu0 %1434
        %v1436 = vmul.f32 %v1435, %v1226
        %v1437 = vsub.f32 %v1426, %v1436
        %v1438 = vmul.f32 %v1437, %v1437
        %1440 = vrot.lane.b32.xlu0 %v1438, 96
        %v1441 = vpop.permute.xlu0 %1440
        %v1443 = vsel %vm509, %v1441, 0.0
        %1444 = vadd.xlane.f32.xlu0 %v1443
        %v1445 = vpop.xlane.xlu0 %1444
        %v1446 = vmul.f32 %v1445, %v1226
        %v1447 = vadd.f32 %v1446, 1e-05
        %v1448 = vrsqrt.pop %v1447
        %v1449 = vmul.f32 %v1437, %v1448
        %v1451 = vlaneseq
        %v1452 = vshrl.u32 %v1451, 7
        %v1453 = vsub.s32 0, %v1452
        %v1454 = vrot.slane %v1427, %v1453
        %1455 = vrot.lane.b32.xlu0 %v1454, 32
        %v1456 = vpop.permute.xlu0 %1455
        %v1458 = vmul.f32 %v1449, %v1456
        %v1460 = vlaneseq
        %v1461 = vshrl.u32 %v1460, 7
        %v1462 = vsub.s32 0, %v1461
        %v1463 = vrot.slane %v1428, %v1462
        %1464 = vrot.lane.b32.xlu0 %v1463, 32
        %v1465 = vpop.permute.xlu0 %1464
        %v1467 = vadd.f32 %v1458, %v1465
        %1469 = vrot.lane.b32.xlu0 %v1467, 96
        %v1470 = vpop.permute.xlu0 %1469
        %1472 = vst.msk [vmem:[%s483] sm:$0xff] %vm509, %v1470
        %s1473 = sand.u32 %s339, 1
        %s1474 = scalar_lea.sflag [#allocation5], %s1473
        %s1475 = sand.u32 %s339, 1
        %s1476 = smul.addr %s1475, 8
        %s1477 = scalar_lea.vmem [#allocation6], %s1476
        // Predicated region
        $region81: #{tpu_custom_call.1} parent=75 // pred_check
          %p1478 = pneg %p349
        $region82: #{tpu_custom_call.1} parent=75 // pred_check_branch
          %1480 = sbr.rel (%p1478) target = $region84
        $region83: #{tpu_custom_call.1} parent=75 // pred_region
          %s1482 = ssub.s32 128, 128
          %1483 = vsyncadd %s1474, %s1482
          %s1484 = smul.addr %s32, 128
          %s1485 = scalar_lea.hbm %s14, %s1484
          %s1487 = sshll.u32 %s1477, 4
          %s1488 = int_to_ptr.vmem [resolvable:$true] %s1487
          %1490 = dma.vmem_to_hbm [thread:$0]  %s1488, 128, %s1485, %s1474
        $region84: #{tpu_custom_call.1} parent=75 // pred_fallthru
          _
      $region76: #{tpu_custom_call.1} parent=5 // pred_fallthru
        _
      %p1491 = scmp.le.s32.totalorder 2, %s27
      // Predicated region
      $region85: #{tpu_custom_call.1} parent=5 // pred_check
        %p1492 = pneg %p1491
      $region86: #{tpu_custom_call.1} parent=5 // pred_check_branch
        %1494 = sbr.rel (%p1492) target = $region88
      $region87: #{tpu_custom_call.1} parent=5 // pred_region
        %s1495 = ssub.s32 %s27, 2
        // Predicated region
        $region89: #{tpu_custom_call.1} parent=87 // pred_check
          %p1496 = pneg %p355
        $region90: #{tpu_custom_call.1} parent=87 // pred_check_branch
          %1498 = sbr.rel (%p1496) target = $region92
        $region91: #{tpu_custom_call.1} parent=87 // pred_region
          %s1499 = sand.u32 %s340, 1
          %s1500 = scalar_lea.sflag [#allocation5], %s1499
          %s1501 = sand.u32 %s340, 1
          %s1502 = smul.addr %s1501, 8
          %s1503 = scalar_lea.vmem [#allocation6], %s1502
          %1504 = dma.done %s1500, 128
        $region92: #{tpu_custom_call.1} parent=87 // pred_fallthru
          _
      $region88: #{tpu_custom_call.1} parent=5 // pred_fallthru
        _
    $region6: #{tpu_custom_call.1} parent=1 // loop_footer
      %s31 = sadd.s32 1, %s27
    $region7: #{tpu_custom_call.1} parent=1 // loop_footer_branch
      %26 = sbr.rel target = $region3
    $region8: #{tpu_custom_call.1} parent=1 // loop_exit
      _
    %1505 = vsyncpa [#allocation4], 1
    %s1506 = scalar_lea.sflag [#allocation4], 1
    %1507 = vsyncpa %s1506, 1
    %1508 = vsyncpa [#allocation5], 1
    %s1509 = scalar_lea.sflag [#allocation5], 1
    %1510 = vsyncpa %s1509, 1

</llo_original>
